<compile_context>
chip_gen: v6e
topology: v6e:2x2x1
jax: 0.10.0
libtpu: 0.0.40
codegen_flags: <defaults>
</compile_context>

<pallas_src>
import jax
import jax.numpy as jnp
from jax.experimental import pallas as pl
from jax.experimental.pallas import tpu as pltpu


def _round16(c):
    return ((c + 15) // 16) * 16


# -----------------------------------------------------------------------------
# Fused multi-layer ConvLSTM kernel (one batch element per grid step).
# -----------------------------------------------------------------------------
def _make_fused_kernel(H, W, Cin, hidden_dims, m_rows):
    L = len(hidden_dims)
    n_chunks = H // m_rows

    def kernel(*refs):
        x_ref, st_ref = refs[0], refs[1]
        w_refs = [refs[2 + 2 * l] for l in range(L)]          # (3, 3*Cp, 4*hid) bf16
        b_refs = [refs[2 + 2 * l + 1] for l in range(L)]      # (1, 4*hid)       f32
        out_ref = refs[2 + 2 * L]                              # (1, H*W, 2*L*hid)
        p_refs = refs[2 + 2 * L + 1:]                          # per-layer bf16 scratch

        cur = x_ref[0]                         # (H, W, Cin) current layer input
        out_parts = []
        st_off = 0
        for l, hid in enumerate(hidden_dims):
            cin_l = Cin if l == 0 else hidden_dims[l - 1]
            C = cin_l + hid                    # combined in-channels
            Cp = _round16(C)                   # padded to keep bf16 K tiles clean
            K = 3 * Cp                         # dx-packed contraction depth
            G = 4 * hid                        # gate channels (=128 here)

            # -------- prologue: build dx-packed, spatially padded LHS --------
            h_prev = st_ref[0, :, st_off:st_off + hid].reshape(H, W, hid)
            pieces = [cur, h_prev]
            if Cp > C:
                pieces.append(jnp.zeros((H, W, Cp - C), jnp.float32))
            comb = jnp.concatenate(pieces, axis=-1)                   # (H, W, Cp)
            zrow = jnp.zeros((1, W, Cp), jnp.float32)
            comb_r = jnp.concatenate([zrow, comb, zrow], axis=0)      # (H+2, W, Cp)
            zcol = jnp.zeros((H + 2, 1, Cp), jnp.float32)
            p_dx0 = jnp.concatenate([zcol, comb_r[:, :W - 1, :]], axis=1)
            p_dx2 = jnp.concatenate([comb_r[:, 1:, :], zcol], axis=1)
            packed = jnp.concatenate([p_dx0, comb_r, p_dx2], axis=-1)  # (H+2, W, 3*Cp)
            p_refs[l][...] = packed.reshape((H + 2) * W, K).astype(jnp.bfloat16)

            # -------- main loop: 3 dy-matmuls per 128-row chunk + gating -----
            h_chunks, c_chunks = [], []
            for ci in range(n_chunks):
                m0 = ci * m_rows
                M = m_rows * W
                acc = jnp.zeros((M, G), jnp.float32)
                for dy in range(3):
                    lhs = p_refs[l][(m0 + dy) * W:(m0 + dy + m_rows) * W, :]
                    acc = acc + jnp.dot(lhs, w_refs[l][dy],
                                        preferred_element_type=jnp.float32)
                acc = acc + b_refs[l][...]

                # Full 128-lane transcendentals, then lane slices (i, f, o, g).
                sig = jax.nn.sigmoid(acc)
                th = jnp.tanh(acc)
                g_i = sig[:, 0 * hid:1 * hid]
                g_f = sig[:, 1 * hid:2 * hid]
                g_o = sig[:, 2 * hid:3 * hid]
                g_g = th[:, 3 * hid:4 * hid]

                c_prev = st_ref[0, m0 * W:(m0 + m_rows) * W,
                                st_off + hid:st_off + 2 * hid]
                c_next = g_f * c_prev + g_i * g_g
                h_next = g_o * jnp.tanh(c_next)
                h_chunks.append(h_next)
                c_chunks.append(c_next)

            h_full = jnp.concatenate(h_chunks, axis=0)      # (H*W, hid)
            c_full = jnp.concatenate(c_chunks, axis=0)      # (H*W, hid)
            out_parts += [h_full, c_full]
            cur = h_full.reshape(H, W, hid)                 # input for next layer
            st_off += 2 * hid

        # Single lane-dense (H*W, 2*L*hid) store (128 lanes here -> unmasked).
        out_ref[0] = jnp.concatenate(out_parts, axis=-1)

    return kernel


# -----------------------------------------------------------------------------
# Wrapper: full multi-layer single-step forward (mirrors the PyTorch forward).
#   x_nchw       : (B, C, H, W)            (PyTorch layout)
#   hidden_state : list of (h, c), each (B, H, W, HID)   (NHWC)
#   params       : list of (w, b), w: (3, 3, Cin_l+HID_l, 4*HID_l) HWIO, b: (4*HID_l,)
# Returns (h_last_NHWC, new_hidden_state_list)
# -----------------------------------------------------------------------------
def convlstm_forward(x_nchw, hidden_state, params):
    x = jnp.transpose(x_nchw, (0, 2, 3, 1)).astype(jnp.float32)   # NCHW -> NHWC
    B, H, W, Cin = x.shape
    hidden_dims = [int(h.shape[-1]) for h, _ in hidden_state]
    L = len(hidden_dims)
    S = sum(2 * h for h in hidden_dims)

    # Pack states lane-dense: [h0, c0, h1, c1, ...] -> (B, H*W, S)  (S = 128 here)
    st_parts = []
    for h, c in hidden_state:
        st_parts.append(h.reshape(B, H * W, -1))
        st_parts.append(c.reshape(B, H * W, -1))
    st = jnp.concatenate(st_parts, axis=-1).astype(jnp.float32)

    # Weights: pad in-channels to a multiple of 16 and fold (dx, c) into K.
    wks, bs, cps = [], [], []
    for li, (w, b) in enumerate(params):
        assert w.shape[0] == 3 and w.shape[1] == 3, "only 3x3 kernels supported"
        hid = hidden_dims[li]
        cin_l = Cin if li == 0 else hidden_dims[li - 1]
        C = cin_l + hid
        Cp = _round16(C)
        w_p = jnp.pad(w, ((0, 0), (0, 0), (0, Cp - C), (0, 0)))
        wks.append(w_p.reshape(3, 3 * Cp, 4 * hid).astype(jnp.bfloat16))
        bs.append(b.reshape(1, 4 * hid).astype(jnp.float32))
        cps.append(Cp)

    m_rows = 8 if (H % 8 == 0 and H >= 8) else H
    kernel = _make_fused_kernel(H, W, Cin, hidden_dims, m_rows)

    in_specs = [
        pl.BlockSpec((1, H, W, Cin), lambda bb: (bb, 0, 0, 0)),
        pl.BlockSpec((1, H * W, S), lambda bb: (bb, 0, 0)),
    ]
    inputs = [x, st]
    for li in range(L):
        hid = hidden_dims[li]
        in_specs.append(pl.BlockSpec((3, 3 * cps[li], 4 * hid),
                                     lambda bb: (0, 0, 0)))
        in_specs.append(pl.BlockSpec((1, 4 * hid), lambda bb: (0, 0)))
        inputs += [wks[li], bs[li]]

    out = pl.pallas_call(
        kernel,
        out_shape=jax.ShapeDtypeStruct((B, H * W, S), jnp.float32),
        grid_spec=pltpu.PrefetchScalarGridSpec(
            num_scalar_prefetch=0,
            grid=(B,),
            in_specs=in_specs,
            out_specs=pl.BlockSpec((1, H * W, S), lambda bb: (bb, 0, 0)),
            scratch_shapes=[pltpu.VMEM(((H + 2) * W, 3 * cps[li]), jnp.bfloat16)
                            for li in range(L)],
        ),
        compiler_params=pltpu.CompilerParams(
            dimension_semantics=("parallel",)),
    )(*inputs)

    # Unpack the lane-dense output back to the PyTorch-style state list.
    new_state = []
    off = 0
    h_last = None
    for hid in hidden_dims:
        h_l = out[:, :, off:off + hid].reshape(B, H, W, hid)
        c_l = out[:, :, off + hid:off + 2 * hid].reshape(B, H, W, hid)
        new_state.append((h_l, c_l))
        h_last = h_l
        off += 2 * hid
    return h_last, new_state


# -----------------------------------------------------------------------------
# Parameter init (mirrors nn.Conv2d default uniform init).
# -----------------------------------------------------------------------------
def init_convlstm_params(key, input_dim, hidden_dims, kernel_size=(3, 3)):
    params = []
    for li, hid in enumerate(hidden_dims):
        cin = input_dim if li == 0 else hidden_dims[li - 1]
        kh, kw = kernel_size
        key, kw_key, kb_key = jax.random.split(key, 3)
        fan_in = (cin + hid) * kh * kw
        bound = 1.0 / jnp.sqrt(fan_in)
        w = jax.random.uniform(kw_key, (kh, kw, cin + hid, 4 * hid),
                               jnp.float32, -bound, bound)
        b = jax.random.uniform(kb_key, (4 * hid,), jnp.float32, -bound, bound)
        params.append((w, b))
    return params


# -----------------------------------------------------------------------------
# Pure-JAX reference (lax conv, f32) for correctness verification.
# -----------------------------------------------------------------------------
def _cell_ref(x, h, c, w, b):
    comb = jnp.concatenate([x, h], axis=-1)
    conv = jax.lax.conv_general_dilated(
        comb, w, window_strides=(1, 1), padding="SAME",
        dimension_numbers=("NHWC", "HWIO", "NHWC"),
        precision=jax.lax.Precision.HIGHEST) + b
    hid = h.shape[-1]
    cc_i, cc_f, cc_o, cc_g = jnp.split(conv, 4, axis=-1)
    i = jax.nn.sigmoid(cc_i)
    f = jax.nn.sigmoid(cc_f)
    o = jax.nn.sigmoid(cc_o)
    g = jnp.tanh(cc_g)
    c_next = f * c + i * g
    h_next = o * jnp.tanh(c_next)
    return h_next, c_next


def convlstm_forward_ref(x_nchw, hidden_state, params):
    x = jnp.transpose(x_nchw, (0, 2, 3, 1))
    cur = x
    new_state = []
    h = None
    for (w, b), (hh, cc) in zip(params, hidden_state):
        h, c = _cell_ref(cur, hh, cc, w, b)
        new_state.append((h, c))
        cur = h
    return h, new_state


if __name__ == "__main__":
    # Small shapes consistent with the module: B=2, C=4, H=W=16, hidden=32, 2 layers.
    B, C, H, W = 2, 4, 16, 16
    HIDDEN_DIMS = [32, 32]

    key = jax.random.PRNGKey(0)
    key, kx, kh0, kc0, kh1, kc1 = jax.random.split(key, 6)

    x = jax.random.normal(kx, (B, C, H, W), jnp.float32)           # NCHW, like torch
    hidden_state = [
        (jax.random.normal(kh0, (B, H, W, HIDDEN_DIMS[0]), jnp.float32),
         jax.random.normal(kc0, (B, H, W, HIDDEN_DIMS[0]), jnp.float32)),
        (jax.random.normal(kh1, (B, H, W, HIDDEN_DIMS[1]), jnp.float32),
         jax.random.normal(kc1, (B, H, W, HIDDEN_DIMS[1]), jnp.float32)),
    ]
    params = init_convlstm_params(key, C, HIDDEN_DIMS)

    fwd = jax.jit(convlstm_forward)
    h_out, new_state = fwd(x, hidden_state, params)
    h_out = jax.block_until_ready(h_out)
    new_state = jax.tree_util.tree_map(jax.block_until_ready, new_state)

    # Verify against the pure-JAX f32 reference.  The kernel runs the conv
    # matmuls with bf16 operands (f32 accumulation), so the tolerance is
    # loosened accordingly (as sanctioned by the perf review).
    h_ref, state_ref = convlstm_forward_ref(x, hidden_state, params)
    assert jnp.allclose(h_out, h_ref, atol=5e-2, rtol=5e-2)
    for (hp, cp), (hr, cr) in zip(new_state, state_ref):
        assert jnp.allclose(hp, hr, atol=5e-2, rtol=5e-2)
        assert jnp.allclose(cp, cr, atol=5e-2, rtol=5e-2)

    print("KERNEL_OK")
</pallas_src>

<mosaic_0001>
module attributes {stable_mosaic.version = 11 : i64} {
  func.func @kernel(%arg0: i32, %arg1: memref<1x16x16x4xf32, #tpu.memory_space<vmem>>, %arg2: memref<1x256x128xf32, #tpu.memory_space<vmem>>, %arg3: memref<3x144x128xbf16, #tpu.memory_space<vmem>>, %arg4: memref<1x128xf32, #tpu.memory_space<vmem>>, %arg5: memref<3x192x128xbf16, #tpu.memory_space<vmem>>, %arg6: memref<1x128xf32, #tpu.memory_space<vmem>>, %arg7: memref<1x256x128xf32, #tpu.memory_space<vmem>>, %arg8: memref<288x144xbf16, #tpu.memory_space<vmem>>, %arg9: memref<288x192xbf16, #tpu.memory_space<vmem>>) attributes {dimension_semantics = [#tpu.dimension_semantics<parallel>], iteration_bounds = array<i64: 2>, scalar_prefetch = 0 : i64, scratch_operands = 2 : i64, tpu.core_type = #tpu.core_type<tc>, window_params = [{transform_indices = @transform_0, window_bounds = array<i64: 1, 16, 16, 4>}, {transform_indices = @transform_1, window_bounds = array<i64: 1, 256, 128>}, {pipeline_mode = #tpu.pipeline_mode<synchronous>, transform_indices = @transform_2, window_bounds = array<i64: 3, 144, 128>}, {pipeline_mode = #tpu.pipeline_mode<synchronous>, transform_indices = @transform_3, window_bounds = array<i64: 1, 128>}, {pipeline_mode = #tpu.pipeline_mode<synchronous>, transform_indices = @transform_4, window_bounds = array<i64: 3, 192, 128>}, {pipeline_mode = #tpu.pipeline_mode<synchronous>, transform_indices = @transform_5, window_bounds = array<i64: 1, 128>}, {transform_indices = @transform_6, window_bounds = array<i64: 1, 256, 128>}]} {
    %c0 = arith.constant 0 : index
    %c0_0 = arith.constant 0 : index
    %c0_1 = arith.constant 0 : index
    %c0_2 = arith.constant 0 : index
    %0 = vector.load %arg1[%c0, %c0_0, %c0_1, %c0_2] : memref<1x16x16x4xf32, #tpu.memory_space<vmem>>, vector<1x16x16x4xf32>
    %1 = vector.shape_cast %0 : vector<1x16x16x4xf32> to vector<16x16x4xf32>
    %c0_3 = arith.constant 0 : index
    %c0_4 = arith.constant 0 : index
    %c0_5 = arith.constant 0 : index
    %2 = vector.load %arg2[%c0_3, %c0_4, %c0_5] : memref<1x256x128xf32, #tpu.memory_space<vmem>>, vector<1x256x32xf32>
    %3 = vector.shape_cast %2 : vector<1x256x32xf32> to vector<256x32xf32>
    %4 = vector.shape_cast %3 : vector<256x32xf32> to vector<16x16x32xf32>
    %cst = arith.constant 0.000000e+00 : f32
    %5 = vector.broadcast %cst : f32 to vector<16x16x12xf32>
    %6 = tpu.concatenate %1, %4, %5 in 2 : vector<16x16x4xf32>, vector<16x16x32xf32>, vector<16x16x12xf32> -> vector<16x16x48xf32>
    %cst_6 = arith.constant 0.000000e+00 : f32
    %7 = vector.broadcast %cst_6 : f32 to vector<1x16x48xf32>
    %8 = tpu.concatenate %7, %6, %7 in 0 : vector<1x16x48xf32>, vector<16x16x48xf32>, vector<1x16x48xf32> -> vector<18x16x48xf32>
    %cst_7 = arith.constant 0.000000e+00 : f32
    %9 = vector.broadcast %cst_7 : f32 to vector<18x1x48xf32>
    %10 = vector.extract_strided_slice %8 {offsets = [0, 0, 0], sizes = [18, 15, 48], strides = [1, 1, 1]} : vector<18x16x48xf32> to vector<18x15x48xf32>
    %11 = tpu.concatenate %9, %10 in 1 : vector<18x1x48xf32>, vector<18x15x48xf32> -> vector<18x16x48xf32>
    %12 = vector.extract_strided_slice %8 {offsets = [0, 1, 0], sizes = [18, 15, 48], strides = [1, 1, 1]} : vector<18x16x48xf32> to vector<18x15x48xf32>
    %13 = tpu.concatenate %12, %9 in 1 : vector<18x15x48xf32>, vector<18x1x48xf32> -> vector<18x16x48xf32>
    %14 = tpu.concatenate %11, %8, %13 in 2 : vector<18x16x48xf32>, vector<18x16x48xf32>, vector<18x16x48xf32> -> vector<18x16x144xf32>
    %15 = vector.shape_cast %14 : vector<18x16x144xf32> to vector<288x144xf32>
    %16 = arith.truncf %15 : vector<288x144xf32> to vector<288x144xbf16>
    %c0_8 = arith.constant 0 : index
    %c0_9 = arith.constant 0 : index
    %17 = vector.load %arg8[%c0_8, %c0_9] : memref<288x144xbf16, #tpu.memory_space<vmem>>, vector<288x144xbf16>
    tpu.vector_store %arg8[%c0_8, %c0_9], %16 {strides = array<i32>} : memref<288x144xbf16, #tpu.memory_space<vmem>>, vector<288x144xbf16>,
    %cst_10 = arith.constant 0.000000e+00 : f32
    %18 = vector.broadcast %cst_10 : f32 to vector<128x128xf32>
    %c0_11 = arith.constant 0 : index
    %c0_12 = arith.constant 0 : index
    %19 = vector.load %arg8[%c0_11, %c0_12] : memref<288x144xbf16, #tpu.memory_space<vmem>>, vector<128x144xbf16>
    %c0_13 = arith.constant 0 : index
    %c0_14 = arith.constant 0 : index
    %c0_15 = arith.constant 0 : index
    %20 = vector.load %arg3[%c0_13, %c0_14, %c0_15] : memref<3x144x128xbf16, #tpu.memory_space<vmem>>, vector<1x144x128xbf16>
    %21 = vector.shape_cast %20 : vector<1x144x128xbf16> to vector<144x128xbf16>
    %cst_16 = arith.constant dense<0.000000e+00> : vector<128x128xf32>
    %22 = tpu.matmul %19, %21, %cst_16 {dimension_numbers = #tpu.dot_dimension_numbers<[1], [0], [0], [1], [0, 0, 1, 1], [], []>} : vector<128x144xbf16>, vector<144x128xbf16>, vector<128x128xf32> -> vector<128x128xf32>
    %23 = arith.addf %18, %22 : vector<128x128xf32>
    %c16 = arith.constant 16 : index
    %c0_17 = arith.constant 0 : index
    %24 = vector.load %arg8[%c16, %c0_17] : memref<288x144xbf16, #tpu.memory_space<vmem>>, vector<128x144xbf16>
    %c1 = arith.constant 1 : index
    %c0_18 = arith.constant 0 : index
    %c0_19 = arith.constant 0 : index
    %25 = vector.load %arg3[%c1, %c0_18, %c0_19] : memref<3x144x128xbf16, #tpu.memory_space<vmem>>, vector<1x144x128xbf16>
    %26 = vector.shape_cast %25 : vector<1x144x128xbf16> to vector<144x128xbf16>
    %cst_20 = arith.constant dense<0.000000e+00> : vector<128x128xf32>
    %27 = tpu.matmul %24, %26, %cst_20 {dimension_numbers = #tpu.dot_dimension_numbers<[1], [0], [0], [1], [0, 0, 1, 1], [], []>} : vector<128x144xbf16>, vector<144x128xbf16>, vector<128x128xf32> -> vector<128x128xf32>
    %28 = arith.addf %23, %27 : vector<128x128xf32>
    %c32 = arith.constant 32 : index
    %c0_21 = arith.constant 0 : index
    %29 = vector.load %arg8[%c32, %c0_21] : memref<288x144xbf16, #tpu.memory_space<vmem>>, vector<128x144xbf16>
    %c2 = arith.constant 2 : index
    %c0_22 = arith.constant 0 : index
    %c0_23 = arith.constant 0 : index
    %30 = vector.load %arg3[%c2, %c0_22, %c0_23] : memref<3x144x128xbf16, #tpu.memory_space<vmem>>, vector<1x144x128xbf16>
    %31 = vector.shape_cast %30 : vector<1x144x128xbf16> to vector<144x128xbf16>
    %cst_24 = arith.constant dense<0.000000e+00> : vector<128x128xf32>
    %32 = tpu.matmul %29, %31, %cst_24 {dimension_numbers = #tpu.dot_dimension_numbers<[1], [0], [0], [1], [0, 0, 1, 1], [], []>} : vector<128x144xbf16>, vector<144x128xbf16>, vector<128x128xf32> -> vector<128x128xf32>
    %33 = arith.addf %28, %32 : vector<128x128xf32>
    %c0_25 = arith.constant 0 : index
    %c0_26 = arith.constant 0 : index
    %34 = vector.load %arg4[%c0_25, %c0_26] : memref<1x128xf32, #tpu.memory_space<vmem>>, vector<1x128xf32>
    %35 = vector.broadcast %34 : vector<1x128xf32> to vector<128x128xf32>
    %36 = arith.addf %33, %35 : vector<128x128xf32>
    %37 = arith.negf %36 : vector<128x128xf32>
    %38 = math.exp %37 : vector<128x128xf32>
    %cst_27 = arith.constant 1.000000e+00 : f32
    %39 = vector.broadcast %cst_27 : f32 to vector<128x128xf32>
    %40 = arith.addf %39, %38 : vector<128x128xf32>
    %41 = arith.divf %39, %40 : vector<128x128xf32>
    %42 = math.tanh %36 : vector<128x128xf32>
    %43 = vector.extract_strided_slice %41 {offsets = [0, 0], sizes = [128, 32], strides = [1, 1]} : vector<128x128xf32> to vector<128x32xf32>
    %44 = vector.extract_strided_slice %41 {offsets = [0, 32], sizes = [128, 32], strides = [1, 1]} : vector<128x128xf32> to vector<128x32xf32>
    %45 = vector.extract_strided_slice %41 {offsets = [0, 64], sizes = [128, 32], strides = [1, 1]} : vector<128x128xf32> to vector<128x32xf32>
    %46 = vector.extract_strided_slice %42 {offsets = [0, 96], sizes = [128, 32], strides = [1, 1]} : vector<128x128xf32> to vector<128x32xf32>
    %c0_28 = arith.constant 0 : index
    %c0_29 = arith.constant 0 : index
    %c32_30 = arith.constant 32 : index
    %47 = vector.load %arg2[%c0_28, %c0_29, %c32_30] : memref<1x256x128xf32, #tpu.memory_space<vmem>>, vector<1x128x32xf32>
    %48 = vector.shape_cast %47 : vector<1x128x32xf32> to vector<128x32xf32>
    %49 = arith.mulf %44, %48 : vector<128x32xf32>
    %50 = arith.mulf %43, %46 : vector<128x32xf32>
    %51 = arith.addf %49, %50 : vector<128x32xf32>
    %52 = math.tanh %51 : vector<128x32xf32>
    %53 = arith.mulf %45, %52 : vector<128x32xf32>
    %cst_31 = arith.constant 0.000000e+00 : f32
    %54 = vector.broadcast %cst_31 : f32 to vector<128x128xf32>
    %c128 = arith.constant 128 : index
    %c0_32 = arith.constant 0 : index
    %55 = vector.load %arg8[%c128, %c0_32] : memref<288x144xbf16, #tpu.memory_space<vmem>>, vector<128x144xbf16>
    %c0_33 = arith.constant 0 : index
    %c0_34 = arith.constant 0 : index
    %c0_35 = arith.constant 0 : index
    %56 = vector.load %arg3[%c0_33, %c0_34, %c0_35] : memref<3x144x128xbf16, #tpu.memory_space<vmem>>, vector<1x144x128xbf16>
    %57 = vector.shape_cast %56 : vector<1x144x128xbf16> to vector<144x128xbf16>
    %cst_36 = arith.constant dense<0.000000e+00> : vector<128x128xf32>
    %58 = tpu.matmul %55, %57, %cst_36 {dimension_numbers = #tpu.dot_dimension_numbers<[1], [0], [0], [1], [0, 0, 1, 1], [], []>} : vector<128x144xbf16>, vector<144x128xbf16>, vector<128x128xf32> -> vector<128x128xf32>
    %59 = arith.addf %54, %58 : vector<128x128xf32>
    %c144 = arith.constant 144 : index
    %c0_37 = arith.constant 0 : index
    %60 = vector.load %arg8[%c144, %c0_37] : memref<288x144xbf16, #tpu.memory_space<vmem>>, vector<128x144xbf16>
    %c1_38 = arith.constant 1 : index
    %c0_39 = arith.constant 0 : index
    %c0_40 = arith.constant 0 : index
    %61 = vector.load %arg3[%c1_38, %c0_39, %c0_40] : memref<3x144x128xbf16, #tpu.memory_space<vmem>>, vector<1x144x128xbf16>
    %62 = vector.shape_cast %61 : vector<1x144x128xbf16> to vector<144x128xbf16>
    %cst_41 = arith.constant dense<0.000000e+00> : vector<128x128xf32>
    %63 = tpu.matmul %60, %62, %cst_41 {dimension_numbers = #tpu.dot_dimension_numbers<[1], [0], [0], [1], [0, 0, 1, 1], [], []>} : vector<128x144xbf16>, vector<144x128xbf16>, vector<128x128xf32> -> vector<128x128xf32>
    %64 = arith.addf %59, %63 : vector<128x128xf32>
    %c160 = arith.constant 160 : index
    %c0_42 = arith.constant 0 : index
    %65 = vector.load %arg8[%c160, %c0_42] : memref<288x144xbf16, #tpu.memory_space<vmem>>, vector<128x144xbf16>
    %c2_43 = arith.constant 2 : index
    %c0_44 = arith.constant 0 : index
    %c0_45 = arith.constant 0 : index
    %66 = vector.load %arg3[%c2_43, %c0_44, %c0_45] : memref<3x144x128xbf16, #tpu.memory_space<vmem>>, vector<1x144x128xbf16>
    %67 = vector.shape_cast %66 : vector<1x144x128xbf16> to vector<144x128xbf16>
    %cst_46 = arith.constant dense<0.000000e+00> : vector<128x128xf32>
    %68 = tpu.matmul %65, %67, %cst_46 {dimension_numbers = #tpu.dot_dimension_numbers<[1], [0], [0], [1], [0, 0, 1, 1], [], []>} : vector<128x144xbf16>, vector<144x128xbf16>, vector<128x128xf32> -> vector<128x128xf32>
    %69 = arith.addf %64, %68 : vector<128x128xf32>
    %c0_47 = arith.constant 0 : index
    %c0_48 = arith.constant 0 : index
    %70 = vector.load %arg4[%c0_47, %c0_48] : memref<1x128xf32, #tpu.memory_space<vmem>>, vector<1x128xf32>
    %71 = vector.broadcast %70 : vector<1x128xf32> to vector<128x128xf32>
    %72 = arith.addf %69, %71 : vector<128x128xf32>
    %73 = arith.negf %72 : vector<128x128xf32>
    %74 = math.exp %73 : vector<128x128xf32>
    %cst_49 = arith.constant 1.000000e+00 : f32
    %75 = vector.broadcast %cst_49 : f32 to vector<128x128xf32>
    %76 = arith.addf %75, %74 : vector<128x128xf32>
    %77 = arith.divf %75, %76 : vector<128x128xf32>
    %78 = math.tanh %72 : vector<128x128xf32>
    %79 = vector.extract_strided_slice %77 {offsets = [0, 0], sizes = [128, 32], strides = [1, 1]} : vector<128x128xf32> to vector<128x32xf32>
    %80 = vector.extract_strided_slice %77 {offsets = [0, 32], sizes = [128, 32], strides = [1, 1]} : vector<128x128xf32> to vector<128x32xf32>
    %81 = vector.extract_strided_slice %77 {offsets = [0, 64], sizes = [128, 32], strides = [1, 1]} : vector<128x128xf32> to vector<128x32xf32>
    %82 = vector.extract_strided_slice %78 {offsets = [0, 96], sizes = [128, 32], strides = [1, 1]} : vector<128x128xf32> to vector<128x32xf32>
    %c0_50 = arith.constant 0 : index
    %c128_51 = arith.constant 128 : index
    %c32_52 = arith.constant 32 : index
    %83 = vector.load %arg2[%c0_50, %c128_51, %c32_52] : memref<1x256x128xf32, #tpu.memory_space<vmem>>, vector<1x128x32xf32>
    %84 = vector.shape_cast %83 : vector<1x128x32xf32> to vector<128x32xf32>
    %85 = arith.mulf %80, %84 : vector<128x32xf32>
    %86 = arith.mulf %79, %82 : vector<128x32xf32>
    %87 = arith.addf %85, %86 : vector<128x32xf32>
    %88 = math.tanh %87 : vector<128x32xf32>
    %89 = arith.mulf %81, %88 : vector<128x32xf32>
    %90 = tpu.concatenate %53, %89 in 0 : vector<128x32xf32>, vector<128x32xf32> -> vector<256x32xf32>
    %91 = tpu.concatenate %51, %87 in 0 : vector<128x32xf32>, vector<128x32xf32> -> vector<256x32xf32>
    %92 = vector.shape_cast %90 : vector<256x32xf32> to vector<16x16x32xf32>
    %c0_53 = arith.constant 0 : index
    %c0_54 = arith.constant 0 : index
    %c64 = arith.constant 64 : index
    %93 = vector.load %arg2[%c0_53, %c0_54, %c64] : memref<1x256x128xf32, #tpu.memory_space<vmem>>, vector<1x256x32xf32>
    %94 = vector.shape_cast %93 : vector<1x256x32xf32> to vector<256x32xf32>
    %95 = vector.shape_cast %94 : vector<256x32xf32> to vector<16x16x32xf32>
    %96 = tpu.concatenate %92, %95 in 2 : vector<16x16x32xf32>, vector<16x16x32xf32> -> vector<16x16x64xf32>
    %cst_55 = arith.constant 0.000000e+00 : f32
    %97 = vector.broadcast %cst_55 : f32 to vector<1x16x64xf32>
    %98 = tpu.concatenate %97, %96, %97 in 0 : vector<1x16x64xf32>, vector<16x16x64xf32>, vector<1x16x64xf32> -> vector<18x16x64xf32>
    %cst_56 = arith.constant 0.000000e+00 : f32
    %99 = vector.broadcast %cst_56 : f32 to vector<18x1x64xf32>
    %100 = vector.extract_strided_slice %98 {offsets = [0, 0, 0], sizes = [18, 15, 64], strides = [1, 1, 1]} : vector<18x16x64xf32> to vector<18x15x64xf32>
    %101 = tpu.concatenate %99, %100 in 1 : vector<18x1x64xf32>, vector<18x15x64xf32> -> vector<18x16x64xf32>
    %102 = vector.extract_strided_slice %98 {offsets = [0, 1, 0], sizes = [18, 15, 64], strides = [1, 1, 1]} : vector<18x16x64xf32> to vector<18x15x64xf32>
    %103 = tpu.concatenate %102, %99 in 1 : vector<18x15x64xf32>, vector<18x1x64xf32> -> vector<18x16x64xf32>
    %104 = tpu.concatenate %101, %98, %103 in 2 : vector<18x16x64xf32>, vector<18x16x64xf32>, vector<18x16x64xf32> -> vector<18x16x192xf32>
    %105 = vector.shape_cast %104 : vector<18x16x192xf32> to vector<288x192xf32>
    %106 = arith.truncf %105 : vector<288x192xf32> to vector<288x192xbf16>
    %c0_57 = arith.constant 0 : index
    %c0_58 = arith.constant 0 : index
    %107 = vector.load %arg9[%c0_57, %c0_58] : memref<288x192xbf16, #tpu.memory_space<vmem>>, vector<288x192xbf16>
    tpu.vector_store %arg9[%c0_57, %c0_58], %106 {strides = array<i32>} : memref<288x192xbf16, #tpu.memory_space<vmem>>, vector<288x192xbf16>,
    %cst_59 = arith.constant 0.000000e+00 : f32
    %108 = vector.broadcast %cst_59 : f32 to vector<128x128xf32>
    %c0_60 = arith.constant 0 : index
    %c0_61 = arith.constant 0 : index
    %109 = vector.load %arg9[%c0_60, %c0_61] : memref<288x192xbf16, #tpu.memory_space<vmem>>, vector<128x192xbf16>
    %c0_62 = arith.constant 0 : index
    %c0_63 = arith.constant 0 : index
    %c0_64 = arith.constant 0 : index
    %110 = vector.load %arg5[%c0_62, %c0_63, %c0_64] : memref<3x192x128xbf16, #tpu.memory_space<vmem>>, vector<1x192x128xbf16>
    %111 = vector.shape_cast %110 : vector<1x192x128xbf16> to vector<192x128xbf16>
    %cst_65 = arith.constant dense<0.000000e+00> : vector<128x128xf32>
    %112 = tpu.matmul %109, %111, %cst_65 {dimension_numbers = #tpu.dot_dimension_numbers<[1], [0], [0], [1], [0, 0, 1, 1], [], []>} : vector<128x192xbf16>, vector<192x128xbf16>, vector<128x128xf32> -> vector<128x128xf32>
    %113 = arith.addf %108, %112 : vector<128x128xf32>
    %c16_66 = arith.constant 16 : index
    %c0_67 = arith.constant 0 : index
    %114 = vector.load %arg9[%c16_66, %c0_67] : memref<288x192xbf16, #tpu.memory_space<vmem>>, vector<128x192xbf16>
    %c1_68 = arith.constant 1 : index
    %c0_69 = arith.constant 0 : index
    %c0_70 = arith.constant 0 : index
    %115 = vector.load %arg5[%c1_68, %c0_69, %c0_70] : memref<3x192x128xbf16, #tpu.memory_space<vmem>>, vector<1x192x128xbf16>
    %116 = vector.shape_cast %115 : vector<1x192x128xbf16> to vector<192x128xbf16>
    %cst_71 = arith.constant dense<0.000000e+00> : vector<128x128xf32>
    %117 = tpu.matmul %114, %116, %cst_71 {dimension_numbers = #tpu.dot_dimension_numbers<[1], [0], [0], [1], [0, 0, 1, 1], [], []>} : vector<128x192xbf16>, vector<192x128xbf16>, vector<128x128xf32> -> vector<128x128xf32>
    %118 = arith.addf %113, %117 : vector<128x128xf32>
    %c32_72 = arith.constant 32 : index
    %c0_73 = arith.constant 0 : index
    %119 = vector.load %arg9[%c32_72, %c0_73] : memref<288x192xbf16, #tpu.memory_space<vmem>>, vector<128x192xbf16>
    %c2_74 = arith.constant 2 : index
    %c0_75 = arith.constant 0 : index
    %c0_76 = arith.constant 0 : index
    %120 = vector.load %arg5[%c2_74, %c0_75, %c0_76] : memref<3x192x128xbf16, #tpu.memory_space<vmem>>, vector<1x192x128xbf16>
    %121 = vector.shape_cast %120 : vector<1x192x128xbf16> to vector<192x128xbf16>
    %cst_77 = arith.constant dense<0.000000e+00> : vector<128x128xf32>
    %122 = tpu.matmul %119, %121, %cst_77 {dimension_numbers = #tpu.dot_dimension_numbers<[1], [0], [0], [1], [0, 0, 1, 1], [], []>} : vector<128x192xbf16>, vector<192x128xbf16>, vector<128x128xf32> -> vector<128x128xf32>
    %123 = arith.addf %118, %122 : vector<128x128xf32>
    %c0_78 = arith.constant 0 : index
    %c0_79 = arith.constant 0 : index
    %124 = vector.load %arg6[%c0_78, %c0_79] : memref<1x128xf32, #tpu.memory_space<vmem>>, vector<1x128xf32>
    %125 = vector.broadcast %124 : vector<1x128xf32> to vector<128x128xf32>
    %126 = arith.addf %123, %125 : vector<128x128xf32>
    %127 = arith.negf %126 : vector<128x128xf32>
    %128 = math.exp %127 : vector<128x128xf32>
    %cst_80 = arith.constant 1.000000e+00 : f32
    %129 = vector.broadcast %cst_80 : f32 to vector<128x128xf32>
    %130 = arith.addf %129, %128 : vector<128x128xf32>
    %131 = arith.divf %129, %130 : vector<128x128xf32>
    %132 = math.tanh %126 : vector<128x128xf32>
    %133 = vector.extract_strided_slice %131 {offsets = [0, 0], sizes = [128, 32], strides = [1, 1]} : vector<128x128xf32> to vector<128x32xf32>
    %134 = vector.extract_strided_slice %131 {offsets = [0, 32], sizes = [128, 32], strides = [1, 1]} : vector<128x128xf32> to vector<128x32xf32>
    %135 = vector.extract_strided_slice %131 {offsets = [0, 64], sizes = [128, 32], strides = [1, 1]} : vector<128x128xf32> to vector<128x32xf32>
    %136 = vector.extract_strided_slice %132 {offsets = [0, 96], sizes = [128, 32], strides = [1, 1]} : vector<128x128xf32> to vector<128x32xf32>
    %c0_81 = arith.constant 0 : index
    %c0_82 = arith.constant 0 : index
    %c96 = arith.constant 96 : index
    %137 = vector.load %arg2[%c0_81, %c0_82, %c96] : memref<1x256x128xf32, #tpu.memory_space<vmem>>, vector<1x128x32xf32>
    %138 = vector.shape_cast %137 : vector<1x128x32xf32> to vector<128x32xf32>
    %139 = arith.mulf %134, %138 : vector<128x32xf32>
    %140 = arith.mulf %133, %136 : vector<128x32xf32>
    %141 = arith.addf %139, %140 : vector<128x32xf32>
    %142 = math.tanh %141 : vector<128x32xf32>
    %143 = arith.mulf %135, %142 : vector<128x32xf32>
    %cst_83 = arith.constant 0.000000e+00 : f32
    %144 = vector.broadcast %cst_83 : f32 to vector<128x128xf32>
    %c128_84 = arith.constant 128 : index
    %c0_85 = arith.constant 0 : index
    %145 = vector.load %arg9[%c128_84, %c0_85] : memref<288x192xbf16, #tpu.memory_space<vmem>>, vector<128x192xbf16>
    %c0_86 = arith.constant 0 : index
    %c0_87 = arith.constant 0 : index
    %c0_88 = arith.constant 0 : index
    %146 = vector.load %arg5[%c0_86, %c0_87, %c0_88] : memref<3x192x128xbf16, #tpu.memory_space<vmem>>, vector<1x192x128xbf16>
    %147 = vector.shape_cast %146 : vector<1x192x128xbf16> to vector<192x128xbf16>
    %cst_89 = arith.constant dense<0.000000e+00> : vector<128x128xf32>
    %148 = tpu.matmul %145, %147, %cst_89 {dimension_numbers = #tpu.dot_dimension_numbers<[1], [0], [0], [1], [0, 0, 1, 1], [], []>} : vector<128x192xbf16>, vector<192x128xbf16>, vector<128x128xf32> -> vector<128x128xf32>
    %149 = arith.addf %144, %148 : vector<128x128xf32>
    %c144_90 = arith.constant 144 : index
    %c0_91 = arith.constant 0 : index
    %150 = vector.load %arg9[%c144_90, %c0_91] : memref<288x192xbf16, #tpu.memory_space<vmem>>, vector<128x192xbf16>
    %c1_92 = arith.constant 1 : index
    %c0_93 = arith.constant 0 : index
    %c0_94 = arith.constant 0 : index
    %151 = vector.load %arg5[%c1_92, %c0_93, %c0_94] : memref<3x192x128xbf16, #tpu.memory_space<vmem>>, vector<1x192x128xbf16>
    %152 = vector.shape_cast %151 : vector<1x192x128xbf16> to vector<192x128xbf16>
    %cst_95 = arith.constant dense<0.000000e+00> : vector<128x128xf32>
    %153 = tpu.matmul %150, %152, %cst_95 {dimension_numbers = #tpu.dot_dimension_numbers<[1], [0], [0], [1], [0, 0, 1, 1], [], []>} : vector<128x192xbf16>, vector<192x128xbf16>, vector<128x128xf32> -> vector<128x128xf32>
    %154 = arith.addf %149, %153 : vector<128x128xf32>
    %c160_96 = arith.constant 160 : index
    %c0_97 = arith.constant 0 : index
    %155 = vector.load %arg9[%c160_96, %c0_97] : memref<288x192xbf16, #tpu.memory_space<vmem>>, vector<128x192xbf16>
    %c2_98 = arith.constant 2 : index
    %c0_99 = arith.constant 0 : index
    %c0_100 = arith.constant 0 : index
    %156 = vector.load %arg5[%c2_98, %c0_99, %c0_100] : memref<3x192x128xbf16, #tpu.memory_space<vmem>>, vector<1x192x128xbf16>
    %157 = vector.shape_cast %156 : vector<1x192x128xbf16> to vector<192x128xbf16>
    %cst_101 = arith.constant dense<0.000000e+00> : vector<128x128xf32>
    %158 = tpu.matmul %155, %157, %cst_101 {dimension_numbers = #tpu.dot_dimension_numbers<[1], [0], [0], [1], [0, 0, 1, 1], [], []>} : vector<128x192xbf16>, vector<192x128xbf16>, vector<128x128xf32> -> vector<128x128xf32>
    %159 = arith.addf %154, %158 : vector<128x128xf32>
    %c0_102 = arith.constant 0 : index
    %c0_103 = arith.constant 0 : index
    %160 = vector.load %arg6[%c0_102, %c0_103] : memref<1x128xf32, #tpu.memory_space<vmem>>, vector<1x128xf32>
    %161 = vector.broadcast %160 : vector<1x128xf32> to vector<128x128xf32>
    %162 = arith.addf %159, %161 : vector<128x128xf32>
    %163 = arith.negf %162 : vector<128x128xf32>
    %164 = math.exp %163 : vector<128x128xf32>
    %cst_104 = arith.constant 1.000000e+00 : f32
    %165 = vector.broadcast %cst_104 : f32 to vector<128x128xf32>
    %166 = arith.addf %165, %164 : vector<128x128xf32>
    %167 = arith.divf %165, %166 : vector<128x128xf32>
    %168 = math.tanh %162 : vector<128x128xf32>
    %169 = vector.extract_strided_slice %167 {offsets = [0, 0], sizes = [128, 32], strides = [1, 1]} : vector<128x128xf32> to vector<128x32xf32>
    %170 = vector.extract_strided_slice %167 {offsets = [0, 32], sizes = [128, 32], strides = [1, 1]} : vector<128x128xf32> to vector<128x32xf32>
    %171 = vector.extract_strided_slice %167 {offsets = [0, 64], sizes = [128, 32], strides = [1, 1]} : vector<128x128xf32> to vector<128x32xf32>
    %172 = vector.extract_strided_slice %168 {offsets = [0, 96], sizes = [128, 32], strides = [1, 1]} : vector<128x128xf32> to vector<128x32xf32>
    %c0_105 = arith.constant 0 : index
    %c128_106 = arith.constant 128 : index
    %c96_107 = arith.constant 96 : index
    %173 = vector.load %arg2[%c0_105, %c128_106, %c96_107] : memref<1x256x128xf32, #tpu.memory_space<vmem>>, vector<1x128x32xf32>
    %174 = vector.shape_cast %173 : vector<1x128x32xf32> to vector<128x32xf32>
    %175 = arith.mulf %170, %174 : vector<128x32xf32>
    %176 = arith.mulf %169, %172 : vector<128x32xf32>
    %177 = arith.addf %175, %176 : vector<128x32xf32>
    %178 = math.tanh %177 : vector<128x32xf32>
    %179 = arith.mulf %171, %178 : vector<128x32xf32>
    %180 = tpu.concatenate %143, %179 in 0 : vector<128x32xf32>, vector<128x32xf32> -> vector<256x32xf32>
    %181 = tpu.concatenate %141, %177 in 0 : vector<128x32xf32>, vector<128x32xf32> -> vector<256x32xf32>
    %182 = tpu.concatenate %90, %91, %180, %181 in 1 : vector<256x32xf32>, vector<256x32xf32>, vector<256x32xf32>, vector<256x32xf32> -> vector<256x128xf32>
    %c0_108 = arith.constant 0 : index
    %c0_109 = arith.constant 0 : index
    %c0_110 = arith.constant 0 : index
    %183 = vector.load %arg7[%c0_108, %c0_109, %c0_110] : memref<1x256x128xf32, #tpu.memory_space<vmem>>, vector<1x256x128xf32>
    %184 = vector.shape_cast %183 : vector<1x256x128xf32> to vector<256x128xf32>
    %185 = vector.shape_cast %182 : vector<256x128xf32> to vector<1x256x128xf32>
    tpu.vector_store %arg7[%c0_108, %c0_109, %c0_110], %185 {strides = array<i32>} : memref<1x256x128xf32, #tpu.memory_space<vmem>>, vector<1x256x128xf32>,
    return
  }
  func.func @transform_0(%arg0: i32) -> (i32, i32, i32, i32) {
    %c0_i32 = arith.constant 0 : i32
    %c0_i32_0 = arith.constant 0 : i32
    %c0_i32_1 = arith.constant 0 : i32
    %c0_i32_2 = arith.constant 0 : i32
    return %arg0, %c0_i32, %c0_i32_0, %c0_i32_1 : i32, i32, i32, i32
  }
  func.func @transform_1(%arg0: i32) -> (i32, i32, i32) {
    %c0_i32 = arith.constant 0 : i32
    %c0_i32_0 = arith.constant 0 : i32
    %c0_i32_1 = arith.constant 0 : i32
    return %arg0, %c0_i32, %c0_i32_0 : i32, i32, i32
  }
  func.func @transform_2(%arg0: i32) -> (i32, i32, i32) {
    %c0_i32 = arith.constant 0 : i32
    %c0_i32_0 = arith.constant 0 : i32
    %c0_i32_1 = arith.constant 0 : i32
    %c0_i32_2 = arith.constant 0 : i32
    return %c0_i32, %c0_i32_0, %c0_i32_1 : i32, i32, i32
  }
  func.func @transform_3(%arg0: i32) -> (i32, i32) {
    %c0_i32 = arith.constant 0 : i32
    %c0_i32_0 = arith.constant 0 : i32
    %c0_i32_1 = arith.constant 0 : i32
    return %c0_i32, %c0_i32_0 : i32, i32
  }
  func.func @transform_4(%arg0: i32) -> (i32, i32, i32) {
    %c0_i32 = arith.constant 0 : i32
    %c0_i32_0 = arith.constant 0 : i32
    %c0_i32_1 = arith.constant 0 : i32
    %c0_i32_2 = arith.constant 0 : i32
    return %c0_i32, %c0_i32_0, %c0_i32_1 : i32, i32, i32
  }
  func.func @transform_5(%arg0: i32) -> (i32, i32) {
    %c0_i32 = arith.constant 0 : i32
    %c0_i32_0 = arith.constant 0 : i32
    %c0_i32_1 = arith.constant 0 : i32
    return %c0_i32, %c0_i32_0 : i32, i32
  }
  func.func @transform_6(%arg0: i32) -> (i32, i32, i32) {
    %c0_i32 = arith.constant 0 : i32
    %c0_i32_0 = arith.constant 0 : i32
    %c0_i32_1 = arith.constant 0 : i32
    return %arg0, %c0_i32, %c0_i32_0 : i32, i32, i32
  }
}

</mosaic_0001>

<llo_original>
// kernel: convlstm_forward.1
$region0: #{convlstm_forward.1}
  #allocation0 [shape = 'u32[]', space=smem, size = 0x4, offset = 0x4, fixed_abs, tag = 'smem constant byte address 0x4 - core index']
  #allocation1 [shape = 'u32[144,128]{1,0:T(1,128)}', space=vmem, size = 0x12000, scoped, tag = 'internal scratch']
  #allocation2 [shape = 'bf16[288,144]{1,0:T(8,128)(2,1)}', space=vmem, size = 0x24000, scoped, tag = 'scratch operand']
  #allocation3 [shape = 'bf16[288,192]{1,0:T(8,128)(2,1)}', space=vmem, size = 0x24000, scoped, tag = 'scratch operand']
  %s0 = inlined_call_operand.vmem [shape: f32[2,16,16,4], index: 0, kind: input, shape index: {}]
  %s1 = inlined_call_operand.vmem [shape: f32[2,256,128], index: 1, kind: input, shape index: {}]
  %s2 = inlined_call_operand.vmem [shape: bf16[3,144,128], index: 2, kind: input, shape index: {}]
  %s3 = inlined_call_operand.vmem [shape: f32[1,128], index: 3, kind: input, shape index: {}]
  %s4 = inlined_call_operand.vmem [shape: bf16[3,192,128], index: 4, kind: input, shape index: {}]
  %s5 = inlined_call_operand.vmem [shape: f32[1,128], index: 5, kind: input, shape index: {}]
  %s6 = inlined_call_operand.vmem [shape: f32[2,256,128], index: 6, kind: output, shape index: {}]
  %s7 = sld [smem:[#allocation0]]
  $region57: #{convlstm_forward.1} parent=0
    _
  %s9 = ssub.s32 1, %s7
  %s10 = scalar_select 0, %s9, %s7
  loop: start=0, step=1, limit=4
  $region2: #{convlstm_forward.1} parent=0 // loop_pre_header
    _
  $region3: #{convlstm_forward.1} parent=0 // loop_header
    %s12 = sphi 0, %s16
    %p13 = scmp.ge.s32.totalorder %s12, 4
    %s22 = sphi 0, %s24
    %s25 = sphi 0, %s22
    %s26 = sphi 0, %s25
    %s42 = sphi 0, %s26
    %s48 = sphi 0, %s50
    %s51 = sphi 0, %s48
    %s52 = sphi 0, %s51
    %s68 = sphi 0, %s52
    %s72 = sphi 0, %s72
    %s74 = sphi 0, %s72
    %s75 = sphi 0, %s74
    %s89 = sphi 0, %s75
    %s93 = sphi 0, %s93
    %s95 = sphi 0, %s93
    %s96 = sphi 0, %s95
    %s110 = sphi 0, %s96
    %s114 = sphi 0, %s114
    %s116 = sphi 0, %s114
    %s117 = sphi 0, %s116
    %s131 = sphi 0, %s117
    %s135 = sphi 0, %s135
    %s137 = sphi 0, %s135
    %s138 = sphi 0, %s137
    %s152 = sphi 0, %s138
    %s158 = sphi 0, %s160
    %s161 = sphi 0, %s158
    %s162 = sphi 0, %s161
    %s178 = sphi 0, %s162
  $region4: #{convlstm_forward.1} parent=0 // loop_header_branch
    %15 = sbr.rel (%p13) target = $region8
  $region5: #{convlstm_forward.1} parent=0 // loop_body
    %s17 = ssub.s32 %s12, 1
    %s18 = ssub.s32 %s12, 2
    %s19 = sadd.s32 %s12, 1
    %s20 = ssub.s32 %s12, %s19
    %p21 = scmp.eq.s32.totalorder %s20, 0
    %s23 = sadd.s32 %s22, 1
    %s24 = scalar_select %p21, %s22, %s23
    %p27 = pneg %p21
    %p28 = scmp.eq.s32.totalorder %s12, 1
    %p29 = por %p27, %p28
    %p30 = scmp.ne.s32.totalorder %s22, %s25
    %p31 = scmp.eq.s32.totalorder %s12, 0
    %p32 = por %p30, %p31
    %p33 = scmp.ne.s32.totalorder %s22, %s25
    %p34 = scmp.eq.s32.totalorder %s17, 1
    %p35 = por %p33, %p34
    %p36 = scmp.ne.s32.totalorder %s25, %s26
    %p37 = scmp.eq.s32.totalorder %s17, 0
    %p38 = por %p36, %p37
    %p39 = scmp.ne.s32.totalorder %s25, %s26
    %p40 = scmp.eq.s32.totalorder %s18, 1
    %p41 = por %p39, %p40
    %p43 = scmp.ne.s32.totalorder %s26, %s42
    %p44 = scmp.eq.s32.totalorder %s18, 0
    %p45 = por %p43, %p44
    %s46 = ssub.s32 %s12, %s19
    %p47 = scmp.eq.s32.totalorder %s46, 0
    %s49 = sadd.s32 %s48, 1
    %s50 = scalar_select %p47, %s48, %s49
    %p53 = pneg %p47
    %p54 = scmp.eq.s32.totalorder %s12, 1
    %p55 = por %p53, %p54
    %p56 = scmp.ne.s32.totalorder %s48, %s51
    %p57 = scmp.eq.s32.totalorder %s12, 0
    %p58 = por %p56, %p57
    %p59 = scmp.ne.s32.totalorder %s48, %s51
    %p60 = scmp.eq.s32.totalorder %s17, 1
    %p61 = por %p59, %p60
    %p62 = scmp.ne.s32.totalorder %s51, %s52
    %p63 = scmp.eq.s32.totalorder %s17, 0
    %p64 = por %p62, %p63
    %p65 = scmp.ne.s32.totalorder %s51, %s52
    %p66 = scmp.eq.s32.totalorder %s18, 1
    %p67 = por %p65, %p66
    %p69 = scmp.ne.s32.totalorder %s52, %s68
    %p70 = scmp.eq.s32.totalorder %s18, 0
    %p71 = por %p69, %p70
    %s73 = sadd.s32 %s72, 1
    %p76 = scmp.eq.s32.totalorder %s12, 1
    %p77 = scmp.ne.s32.totalorder %s72, %s74
    %p78 = scmp.eq.s32.totalorder %s12, 0
    %p79 = por %p77, %p78
    %p80 = scmp.ne.s32.totalorder %s72, %s74
    %p81 = scmp.eq.s32.totalorder %s17, 1
    %p82 = por %p80, %p81
    %p83 = scmp.ne.s32.totalorder %s74, %s75
    %p84 = scmp.eq.s32.totalorder %s17, 0
    %p85 = por %p83, %p84
    %p86 = scmp.ne.s32.totalorder %s74, %s75
    %p87 = scmp.eq.s32.totalorder %s18, 1
    %p88 = por %p86, %p87
    %p90 = scmp.ne.s32.totalorder %s75, %s89
    %p91 = scmp.eq.s32.totalorder %s18, 0
    %p92 = por %p90, %p91
    %s94 = sadd.s32 %s93, 1
    %p97 = scmp.eq.s32.totalorder %s12, 1
    %p98 = scmp.ne.s32.totalorder %s93, %s95
    %p99 = scmp.eq.s32.totalorder %s12, 0
    %p100 = por %p98, %p99
    %p101 = scmp.ne.s32.totalorder %s93, %s95
    %p102 = scmp.eq.s32.totalorder %s17, 1
    %p103 = por %p101, %p102
    %p104 = scmp.ne.s32.totalorder %s95, %s96
    %p105 = scmp.eq.s32.totalorder %s17, 0
    %p106 = por %p104, %p105
    %p107 = scmp.ne.s32.totalorder %s95, %s96
    %p108 = scmp.eq.s32.totalorder %s18, 1
    %p109 = por %p107, %p108
    %p111 = scmp.ne.s32.totalorder %s96, %s110
    %p112 = scmp.eq.s32.totalorder %s18, 0
    %p113 = por %p111, %p112
    %s115 = sadd.s32 %s114, 1
    %p118 = scmp.eq.s32.totalorder %s12, 1
    %p119 = scmp.ne.s32.totalorder %s114, %s116
    %p120 = scmp.eq.s32.totalorder %s12, 0
    %p121 = por %p119, %p120
    %p122 = scmp.ne.s32.totalorder %s114, %s116
    %p123 = scmp.eq.s32.totalorder %s17, 1
    %p124 = por %p122, %p123
    %p125 = scmp.ne.s32.totalorder %s116, %s117
    %p126 = scmp.eq.s32.totalorder %s17, 0
    %p127 = por %p125, %p126
    %p128 = scmp.ne.s32.totalorder %s116, %s117
    %p129 = scmp.eq.s32.totalorder %s18, 1
    %p130 = por %p128, %p129
    %p132 = scmp.ne.s32.totalorder %s117, %s131
    %p133 = scmp.eq.s32.totalorder %s18, 0
    %p134 = por %p132, %p133
    %s136 = sadd.s32 %s135, 1
    %p139 = scmp.eq.s32.totalorder %s12, 1
    %p140 = scmp.ne.s32.totalorder %s135, %s137
    %p141 = scmp.eq.s32.totalorder %s12, 0
    %p142 = por %p140, %p141
    %p143 = scmp.ne.s32.totalorder %s135, %s137
    %p144 = scmp.eq.s32.totalorder %s17, 1
    %p145 = por %p143, %p144
    %p146 = scmp.ne.s32.totalorder %s137, %s138
    %p147 = scmp.eq.s32.totalorder %s17, 0
    %p148 = por %p146, %p147
    %p149 = scmp.ne.s32.totalorder %s137, %s138
    %p150 = scmp.eq.s32.totalorder %s18, 1
    %p151 = por %p149, %p150
    %p153 = scmp.ne.s32.totalorder %s138, %s152
    %p154 = scmp.eq.s32.totalorder %s18, 0
    %p155 = por %p153, %p154
    %s156 = ssub.s32 %s12, %s19
    %p157 = scmp.eq.s32.totalorder %s156, 0
    %s159 = sadd.s32 %s158, 1
    %s160 = scalar_select %p157, %s158, %s159
    %p163 = pneg %p157
    %p164 = scmp.eq.s32.totalorder %s12, 1
    %p165 = por %p163, %p164
    %p166 = scmp.ne.s32.totalorder %s158, %s161
    %p167 = scmp.eq.s32.totalorder %s12, 0
    %p168 = por %p166, %p167
    %p169 = scmp.ne.s32.totalorder %s158, %s161
    %p170 = scmp.eq.s32.totalorder %s17, 1
    %p171 = por %p169, %p170
    %p172 = scmp.ne.s32.totalorder %s161, %s162
    %p173 = scmp.eq.s32.totalorder %s17, 0
    %p174 = por %p172, %p173
    %p175 = scmp.ne.s32.totalorder %s161, %s162
    %p176 = scmp.eq.s32.totalorder %s18, 1
    %p177 = por %p175, %p176
    %p179 = scmp.ne.s32.totalorder %s162, %s178
    %p180 = scmp.eq.s32.totalorder %s18, 0
    %p181 = por %p179, %p180
    %p182 = scmp.le.s32.totalorder 1, %s12
    %p183 = scmp.lt.s32.totalorder %s12, 3
    %p184 = pnand %p182, %p183
    %p185 = pneg %p184
    // Predicated region
    $region9: #{convlstm_forward.1} parent=5 // pred_check
      _
    $region10: #{convlstm_forward.1} parent=5 // pred_check_branch
      %187 = sbr.rel (%p184) target = $region12
    $region11: #{convlstm_forward.1} parent=5 // pred_region
      %s188 = ssub.s32 %s12, 1
      // Predicated region
      $region13: #{convlstm_forward.1} parent=11 // pred_check
        %p189 = pneg %p85
      $region14: #{convlstm_forward.1} parent=11 // pred_check_branch
        %191 = sbr.rel (%p189) target = $region16
      $region15: #{convlstm_forward.1} parent=11 // pred_region
        _
      $region16: #{convlstm_forward.1} parent=11 // pred_fallthru
        _
      // Predicated region
      $region17: #{convlstm_forward.1} parent=11 // pred_check
        %p192 = pneg %p106
      $region18: #{convlstm_forward.1} parent=11 // pred_check_branch
        %194 = sbr.rel (%p192) target = $region20
      $region19: #{convlstm_forward.1} parent=11 // pred_region
        _
      $region20: #{convlstm_forward.1} parent=11 // pred_fallthru
        _
      // Predicated region
      $region21: #{convlstm_forward.1} parent=11 // pred_check
        %p195 = pneg %p127
      $region22: #{convlstm_forward.1} parent=11 // pred_check_branch
        %197 = sbr.rel (%p195) target = $region24
      $region23: #{convlstm_forward.1} parent=11 // pred_region
        _
      $region24: #{convlstm_forward.1} parent=11 // pred_fallthru
        _
      // Predicated region
      $region25: #{convlstm_forward.1} parent=11 // pred_check
        %p198 = pneg %p148
      $region26: #{convlstm_forward.1} parent=11 // pred_check_branch
        %200 = sbr.rel (%p198) target = $region28
      $region27: #{convlstm_forward.1} parent=11 // pred_region
        _
      $region28: #{convlstm_forward.1} parent=11 // pred_fallthru
        _
    $region12: #{convlstm_forward.1} parent=5 // pred_fallthru
      _
    %p201 = scmp.lt.s32.totalorder %s12, 2
    // Predicated region
    $region29: #{convlstm_forward.1} parent=5 // pred_check
      %p202 = pneg %p201
    $region30: #{convlstm_forward.1} parent=5 // pred_check_branch
      %204 = sbr.rel (%p202) target = $region32
    $region31: #{convlstm_forward.1} parent=5 // pred_region
      // Predicated region
      $region33: #{convlstm_forward.1} parent=31 // pred_check
        %p205 = pneg %p32
      $region34: #{convlstm_forward.1} parent=31 // pred_check_branch
        %207 = sbr.rel (%p205) target = $region36
      $region35: #{convlstm_forward.1} parent=31 // pred_region
        %p208 = scmp.lt.s32.totalorder %s12, 1
        %s209 = scalar_select %p208, %s12, 1
        %s210 = smul.addr %s209, 32
        %s211 = smul.addr %s210, 8
        %s212 = scalar_lea.vmem %s0, %s211
      $region36: #{convlstm_forward.1} parent=31 // pred_fallthru
        _
      // Predicated region
      $region37: #{convlstm_forward.1} parent=31 // pred_check
        %p213 = pneg %p58
      $region38: #{convlstm_forward.1} parent=31 // pred_check_branch
        %215 = sbr.rel (%p213) target = $region40
      $region39: #{convlstm_forward.1} parent=31 // pred_region
        %p216 = scmp.lt.s32.totalorder %s12, 1
        %s217 = scalar_select %p216, %s12, 1
        %s218 = smul.addr %s217, 32
        %s219 = smul.addr %s218, 8
        %s220 = scalar_lea.vmem %s1, %s219
      $region40: #{convlstm_forward.1} parent=31 // pred_fallthru
        _
    $region32: #{convlstm_forward.1} parent=5 // pred_fallthru
      _
    %p221 = scmp.le.s32.totalorder 1, %s12
    %p222 = scmp.lt.s32.totalorder %s12, 3
    %p223 = pnand %p221, %p222
    %p224 = pneg %p223
    // Predicated region
    $region41: #{convlstm_forward.1} parent=5 // pred_check
      _
    $region42: #{convlstm_forward.1} parent=5 // pred_check_branch
      %226 = sbr.rel (%p223) target = $region44
    $region43: #{convlstm_forward.1} parent=5 // pred_region
      %s227 = ssub.s32 %s12, 1
      %p228 = scmp.lt.s32.totalorder %s17, 1
      %s229 = scalar_select %p228, %s17, 1
      %s230 = smul.addr %s229, 32
      %s231 = smul.addr %s230, 8
      %s232 = scalar_lea.vmem %s0, %s231
      %p233 = pneg %p38
      %p234 = pneg %p35
      %p235 = scmp.lt.s32.totalorder %s17, 1
      %s236 = scalar_select %p235, %s17, 1
      %s237 = smul.addr %s236, 32
      %s238 = smul.addr %s237, 8
      %s239 = scalar_lea.vmem %s1, %s238
      %p240 = pneg %p64
      %p241 = pneg %p61
      %p242 = pneg %p85
      %p243 = pneg %p82
      %p244 = pneg %p106
      %p245 = pneg %p103
      %p246 = pneg %p127
      %p247 = pneg %p124
      %p248 = pneg %p148
      %p249 = pneg %p145
      %p250 = pneg %p174
      %p251 = pneg %p171
      %p252 = scmp.lt.s32.totalorder %s17, 1
      %s253 = scalar_select %p252, %s17, 1
      %s254 = smul.addr %s253, 32
      %s255 = smul.addr %s254, 8
      %s256 = scalar_lea.vmem %s6, %s255
      %p257 = scmp.lt.s32.totalorder %s17, 1
      %s258 = scalar_select %p257, %s17, 1
      %s259 = smul.addr %s258, 32
      %s260 = smul.addr %s259, 8
      %s261 = scalar_lea.vmem %s0, %s260
      %p262 = scmp.lt.s32.totalorder %s17, 1
      %s263 = scalar_select %p262, %s17, 1
      %s264 = smul.addr %s263, 32
      %s265 = smul.addr %s264, 8
      %s266 = scalar_lea.vmem %s1, %s265
      %p267 = scmp.lt.s32.totalorder %s17, 1
      %s268 = scalar_select %p267, %s17, 1
      %s269 = smul.addr %s268, 32
      %s270 = smul.addr %s269, 8
      %s271 = scalar_lea.vmem %s6, %s270
      %v273 = vld [vmem:[%s261] sm:$0xff]
      %v274 = vld [vmem:[%s261 + $0x8] sm:$0xff]
      %v275 = vld [vmem:[%s261 + $0x10] sm:$0xff]
      %v276 = vld [vmem:[%s261 + $0x18] sm:$0xff]
      %v277 = vld [vmem:[%s261 + $0x20] sm:$0xff]
      %v278 = vld [vmem:[%s261 + $0x28] sm:$0xff]
      %v279 = vld [vmem:[%s261 + $0x30] sm:$0xff]
      %v280 = vld [vmem:[%s261 + $0x38] sm:$0xff]
      %v281 = vld [vmem:[%s261 + $0x40] sm:$0xff]
      %v282 = vld [vmem:[%s261 + $0x48] sm:$0xff]
      %v283 = vld [vmem:[%s261 + $0x50] sm:$0xff]
      %v284 = vld [vmem:[%s261 + $0x58] sm:$0xff]
      %v285 = vld [vmem:[%s261 + $0x60] sm:$0xff]
      %v286 = vld [vmem:[%s261 + $0x68] sm:$0xff]
      %v287 = vld [vmem:[%s261 + $0x70] sm:$0xff]
      %v288 = vld [vmem:[%s261 + $0x78] sm:$0xff]
      %v289 = vld [vmem:[%s261 + $0x80] sm:$0xff]
      %v290 = vld [vmem:[%s261 + $0x88] sm:$0xff]
      %v291 = vld [vmem:[%s261 + $0x90] sm:$0xff]
      %v292 = vld [vmem:[%s261 + $0x98] sm:$0xff]
      %v293 = vld [vmem:[%s261 + $0xa0] sm:$0xff]
      %v294 = vld [vmem:[%s261 + $0xa8] sm:$0xff]
      %v295 = vld [vmem:[%s261 + $0xb0] sm:$0xff]
      %v296 = vld [vmem:[%s261 + $0xb8] sm:$0xff]
      %v297 = vld [vmem:[%s261 + $0xc0] sm:$0xff]
      %v298 = vld [vmem:[%s261 + $0xc8] sm:$0xff]
      %v299 = vld [vmem:[%s261 + $0xd0] sm:$0xff]
      %v300 = vld [vmem:[%s261 + $0xd8] sm:$0xff]
      %v301 = vld [vmem:[%s261 + $0xe0] sm:$0xff]
      %v302 = vld [vmem:[%s261 + $0xe8] sm:$0xff]
      %v303 = vld [vmem:[%s261 + $0xf0] sm:$0xff]
      %v304 = vld [vmem:[%s261 + $0xf8] sm:$0xff]
      %v305 = vld [vmem:[%s266] sm:$0xff]
      %v306 = vld [vmem:[%s266 + $0x8] sm:$0xff]
      %v307 = vld [vmem:[%s266 + $0x10] sm:$0xff]
      %v308 = vld [vmem:[%s266 + $0x18] sm:$0xff]
      %v309 = vld [vmem:[%s266 + $0x20] sm:$0xff]
      %v310 = vld [vmem:[%s266 + $0x28] sm:$0xff]
      %v311 = vld [vmem:[%s266 + $0x30] sm:$0xff]
      %v312 = vld [vmem:[%s266 + $0x38] sm:$0xff]
      %v313 = vld [vmem:[%s266 + $0x40] sm:$0xff]
      %v314 = vld [vmem:[%s266 + $0x48] sm:$0xff]
      %v315 = vld [vmem:[%s266 + $0x50] sm:$0xff]
      %v316 = vld [vmem:[%s266 + $0x58] sm:$0xff]
      %v317 = vld [vmem:[%s266 + $0x60] sm:$0xff]
      %v318 = vld [vmem:[%s266 + $0x68] sm:$0xff]
      %v319 = vld [vmem:[%s266 + $0x70] sm:$0xff]
      %v320 = vld [vmem:[%s266 + $0x78] sm:$0xff]
      %v321 = vld [vmem:[%s266 + $0x80] sm:$0xff]
      %v322 = vld [vmem:[%s266 + $0x88] sm:$0xff]
      %v323 = vld [vmem:[%s266 + $0x90] sm:$0xff]
      %v324 = vld [vmem:[%s266 + $0x98] sm:$0xff]
      %v325 = vld [vmem:[%s266 + $0xa0] sm:$0xff]
      %v326 = vld [vmem:[%s266 + $0xa8] sm:$0xff]
      %v327 = vld [vmem:[%s266 + $0xb0] sm:$0xff]
      %v328 = vld [vmem:[%s266 + $0xb8] sm:$0xff]
      %v329 = vld [vmem:[%s266 + $0xc0] sm:$0xff]
      %v330 = vld [vmem:[%s266 + $0xc8] sm:$0xff]
      %v331 = vld [vmem:[%s266 + $0xd0] sm:$0xff]
      %v332 = vld [vmem:[%s266 + $0xd8] sm:$0xff]
      %v333 = vld [vmem:[%s266 + $0xe0] sm:$0xff]
      %v334 = vld [vmem:[%s266 + $0xe8] sm:$0xff]
      %v335 = vld [vmem:[%s266 + $0xf0] sm:$0xff]
      %v336 = vld [vmem:[%s266 + $0xf8] sm:$0xff]
      %369 = vrot.lane.b32.xlu0 %v305, 4
      %v370 = vpop.permute.xlu0 %369
      %371 = vrot.lane.b32.xlu0 %v306, 4
      %v372 = vpop.permute.xlu0 %371
      %373 = vrot.lane.b32.xlu0 %v307, 4
      %v374 = vpop.permute.xlu0 %373
      %375 = vrot.lane.b32.xlu0 %v308, 4
      %v376 = vpop.permute.xlu0 %375
      %377 = vrot.lane.b32.xlu0 %v309, 4
      %v378 = vpop.permute.xlu0 %377
      %379 = vrot.lane.b32.xlu0 %v310, 4
      %v380 = vpop.permute.xlu0 %379
      %381 = vrot.lane.b32.xlu0 %v311, 4
      %v382 = vpop.permute.xlu0 %381
      %383 = vrot.lane.b32.xlu0 %v312, 4
      %v384 = vpop.permute.xlu0 %383
      %385 = vrot.lane.b32.xlu0 %v313, 4
      %v386 = vpop.permute.xlu0 %385
      %387 = vrot.lane.b32.xlu0 %v314, 4
      %v388 = vpop.permute.xlu0 %387
      %389 = vrot.lane.b32.xlu0 %v315, 4
      %v390 = vpop.permute.xlu0 %389
      %391 = vrot.lane.b32.xlu0 %v316, 4
      %v392 = vpop.permute.xlu0 %391
      %393 = vrot.lane.b32.xlu0 %v317, 4
      %v394 = vpop.permute.xlu0 %393
      %395 = vrot.lane.b32.xlu0 %v318, 4
      %v396 = vpop.permute.xlu0 %395
      %397 = vrot.lane.b32.xlu0 %v319, 4
      %v398 = vpop.permute.xlu0 %397
      %399 = vrot.lane.b32.xlu0 %v320, 4
      %v400 = vpop.permute.xlu0 %399
      %401 = vrot.lane.b32.xlu0 %v321, 4
      %v402 = vpop.permute.xlu0 %401
      %403 = vrot.lane.b32.xlu0 %v322, 4
      %v404 = vpop.permute.xlu0 %403
      %405 = vrot.lane.b32.xlu0 %v323, 4
      %v406 = vpop.permute.xlu0 %405
      %407 = vrot.lane.b32.xlu0 %v324, 4
      %v408 = vpop.permute.xlu0 %407
      %409 = vrot.lane.b32.xlu0 %v325, 4
      %v410 = vpop.permute.xlu0 %409
      %411 = vrot.lane.b32.xlu0 %v326, 4
      %v412 = vpop.permute.xlu0 %411
      %413 = vrot.lane.b32.xlu0 %v327, 4
      %v414 = vpop.permute.xlu0 %413
      %415 = vrot.lane.b32.xlu0 %v328, 4
      %v416 = vpop.permute.xlu0 %415
      %417 = vrot.lane.b32.xlu0 %v329, 4
      %v418 = vpop.permute.xlu0 %417
      %419 = vrot.lane.b32.xlu0 %v330, 4
      %v420 = vpop.permute.xlu0 %419
      %421 = vrot.lane.b32.xlu0 %v331, 4
      %v422 = vpop.permute.xlu0 %421
      %423 = vrot.lane.b32.xlu0 %v332, 4
      %v424 = vpop.permute.xlu0 %423
      %425 = vrot.lane.b32.xlu0 %v333, 4
      %v426 = vpop.permute.xlu0 %425
      %427 = vrot.lane.b32.xlu0 %v334, 4
      %v428 = vpop.permute.xlu0 %427
      %429 = vrot.lane.b32.xlu0 %v335, 4
      %v430 = vpop.permute.xlu0 %429
      %431 = vrot.lane.b32.xlu0 %v336, 4
      %v432 = vpop.permute.xlu0 %431
      %vm465 = vcmask 31744
      %v466 = vsel %vm465, %v273, %v370
      %v467 = vsel %vm465, %v274, %v372
      %v468 = vsel %vm465, %v275, %v374
      %v469 = vsel %vm465, %v276, %v376
      %v470 = vsel %vm465, %v277, %v378
      %v471 = vsel %vm465, %v278, %v380
      %v472 = vsel %vm465, %v279, %v382
      %v473 = vsel %vm465, %v280, %v384
      %v474 = vsel %vm465, %v281, %v386
      %v475 = vsel %vm465, %v282, %v388
      %v476 = vsel %vm465, %v283, %v390
      %v477 = vsel %vm465, %v284, %v392
      %v478 = vsel %vm465, %v285, %v394
      %v479 = vsel %vm465, %v286, %v396
      %v480 = vsel %vm465, %v287, %v398
      %v481 = vsel %vm465, %v288, %v400
      %v482 = vsel %vm465, %v289, %v402
      %v483 = vsel %vm465, %v290, %v404
      %v484 = vsel %vm465, %v291, %v406
      %v485 = vsel %vm465, %v292, %v408
      %v486 = vsel %vm465, %v293, %v410
      %v487 = vsel %vm465, %v294, %v412
      %v488 = vsel %vm465, %v295, %v414
      %v489 = vsel %vm465, %v296, %v416
      %v490 = vsel %vm465, %v297, %v418
      %v491 = vsel %vm465, %v298, %v420
      %v492 = vsel %vm465, %v299, %v422
      %v493 = vsel %vm465, %v300, %v424
      %v494 = vsel %vm465, %v301, %v426
      %v495 = vsel %vm465, %v302, %v428
      %v496 = vsel %vm465, %v303, %v430
      %v497 = vsel %vm465, %v304, %v432
      %vm498 = vcmask 293888
      %v499 = vsel %vm498, %v466, 0.0
      %v500 = vsel %vm498, %v467, 0.0
      %v501 = vsel %vm498, %v468, 0.0
      %v502 = vsel %vm498, %v469, 0.0
      %v503 = vsel %vm498, %v470, 0.0
      %v504 = vsel %vm498, %v471, 0.0
      %v505 = vsel %vm498, %v472, 0.0
      %v506 = vsel %vm498, %v473, 0.0
      %v507 = vsel %vm498, %v474, 0.0
      %v508 = vsel %vm498, %v475, 0.0
      %v509 = vsel %vm498, %v476, 0.0
      %v510 = vsel %vm498, %v477, 0.0
      %v511 = vsel %vm498, %v478, 0.0
      %v512 = vsel %vm498, %v479, 0.0
      %v513 = vsel %vm498, %v480, 0.0
      %v514 = vsel %vm498, %v481, 0.0
      %v515 = vsel %vm498, %v482, 0.0
      %v516 = vsel %vm498, %v483, 0.0
      %v517 = vsel %vm498, %v484, 0.0
      %v518 = vsel %vm498, %v485, 0.0
      %v519 = vsel %vm498, %v486, 0.0
      %v520 = vsel %vm498, %v487, 0.0
      %v521 = vsel %vm498, %v488, 0.0
      %v522 = vsel %vm498, %v489, 0.0
      %v523 = vsel %vm498, %v490, 0.0
      %v524 = vsel %vm498, %v491, 0.0
      %v525 = vsel %vm498, %v492, 0.0
      %v526 = vsel %vm498, %v493, 0.0
      %v527 = vsel %vm498, %v494, 0.0
      %v528 = vsel %vm498, %v495, 0.0
      %v529 = vsel %vm498, %v496, 0.0
      %v530 = vsel %vm498, %v497, 0.0
      %vm564 = vcmask 1040384
      %v565 = vrot.slane 0.0, 7
      %v566 = vsel %vm564, %v565, %v565
      %v567 = vrot.slane %v499, 7
      %v568 = vrot.slane %v500, 7
      %v569 = vsel %vm564, %v567, %v568
      %v570 = vrot.slane %v501, 7
      %v571 = vrot.slane %v502, 7
      %v572 = vsel %vm564, %v570, %v571
      %v573 = vrot.slane %v503, 7
      %v574 = vrot.slane %v504, 7
      %v575 = vsel %vm564, %v573, %v574
      %v576 = vrot.slane %v505, 7
      %v577 = vrot.slane %v506, 7
      %v578 = vsel %vm564, %v576, %v577
      %v579 = vrot.slane %v507, 7
      %v580 = vrot.slane %v508, 7
      %v581 = vsel %vm564, %v579, %v580
      %v582 = vrot.slane %v509, 7
      %v583 = vrot.slane %v510, 7
      %v584 = vsel %vm564, %v582, %v583
      %v585 = vrot.slane %v511, 7
      %v586 = vrot.slane %v512, 7
      %v587 = vsel %vm564, %v585, %v586
      %v588 = vrot.slane %v513, 7
      %v589 = vrot.slane %v514, 7
      %v590 = vsel %vm564, %v588, %v589
      %v591 = vrot.slane %v515, 7
      %v592 = vrot.slane %v516, 7
      %v593 = vsel %vm564, %v591, %v592
      %v594 = vrot.slane %v517, 7
      %v595 = vrot.slane %v518, 7
      %v596 = vsel %vm564, %v594, %v595
      %v597 = vrot.slane %v519, 7
      %v598 = vrot.slane %v520, 7
      %v599 = vsel %vm564, %v597, %v598
      %v600 = vrot.slane %v521, 7
      %v601 = vrot.slane %v522, 7
      %v602 = vsel %vm564, %v600, %v601
      %v603 = vrot.slane %v523, 7
      %v604 = vrot.slane %v524, 7
      %v605 = vsel %vm564, %v603, %v604
      %v606 = vrot.slane %v525, 7
      %v607 = vrot.slane %v526, 7
      %v608 = vsel %vm564, %v606, %v607
      %v609 = vrot.slane %v527, 7
      %v610 = vrot.slane %v528, 7
      %v611 = vsel %vm564, %v609, %v610
      %v612 = vrot.slane %v529, 7
      %v613 = vrot.slane %v530, 7
      %v614 = vsel %vm564, %v612, %v613
      %v649 = vsel %vm564, 0.0, %v565
      %v650 = vsel %vm564, 0.0, %v567
      %v651 = vsel %vm564, 0.0, %v570
      %v652 = vsel %vm564, 0.0, %v573
      %v653 = vsel %vm564, 0.0, %v576
      %v654 = vsel %vm564, 0.0, %v579
      %v655 = vsel %vm564, 0.0, %v582
      %v656 = vsel %vm564, 0.0, %v585
      %v657 = vsel %vm564, 0.0, %v588
      %v658 = vsel %vm564, 0.0, %v591
      %v659 = vsel %vm564, 0.0, %v594
      %v660 = vsel %vm564, 0.0, %v597
      %v661 = vsel %vm564, 0.0, %v600
      %v662 = vsel %vm564, 0.0, %v603
      %v663 = vsel %vm564, 0.0, %v606
      %v664 = vsel %vm564, 0.0, %v609
      %v665 = vsel %vm564, 0.0, %v612
      %vm666 = vcmask 1046528
      %v667 = vrot.slane 0.0, 1
      %v668 = vsel %vm666, %v667, %v667
      %v669 = vrot.slane %v499, 1
      %v670 = vrot.slane %v500, 1
      %v671 = vsel %vm666, %v669, %v670
      %v672 = vrot.slane %v501, 1
      %v673 = vrot.slane %v502, 1
      %v674 = vsel %vm666, %v672, %v673
      %v675 = vrot.slane %v503, 1
      %v676 = vrot.slane %v504, 1
      %v677 = vsel %vm666, %v675, %v676
      %v678 = vrot.slane %v505, 1
      %v679 = vrot.slane %v506, 1
      %v680 = vsel %vm666, %v678, %v679
      %v681 = vrot.slane %v507, 1
      %v682 = vrot.slane %v508, 1
      %v683 = vsel %vm666, %v681, %v682
      %v684 = vrot.slane %v509, 1
      %v685 = vrot.slane %v510, 1
      %v686 = vsel %vm666, %v684, %v685
      %v687 = vrot.slane %v511, 1
      %v688 = vrot.slane %v512, 1
      %v689 = vsel %vm666, %v687, %v688
      %v690 = vrot.slane %v513, 1
      %v691 = vrot.slane %v514, 1
      %v692 = vsel %vm666, %v690, %v691
      %v693 = vrot.slane %v515, 1
      %v694 = vrot.slane %v516, 1
      %v695 = vsel %vm666, %v693, %v694
      %v696 = vrot.slane %v517, 1
      %v697 = vrot.slane %v518, 1
      %v698 = vsel %vm666, %v696, %v697
      %v699 = vrot.slane %v519, 1
      %v700 = vrot.slane %v520, 1
      %v701 = vsel %vm666, %v699, %v700
      %v702 = vrot.slane %v521, 1
      %v703 = vrot.slane %v522, 1
      %v704 = vsel %vm666, %v702, %v703
      %v705 = vrot.slane %v523, 1
      %v706 = vrot.slane %v524, 1
      %v707 = vsel %vm666, %v705, %v706
      %v708 = vrot.slane %v525, 1
      %v709 = vrot.slane %v526, 1
      %v710 = vsel %vm666, %v708, %v709
      %v711 = vrot.slane %v527, 1
      %v712 = vrot.slane %v528, 1
      %v713 = vsel %vm666, %v711, %v712
      %v714 = vrot.slane %v529, 1
      %v715 = vrot.slane %v530, 1
      %v716 = vsel %vm666, %v714, %v715
      %v734 = vsel %vm666, %v667, 0.0
      %v735 = vsel %vm666, %v670, 0.0
      %v736 = vsel %vm666, %v673, 0.0
      %v737 = vsel %vm666, %v676, 0.0
      %v738 = vsel %vm666, %v679, 0.0
      %v739 = vsel %vm666, %v682, 0.0
      %v740 = vsel %vm666, %v685, 0.0
      %v741 = vsel %vm666, %v688, 0.0
      %v742 = vsel %vm666, %v691, 0.0
      %v743 = vsel %vm666, %v694, 0.0
      %v744 = vsel %vm666, %v697, 0.0
      %v745 = vsel %vm666, %v700, 0.0
      %v746 = vsel %vm666, %v703, 0.0
      %v747 = vsel %vm666, %v706, 0.0
      %v748 = vsel %vm666, %v709, 0.0
      %v749 = vsel %vm666, %v712, 0.0
      %v750 = vsel %vm666, %v715, 0.0
      %751 = vrot.lane.b32.xlu0 0.0, 48
      %v752 = vpop.permute.xlu0 %751
      %753 = vrot.lane.b32.xlu0 %v499, 48
      %v754 = vpop.permute.xlu0 %753
      %755 = vrot.lane.b32.xlu0 %v500, 48
      %v756 = vpop.permute.xlu0 %755
      %757 = vrot.lane.b32.xlu0 %v501, 48
      %v758 = vpop.permute.xlu0 %757
      %759 = vrot.lane.b32.xlu0 %v502, 48
      %v760 = vpop.permute.xlu0 %759
      %761 = vrot.lane.b32.xlu0 %v503, 48
      %v762 = vpop.permute.xlu0 %761
      %763 = vrot.lane.b32.xlu0 %v504, 48
      %v764 = vpop.permute.xlu0 %763
      %765 = vrot.lane.b32.xlu0 %v505, 48
      %v766 = vpop.permute.xlu0 %765
      %767 = vrot.lane.b32.xlu0 %v506, 48
      %v768 = vpop.permute.xlu0 %767
      %769 = vrot.lane.b32.xlu0 %v507, 48
      %v770 = vpop.permute.xlu0 %769
      %771 = vrot.lane.b32.xlu0 %v508, 48
      %v772 = vpop.permute.xlu0 %771
      %773 = vrot.lane.b32.xlu0 %v509, 48
      %v774 = vpop.permute.xlu0 %773
      %775 = vrot.lane.b32.xlu0 %v510, 48
      %v776 = vpop.permute.xlu0 %775
      %777 = vrot.lane.b32.xlu0 %v511, 48
      %v778 = vpop.permute.xlu0 %777
      %779 = vrot.lane.b32.xlu0 %v512, 48
      %v780 = vpop.permute.xlu0 %779
      %781 = vrot.lane.b32.xlu0 %v513, 48
      %v782 = vpop.permute.xlu0 %781
      %783 = vrot.lane.b32.xlu0 %v514, 48
      %v784 = vpop.permute.xlu0 %783
      %785 = vrot.lane.b32.xlu0 %v515, 48
      %v786 = vpop.permute.xlu0 %785
      %787 = vrot.lane.b32.xlu0 %v516, 48
      %v788 = vpop.permute.xlu0 %787
      %789 = vrot.lane.b32.xlu0 %v517, 48
      %v790 = vpop.permute.xlu0 %789
      %791 = vrot.lane.b32.xlu0 %v518, 48
      %v792 = vpop.permute.xlu0 %791
      %793 = vrot.lane.b32.xlu0 %v519, 48
      %v794 = vpop.permute.xlu0 %793
      %795 = vrot.lane.b32.xlu0 %v520, 48
      %v796 = vpop.permute.xlu0 %795
      %797 = vrot.lane.b32.xlu0 %v521, 48
      %v798 = vpop.permute.xlu0 %797
      %799 = vrot.lane.b32.xlu0 %v522, 48
      %v800 = vpop.permute.xlu0 %799
      %801 = vrot.lane.b32.xlu0 %v523, 48
      %v802 = vpop.permute.xlu0 %801
      %803 = vrot.lane.b32.xlu0 %v524, 48
      %v804 = vpop.permute.xlu0 %803
      %805 = vrot.lane.b32.xlu0 %v525, 48
      %v806 = vpop.permute.xlu0 %805
      %807 = vrot.lane.b32.xlu0 %v526, 48
      %v808 = vpop.permute.xlu0 %807
      %809 = vrot.lane.b32.xlu0 %v527, 48
      %v810 = vpop.permute.xlu0 %809
      %811 = vrot.lane.b32.xlu0 %v528, 48
      %v812 = vpop.permute.xlu0 %811
      %813 = vrot.lane.b32.xlu0 %v529, 48
      %v814 = vpop.permute.xlu0 %813
      %815 = vrot.lane.b32.xlu0 %v530, 48
      %v816 = vpop.permute.xlu0 %815
      %867 = vrot.lane.b32.xlu0 %v668, 96
      %v868 = vpop.permute.xlu0 %867
      %869 = vrot.lane.b32.xlu0 %v734, 96
      %v870 = vpop.permute.xlu0 %869
      %871 = vrot.lane.b32.xlu0 %v671, 96
      %v872 = vpop.permute.xlu0 %871
      %873 = vrot.lane.b32.xlu0 %v735, 96
      %v874 = vpop.permute.xlu0 %873
      %875 = vrot.lane.b32.xlu0 %v674, 96
      %v876 = vpop.permute.xlu0 %875
      %877 = vrot.lane.b32.xlu0 %v736, 96
      %v878 = vpop.permute.xlu0 %877
      %879 = vrot.lane.b32.xlu0 %v677, 96
      %v880 = vpop.permute.xlu0 %879
      %881 = vrot.lane.b32.xlu0 %v737, 96
      %v882 = vpop.permute.xlu0 %881
      %883 = vrot.lane.b32.xlu0 %v680, 96
      %v884 = vpop.permute.xlu0 %883
      %885 = vrot.lane.b32.xlu0 %v738, 96
      %v886 = vpop.permute.xlu0 %885
      %887 = vrot.lane.b32.xlu0 %v683, 96
      %v888 = vpop.permute.xlu0 %887
      %889 = vrot.lane.b32.xlu0 %v739, 96
      %v890 = vpop.permute.xlu0 %889
      %891 = vrot.lane.b32.xlu0 %v686, 96
      %v892 = vpop.permute.xlu0 %891
      %893 = vrot.lane.b32.xlu0 %v740, 96
      %v894 = vpop.permute.xlu0 %893
      %895 = vrot.lane.b32.xlu0 %v689, 96
      %v896 = vpop.permute.xlu0 %895
      %897 = vrot.lane.b32.xlu0 %v741, 96
      %v898 = vpop.permute.xlu0 %897
      %899 = vrot.lane.b32.xlu0 %v692, 96
      %v900 = vpop.permute.xlu0 %899
      %901 = vrot.lane.b32.xlu0 %v742, 96
      %v902 = vpop.permute.xlu0 %901
      %903 = vrot.lane.b32.xlu0 %v695, 96
      %v904 = vpop.permute.xlu0 %903
      %905 = vrot.lane.b32.xlu0 %v743, 96
      %v906 = vpop.permute.xlu0 %905
      %907 = vrot.lane.b32.xlu0 %v698, 96
      %v908 = vpop.permute.xlu0 %907
      %909 = vrot.lane.b32.xlu0 %v744, 96
      %v910 = vpop.permute.xlu0 %909
      %911 = vrot.lane.b32.xlu0 %v701, 96
      %v912 = vpop.permute.xlu0 %911
      %913 = vrot.lane.b32.xlu0 %v745, 96
      %v914 = vpop.permute.xlu0 %913
      %915 = vrot.lane.b32.xlu0 %v704, 96
      %v916 = vpop.permute.xlu0 %915
      %917 = vrot.lane.b32.xlu0 %v746, 96
      %v918 = vpop.permute.xlu0 %917
      %919 = vrot.lane.b32.xlu0 %v707, 96
      %v920 = vpop.permute.xlu0 %919
      %921 = vrot.lane.b32.xlu0 %v747, 96
      %v922 = vpop.permute.xlu0 %921
      %923 = vrot.lane.b32.xlu0 %v710, 96
      %v924 = vpop.permute.xlu0 %923
      %925 = vrot.lane.b32.xlu0 %v748, 96
      %v926 = vpop.permute.xlu0 %925
      %927 = vrot.lane.b32.xlu0 %v713, 96
      %v928 = vpop.permute.xlu0 %927
      %929 = vrot.lane.b32.xlu0 %v749, 96
      %v930 = vpop.permute.xlu0 %929
      %931 = vrot.lane.b32.xlu0 %v716, 96
      %v932 = vpop.permute.xlu0 %931
      %933 = vrot.lane.b32.xlu0 %v750, 96
      %v934 = vpop.permute.xlu0 %933
      %vm969 = vcmask 392192
      %v970 = vsel %vm969, %v649, %v752
      %v971 = vsel %vm969, %v566, %v752
      %v972 = vsel %vm969, %v650, %v754
      %v973 = vsel %vm969, %v569, %v756
      %v974 = vsel %vm969, %v651, %v758
      %v975 = vsel %vm969, %v572, %v760
      %v976 = vsel %vm969, %v652, %v762
      %v977 = vsel %vm969, %v575, %v764
      %v978 = vsel %vm969, %v653, %v766
      %v979 = vsel %vm969, %v578, %v768
      %v980 = vsel %vm969, %v654, %v770
      %v981 = vsel %vm969, %v581, %v772
      %v982 = vsel %vm969, %v655, %v774
      %v983 = vsel %vm969, %v584, %v776
      %v984 = vsel %vm969, %v656, %v778
      %v985 = vsel %vm969, %v587, %v780
      %v986 = vsel %vm969, %v657, %v782
      %v987 = vsel %vm969, %v590, %v784
      %v988 = vsel %vm969, %v658, %v786
      %v989 = vsel %vm969, %v593, %v788
      %v990 = vsel %vm969, %v659, %v790
      %v991 = vsel %vm969, %v596, %v792
      %v992 = vsel %vm969, %v660, %v794
      %v993 = vsel %vm969, %v599, %v796
      %v994 = vsel %vm969, %v661, %v798
      %v995 = vsel %vm969, %v602, %v800
      %v996 = vsel %vm969, %v662, %v802
      %v997 = vsel %vm969, %v605, %v804
      %v998 = vsel %vm969, %v663, %v806
      %v999 = vsel %vm969, %v608, %v808
      %v1000 = vsel %vm969, %v664, %v810
      %v1001 = vsel %vm969, %v611, %v812
      %v1002 = vsel %vm969, %v665, %v814
      %v1003 = vsel %vm969, %v614, %v816
      %vm1004 = vcmask 785408
      %v1005 = vsel %vm1004, %v970, %v868
      %v1006 = vsel %vm1004, %v971, %v870
      %v1007 = vsel %vm1004, %v972, %v872
      %v1008 = vsel %vm1004, %v973, %v874
      %v1009 = vsel %vm1004, %v974, %v876
      %v1010 = vsel %vm1004, %v975, %v878
      %v1011 = vsel %vm1004, %v976, %v880
      %v1012 = vsel %vm1004, %v977, %v882
      %v1013 = vsel %vm1004, %v978, %v884
      %v1014 = vsel %vm1004, %v979, %v886
      %v1015 = vsel %vm1004, %v980, %v888
      %v1016 = vsel %vm1004, %v981, %v890
      %v1017 = vsel %vm1004, %v982, %v892
      %v1018 = vsel %vm1004, %v983, %v894
      %v1019 = vsel %vm1004, %v984, %v896
      %v1020 = vsel %vm1004, %v985, %v898
      %v1021 = vsel %vm1004, %v986, %v900
      %v1022 = vsel %vm1004, %v987, %v902
      %v1023 = vsel %vm1004, %v988, %v904
      %v1024 = vsel %vm1004, %v989, %v906
      %v1025 = vsel %vm1004, %v990, %v908
      %v1026 = vsel %vm1004, %v991, %v910
      %v1027 = vsel %vm1004, %v992, %v912
      %v1028 = vsel %vm1004, %v993, %v914
      %v1029 = vsel %vm1004, %v994, %v916
      %v1030 = vsel %vm1004, %v995, %v918
      %v1031 = vsel %vm1004, %v996, %v920
      %v1032 = vsel %vm1004, %v997, %v922
      %v1033 = vsel %vm1004, %v998, %v924
      %v1034 = vsel %vm1004, %v999, %v926
      %v1035 = vsel %vm1004, %v1000, %v928
      %v1036 = vsel %vm1004, %v1001, %v930
      %v1037 = vsel %vm1004, %v1002, %v932
      %v1038 = vsel %vm1004, %v1003, %v934
      %v1039 = vpack.c.bf16 %v1006, %v1005
      %v1040 = vpack.c.bf16 %v870, %v868
      %v1041 = vpack.c.bf16 %v1008, %v1007
      %v1042 = vpack.c.bf16 %v874, %v872
      %v1043 = vpack.c.bf16 %v1010, %v1009
      %v1044 = vpack.c.bf16 %v878, %v876
      %v1045 = vpack.c.bf16 %v1012, %v1011
      %v1046 = vpack.c.bf16 %v882, %v880
      %v1047 = vpack.c.bf16 %v1014, %v1013
      %v1048 = vpack.c.bf16 %v886, %v884
      %v1049 = vpack.c.bf16 %v1016, %v1015
      %v1050 = vpack.c.bf16 %v890, %v888
      %v1051 = vpack.c.bf16 %v1018, %v1017
      %v1052 = vpack.c.bf16 %v894, %v892
      %v1053 = vpack.c.bf16 %v1020, %v1019
      %v1054 = vpack.c.bf16 %v898, %v896
      %v1055 = vpack.c.bf16 %v1022, %v1021
      %v1056 = vpack.c.bf16 %v902, %v900
      %v1057 = vpack.c.bf16 %v1024, %v1023
      %v1058 = vpack.c.bf16 %v906, %v904
      %v1059 = vpack.c.bf16 %v1026, %v1025
      %v1060 = vpack.c.bf16 %v910, %v908
      %v1061 = vpack.c.bf16 %v1028, %v1027
      %v1062 = vpack.c.bf16 %v914, %v912
      %v1063 = vpack.c.bf16 %v1030, %v1029
      %v1064 = vpack.c.bf16 %v918, %v916
      %v1065 = vpack.c.bf16 %v1032, %v1031
      %v1066 = vpack.c.bf16 %v922, %v920
      %v1067 = vpack.c.bf16 %v1034, %v1033
      %v1068 = vpack.c.bf16 %v926, %v924
      %v1069 = vpack.c.bf16 %v1036, %v1035
      %v1070 = vpack.c.bf16 %v930, %v928
      %v1071 = vpack.c.bf16 %v1038, %v1037
      %v1072 = vpack.c.bf16 %v934, %v932
      %v1107 = vunpack.c.l.b16 %v1039
      %v1108 = vunpack.c.l.b16 %v1040
      %v1109 = vunpack.c.h.b16 %v1039
      %v1110 = vunpack.c.h.b16 %v1040
      %v1111 = vunpack.c.l.b16 %v1041
      %v1112 = vunpack.c.l.b16 %v1042
      %v1113 = vunpack.c.h.b16 %v1041
      %v1114 = vunpack.c.h.b16 %v1042
      %v1115 = vunpack.c.l.b16 %v1043
      %v1116 = vunpack.c.l.b16 %v1044
      %v1117 = vunpack.c.h.b16 %v1043
      %v1118 = vunpack.c.h.b16 %v1044
      %v1119 = vunpack.c.l.b16 %v1045
      %v1120 = vunpack.c.l.b16 %v1046
      %v1121 = vunpack.c.h.b16 %v1045
      %v1122 = vunpack.c.h.b16 %v1046
      %v1123 = vunpack.c.l.b16 %v1047
      %v1124 = vunpack.c.l.b16 %v1048
      %v1125 = vunpack.c.h.b16 %v1047
      %v1126 = vunpack.c.h.b16 %v1048
      %v1127 = vunpack.c.l.b16 %v1049
      %v1128 = vunpack.c.l.b16 %v1050
      %v1129 = vunpack.c.h.b16 %v1049
      %v1130 = vunpack.c.h.b16 %v1050
      %v1131 = vunpack.c.l.b16 %v1051
      %v1132 = vunpack.c.l.b16 %v1052
      %v1133 = vunpack.c.h.b16 %v1051
      %v1134 = vunpack.c.h.b16 %v1052
      %v1135 = vunpack.c.l.b16 %v1053
      %v1136 = vunpack.c.l.b16 %v1054
      %v1137 = vunpack.c.h.b16 %v1053
      %v1138 = vunpack.c.h.b16 %v1054
      %v1139 = vunpack.c.l.b16 %v1055
      %v1140 = vunpack.c.l.b16 %v1056
      %v1141 = vunpack.c.h.b16 %v1055
      %v1142 = vunpack.c.h.b16 %v1056
      %v1143 = vunpack.c.l.b16 %v1057
      %v1144 = vunpack.c.l.b16 %v1058
      %v1145 = vunpack.c.h.b16 %v1057
      %v1146 = vunpack.c.h.b16 %v1058
      %v1147 = vunpack.c.l.b16 %v1059
      %v1148 = vunpack.c.l.b16 %v1060
      %v1149 = vunpack.c.h.b16 %v1059
      %v1150 = vunpack.c.h.b16 %v1060
      %v1151 = vunpack.c.l.b16 %v1061
      %v1152 = vunpack.c.l.b16 %v1062
      %v1153 = vunpack.c.h.b16 %v1061
      %v1154 = vunpack.c.h.b16 %v1062
      %v1155 = vunpack.c.l.b16 %v1063
      %v1156 = vunpack.c.l.b16 %v1064
      %v1157 = vunpack.c.h.b16 %v1063
      %v1158 = vunpack.c.h.b16 %v1064
      %v1159 = vunpack.c.l.b16 %v1065
      %v1160 = vunpack.c.l.b16 %v1066
      %v1161 = vunpack.c.h.b16 %v1065
      %v1162 = vunpack.c.h.b16 %v1066
      %v1163 = vunpack.c.l.b16 %v1067
      %v1164 = vunpack.c.l.b16 %v1068
      %v1165 = vunpack.c.h.b16 %v1067
      %v1166 = vunpack.c.h.b16 %v1068
      %v1167 = vunpack.c.l.b16 %v1069
      %v1168 = vunpack.c.l.b16 %v1070
      %v1169 = vunpack.c.h.b16 %v1069
      %v1170 = vunpack.c.h.b16 %v1070
      %v1171 = vunpack.c.l.b16 %v1071
      %v1172 = vunpack.c.l.b16 %v1072
      %v1173 = vunpack.c.h.b16 %v1071
      %v1174 = vunpack.c.h.b16 %v1072
      %v1175 = vpack.c.b16 %v1108, %v1107
      %v1176 = vpack.c.b16 %v1110, %v1109
      %v1177 = vpack.c.b16 %v1112, %v1111
      %v1178 = vpack.c.b16 %v1114, %v1113
      %v1179 = vpack.c.b16 %v1116, %v1115
      %v1180 = vpack.c.b16 %v1118, %v1117
      %v1181 = vpack.c.b16 %v1120, %v1119
      %v1182 = vpack.c.b16 %v1122, %v1121
      %v1183 = vpack.c.b16 %v1124, %v1123
      %v1184 = vpack.c.b16 %v1126, %v1125
      %v1185 = vpack.c.b16 %v1128, %v1127
      %v1186 = vpack.c.b16 %v1130, %v1129
      %v1187 = vpack.c.b16 %v1132, %v1131
      %v1188 = vpack.c.b16 %v1134, %v1133
      %v1189 = vpack.c.b16 %v1136, %v1135
      %v1190 = vpack.c.b16 %v1138, %v1137
      %v1191 = vpack.c.b16 %v1140, %v1139
      %v1192 = vpack.c.b16 %v1142, %v1141
      %v1193 = vpack.c.b16 %v1144, %v1143
      %v1194 = vpack.c.b16 %v1146, %v1145
      %v1195 = vpack.c.b16 %v1148, %v1147
      %v1196 = vpack.c.b16 %v1150, %v1149
      %v1197 = vpack.c.b16 %v1152, %v1151
      %v1198 = vpack.c.b16 %v1154, %v1153
      %v1199 = vpack.c.b16 %v1156, %v1155
      %v1200 = vpack.c.b16 %v1158, %v1157
      %v1201 = vpack.c.b16 %v1160, %v1159
      %v1202 = vpack.c.b16 %v1162, %v1161
      %v1203 = vpack.c.b16 %v1164, %v1163
      %v1204 = vpack.c.b16 %v1166, %v1165
      %v1205 = vpack.c.b16 %v1168, %v1167
      %v1206 = vpack.c.b16 %v1170, %v1169
      %v1207 = vpack.c.b16 %v1172, %v1171
      %v1208 = vpack.c.b16 %v1174, %v1173
      %vm1243 = vcmask 1043456
      %vm1244 = vcmask 130052
      %vm1245 = vmor %vm1244, %vm1243
      %1246 = vst.msk [vmem:[#allocation2] sm:$0xff] %vm1245, %v1175
      %1247 = vst.msk [vmem:[#allocation2 + $0x8] sm:$0xff] %vm1245, %v1176
      %1248 = vst.msk [vmem:[#allocation2 + $0x10] sm:$0xff] %vm1245, %v1177
      %1249 = vst.msk [vmem:[#allocation2 + $0x18] sm:$0xff] %vm1245, %v1178
      %1250 = vst.msk [vmem:[#allocation2 + $0x20] sm:$0xff] %vm1245, %v1179
      %1251 = vst.msk [vmem:[#allocation2 + $0x28] sm:$0xff] %vm1245, %v1180
      %1252 = vst.msk [vmem:[#allocation2 + $0x30] sm:$0xff] %vm1245, %v1181
      %1253 = vst.msk [vmem:[#allocation2 + $0x38] sm:$0xff] %vm1245, %v1182
      %1254 = vst.msk [vmem:[#allocation2 + $0x40] sm:$0xff] %vm1245, %v1183
      %1255 = vst.msk [vmem:[#allocation2 + $0x48] sm:$0xff] %vm1245, %v1184
      %1256 = vst.msk [vmem:[#allocation2 + $0x50] sm:$0xff] %vm1245, %v1185
      %1257 = vst.msk [vmem:[#allocation2 + $0x58] sm:$0xff] %vm1245, %v1186
      %1258 = vst.msk [vmem:[#allocation2 + $0x60] sm:$0xff] %vm1245, %v1187
      %1259 = vst.msk [vmem:[#allocation2 + $0x68] sm:$0xff] %vm1245, %v1188
      %1260 = vst.msk [vmem:[#allocation2 + $0x70] sm:$0xff] %vm1245, %v1189
      %1261 = vst.msk [vmem:[#allocation2 + $0x78] sm:$0xff] %vm1245, %v1190
      %1262 = vst.msk [vmem:[#allocation2 + $0x80] sm:$0xff] %vm1245, %v1191
      %1263 = vst.msk [vmem:[#allocation2 + $0x88] sm:$0xff] %vm1245, %v1192
      %1264 = vst.msk [vmem:[#allocation2 + $0x90] sm:$0xff] %vm1245, %v1193
      %1265 = vst.msk [vmem:[#allocation2 + $0x98] sm:$0xff] %vm1245, %v1194
      %1266 = vst.msk [vmem:[#allocation2 + $0xa0] sm:$0xff] %vm1245, %v1195
      %1267 = vst.msk [vmem:[#allocation2 + $0xa8] sm:$0xff] %vm1245, %v1196
      %1268 = vst.msk [vmem:[#allocation2 + $0xb0] sm:$0xff] %vm1245, %v1197
      %1269 = vst.msk [vmem:[#allocation2 + $0xb8] sm:$0xff] %vm1245, %v1198
      %1270 = vst.msk [vmem:[#allocation2 + $0xc0] sm:$0xff] %vm1245, %v1199
      %1271 = vst.msk [vmem:[#allocation2 + $0xc8] sm:$0xff] %vm1245, %v1200
      %1272 = vst.msk [vmem:[#allocation2 + $0xd0] sm:$0xff] %vm1245, %v1201
      %1273 = vst.msk [vmem:[#allocation2 + $0xd8] sm:$0xff] %vm1245, %v1202
      %1274 = vst.msk [vmem:[#allocation2 + $0xe0] sm:$0xff] %vm1245, %v1203
      %1275 = vst.msk [vmem:[#allocation2 + $0xe8] sm:$0xff] %vm1245, %v1204
      %1276 = vst.msk [vmem:[#allocation2 + $0xf0] sm:$0xff] %vm1245, %v1205
      %1277 = vst.msk [vmem:[#allocation2 + $0xf8] sm:$0xff] %vm1245, %v1206
      %1278 = vst.msk [vmem:[#allocation2 + $0x100] sm:$0xff] %vm1245, %v1207
      %1279 = vst.msk [vmem:[#allocation2 + $0x108] sm:$0xff] %vm1245, %v1208
      %1280 = vst.msk [vmem:[#allocation2 + $0x110] sm:$0xff] %vm1245, %v1175
      %1281 = vst.msk [vmem:[#allocation2 + $0x118] sm:$0xff] %vm1245, %v1176
      %v1282 = vld [vmem:[#allocation2] sm:$0xff]
      %v1283 = vld [vmem:[#allocation2 + $0x8] sm:$0xff]
      %v1284 = vld [vmem:[#allocation2 + $0x10] sm:$0xff]
      %v1285 = vld [vmem:[#allocation2 + $0x18] sm:$0xff]
      %v1286 = vld [vmem:[#allocation2 + $0x20] sm:$0xff]
      %v1287 = vld [vmem:[#allocation2 + $0x28] sm:$0xff]
      %v1288 = vld [vmem:[#allocation2 + $0x30] sm:$0xff]
      %v1289 = vld [vmem:[#allocation2 + $0x38] sm:$0xff]
      %v1290 = vld [vmem:[#allocation2 + $0x40] sm:$0xff]
      %v1291 = vld [vmem:[#allocation2 + $0x48] sm:$0xff]
      %v1292 = vld [vmem:[#allocation2 + $0x50] sm:$0xff]
      %v1293 = vld [vmem:[#allocation2 + $0x58] sm:$0xff]
      %v1294 = vld [vmem:[#allocation2 + $0x60] sm:$0xff]
      %v1295 = vld [vmem:[#allocation2 + $0x68] sm:$0xff]
      %v1296 = vld [vmem:[#allocation2 + $0x70] sm:$0xff]
      %v1297 = vld [vmem:[#allocation2 + $0x78] sm:$0xff]
      %v1298 = vld [vmem:[%s2] sm:$0xf]
      %v1299 = vld [vmem:[%s2 + $0x4] sm:$0xf]
      %v1300 = vld [vmem:[%s2 + $0x8] sm:$0xf]
      %v1301 = vld [vmem:[%s2 + $0xc] sm:$0xf]
      %v1302 = vld [vmem:[%s2 + $0x10] sm:$0xf]
      %v1303 = vld [vmem:[%s2 + $0x14] sm:$0xf]
      %v1304 = vld [vmem:[%s2 + $0x18] sm:$0xf]
      %v1305 = vld [vmem:[%s2 + $0x1c] sm:$0xf]
      %v1306 = vld [vmem:[%s2 + $0x20] sm:$0xf]
      %v1307 = vld [vmem:[%s2 + $0x24] sm:$0xf]
      %v1308 = vld [vmem:[%s2 + $0x28] sm:$0xf]
      %v1309 = vld [vmem:[%s2 + $0x2c] sm:$0xf]
      %v1310 = vld [vmem:[%s2 + $0x30] sm:$0xf]
      %v1311 = vld [vmem:[%s2 + $0x34] sm:$0xf]
      %v1312 = vld [vmem:[%s2 + $0x38] sm:$0xf]
      %v1313 = vld [vmem:[%s2 + $0x3c] sm:$0xf]
      %v1314 = vld [vmem:[%s2 + $0x40] sm:$0xf]
      %v1315 = vld [vmem:[%s2 + $0x44] sm:$0xf]
      %v1316 = vld [vmem:[#allocation2 + $0x80] sm:$0xff]
      %v1317 = vld [vmem:[#allocation2 + $0x88] sm:$0xff]
      %s1318 = scalar_lea.vmem %s2, 72
      %v1319 = vld [vmem:[%s1318] sm:$0xf]
      %v1320 = vld [vmem:[%s1318 + $0x4] sm:$0xf]
      %v1321 = vld [vmem:[%s1318 + $0x8] sm:$0xf]
      %v1322 = vld [vmem:[%s1318 + $0xc] sm:$0xf]
      %v1323 = vld [vmem:[%s1318 + $0x10] sm:$0xf]
      %v1324 = vld [vmem:[%s1318 + $0x14] sm:$0xf]
      %v1325 = vld [vmem:[%s1318 + $0x18] sm:$0xf]
      %v1326 = vld [vmem:[%s1318 + $0x1c] sm:$0xf]
      %v1327 = vld [vmem:[%s1318 + $0x20] sm:$0xf]
      %v1328 = vld [vmem:[%s1318 + $0x24] sm:$0xf]
      %v1329 = vld [vmem:[%s1318 + $0x28] sm:$0xf]
      %v1330 = vld [vmem:[%s1318 + $0x2c] sm:$0xf]
      %v1331 = vld [vmem:[%s1318 + $0x30] sm:$0xf]
      %v1332 = vld [vmem:[%s1318 + $0x34] sm:$0xf]
      %v1333 = vld [vmem:[%s1318 + $0x38] sm:$0xf]
      %v1334 = vld [vmem:[%s1318 + $0x3c] sm:$0xf]
      %v1335 = vld [vmem:[%s1318 + $0x40] sm:$0xf]
      %v1336 = vld [vmem:[%s1318 + $0x44] sm:$0xf]
      %v1353 = vunpack.c.l.b16 %v1284
      %v1354 = vunpack.c.h.b16 %v1284
      %v1355 = vunpack.c.l.b16 %v1285
      %v1356 = vunpack.c.h.b16 %v1285
      %v1357 = vunpack.c.l.b16 %v1286
      %v1358 = vunpack.c.h.b16 %v1286
      %v1359 = vunpack.c.l.b16 %v1287
      %v1360 = vunpack.c.h.b16 %v1287
      %v1361 = vunpack.c.l.b16 %v1288
      %v1362 = vunpack.c.h.b16 %v1288
      %v1363 = vunpack.c.l.b16 %v1289
      %v1364 = vunpack.c.h.b16 %v1289
      %v1365 = vunpack.c.l.b16 %v1290
      %v1366 = vunpack.c.h.b16 %v1290
      %v1367 = vunpack.c.l.b16 %v1291
      %v1368 = vunpack.c.h.b16 %v1291
      %v1369 = vunpack.c.l.b16 %v1292
      %v1370 = vunpack.c.h.b16 %v1292
      %v1371 = vunpack.c.l.b16 %v1293
      %v1372 = vunpack.c.h.b16 %v1293
      %v1373 = vunpack.c.l.b16 %v1294
      %v1374 = vunpack.c.h.b16 %v1294
      %v1375 = vunpack.c.l.b16 %v1295
      %v1376 = vunpack.c.h.b16 %v1295
      %v1377 = vunpack.c.l.b16 %v1296
      %v1378 = vunpack.c.h.b16 %v1296
      %v1379 = vunpack.c.l.b16 %v1297
      %v1380 = vunpack.c.h.b16 %v1297
      %v1381 = vunpack.c.l.b16 %v1316
      %v1382 = vunpack.c.h.b16 %v1316
      %v1383 = vunpack.c.l.b16 %v1317
      %v1384 = vunpack.c.h.b16 %v1317
      %v1385 = vpack.c.b16 %v1355, %v1353
      %v1386 = vpack.c.b16 %v1356, %v1354
      %v1387 = vpack.c.b16 %v1359, %v1357
      %v1388 = vpack.c.b16 %v1360, %v1358
      %v1389 = vpack.c.b16 %v1363, %v1361
      %v1390 = vpack.c.b16 %v1364, %v1362
      %v1391 = vpack.c.b16 %v1367, %v1365
      %v1392 = vpack.c.b16 %v1368, %v1366
      %v1393 = vpack.c.b16 %v1371, %v1369
      %v1394 = vpack.c.b16 %v1372, %v1370
      %v1395 = vpack.c.b16 %v1375, %v1373
      %v1396 = vpack.c.b16 %v1376, %v1374
      %v1397 = vpack.c.b16 %v1379, %v1377
      %v1398 = vpack.c.b16 %v1380, %v1378
      %v1399 = vpack.c.b16 %v1383, %v1381
      %v1400 = vpack.c.b16 %v1384, %v1382
      %v1427 = vunpack.c.l.b16 %v1319
      %v1428 = vunpack.c.l.b16 %v1320
      %v1429 = vunpack.c.l.b16 %v1321
      %v1430 = vunpack.c.l.b16 %v1322
      %v1431 = vunpack.c.l.b16 %v1323
      %v1432 = vunpack.c.l.b16 %v1324
      %v1433 = vunpack.c.l.b16 %v1325
      %v1434 = vunpack.c.l.b16 %v1326
      %v1435 = vunpack.c.l.b16 %v1327
      %v1436 = vunpack.c.l.b16 %v1328
      %v1437 = vunpack.c.l.b16 %v1329
      %v1438 = vunpack.c.l.b16 %v1330
      %v1439 = vunpack.c.l.b16 %v1331
      %v1440 = vunpack.c.l.b16 %v1332
      %v1441 = vunpack.c.l.b16 %v1333
      %v1442 = vunpack.c.l.b16 %v1334
      %v1443 = vunpack.c.l.b16 %v1335
      %v1444 = vunpack.c.l.b16 %v1336
      %v1445 = vpack.c.b16 %v1428, %v1427
      %v1446 = vpack.c.b16 %v1430, %v1429
      %v1447 = vpack.c.b16 %v1432, %v1431
      %v1448 = vpack.c.b16 %v1434, %v1433
      %v1449 = vpack.c.b16 %v1436, %v1435
      %v1450 = vpack.c.b16 %v1438, %v1437
      %v1451 = vpack.c.b16 %v1440, %v1439
      %v1452 = vpack.c.b16 %v1442, %v1441
      %v1453 = vpack.c.b16 %v1444, %v1443
      %vm1463 = vcmask 130048
      %v1465 = vsel %vm1463, %v1386, 0
      %v1468 = vsel %vm1463, %v1388, 0
      %v1471 = vsel %vm1463, %v1390, 0
      %v1474 = vsel %vm1463, %v1392, 0
      %v1477 = vsel %vm1463, %v1394, 0
      %v1480 = vsel %vm1463, %v1396, 0
      %v1483 = vsel %vm1463, %v1398, 0
      %v1486 = vsel %vm1463, %v1400, 0
      %1488 = vmatprep.subr.bf16.mxu0 0
      %1489 = vmatpush1.bf16.msra.mxu0 %v1452
      %1490 = vmatprep.subr.bf16.mxu0 0
      %1491 = vmatpush1.bf16.msra.mxu0 %v1451
      %1492 = vmatprep.subr.bf16.mxu0 0
      %1493 = vmatpush1.bf16.msra.mxu0 %v1450
      %1494 = vmatprep.subr.bf16.mxu0 0
      %1495 = vmatpush1.bf16.msra.mxu0 %v1449
      %1496 = vmatprep.subr.bf16.mxu0 0
      %1497 = vmatpush1.bf16.msra.mxu0 %v1448
      %1498 = vmatprep.subr.bf16.mxu0 0
      %1499 = vmatpush1.bf16.msra.mxu0 %v1447
      %1500 = vmatprep.subr.bf16.mxu0 0
      %1501 = vmatpush1.bf16.msra.mxu0 %v1446
      %1502 = vmatprep.subr.bf16.mxu0 0
      %1503 = vmatpush1.bf16.msra.mxu0 %v1445
      %1504 = vmatprep.subr.bf16.mxu0 0
      %1505 = vmatpush2.bf16.msra.mxu0 0
      %1506 = vmatprep.subr.bf16.mxu0 0
      %1507 = vmatpush2.bf16.msra.mxu0 0
      %1508 = vmatprep.subr.bf16.mxu0 0
      %1509 = vmatpush2.bf16.msra.mxu0 0
      %1510 = vmatprep.subr.bf16.mxu0 0
      %1511 = vmatpush2.bf16.msra.mxu0 0
      %1512 = vmatprep.subr.bf16.mxu0 0
      %1513 = vmatpush2.bf16.msra.mxu0 0
      %1514 = vmatprep.subr.bf16.mxu0 0
      %1515 = vmatpush2.bf16.msra.mxu0 0
      %1516 = vmatprep.subr.bf16.mxu0 0
      %1517 = vmatpush2.bf16.msra.mxu0 0
      %1518 = vmatprep.subr.bf16.mxu0 0
      %1519 = vmatpush2.bf16.msra.mxu0 %v1453
      %1520 = vmatprep.mubr.bf16.mxu0 %v1465
      %1521 = vmatmul.mubr.bf16.gmra.mxu0 %v1385
      %v1522 = vpop.f32.mrf.mxu0
      %v1523 = vadd.f32 0.0, %v1522
      %v1524 = vpop.f32.mrf.mxu0
      %v1525 = vpop.f32.mrf.mxu0
      %v1526 = vadd.f32 0.0, %v1525
      %v1527 = vpop.f32.mrf.mxu0
      %1528 = vmatprep.mubr.bf16.mxu0 %v1468
      %1529 = vmatmul.mubr.bf16.gmra.mxu0 %v1387
      %v1530 = vpop.f32.mrf.mxu0
      %v1531 = vadd.f32 0.0, %v1530
      %v1532 = vpop.f32.mrf.mxu0
      %v1533 = vpop.f32.mrf.mxu0
      %v1534 = vadd.f32 0.0, %v1533
      %v1535 = vpop.f32.mrf.mxu0
      %1536 = vmatprep.mubr.bf16.mxu0 %v1471
      %1537 = vmatmul.mubr.bf16.gmra.mxu0 %v1389
      %v1538 = vpop.f32.mrf.mxu0
      %v1539 = vadd.f32 0.0, %v1538
      %v1540 = vpop.f32.mrf.mxu0
      %v1541 = vpop.f32.mrf.mxu0
      %v1542 = vadd.f32 0.0, %v1541
      %v1543 = vpop.f32.mrf.mxu0
      %1544 = vmatprep.mubr.bf16.mxu0 %v1474
      %1545 = vmatmul.mubr.bf16.gmra.mxu0 %v1391
      %v1546 = vpop.f32.mrf.mxu0
      %v1547 = vadd.f32 0.0, %v1546
      %v1548 = vpop.f32.mrf.mxu0
      %v1549 = vpop.f32.mrf.mxu0
      %v1550 = vadd.f32 0.0, %v1549
      %v1551 = vpop.f32.mrf.mxu0
      %1552 = vmatprep.mubr.bf16.mxu0 %v1477
      %1553 = vmatmul.mubr.bf16.gmra.mxu0 %v1393
      %v1554 = vpop.f32.mrf.mxu0
      %v1555 = vadd.f32 0.0, %v1554
      %v1556 = vpop.f32.mrf.mxu0
      %v1557 = vpop.f32.mrf.mxu0
      %v1558 = vadd.f32 0.0, %v1557
      %v1559 = vpop.f32.mrf.mxu0
      %1560 = vmatprep.mubr.bf16.mxu0 %v1480
      %1561 = vmatmul.mubr.bf16.gmra.mxu0 %v1395
      %v1562 = vpop.f32.mrf.mxu0
      %v1563 = vadd.f32 0.0, %v1562
      %v1564 = vpop.f32.mrf.mxu0
      %v1565 = vpop.f32.mrf.mxu0
      %v1566 = vadd.f32 0.0, %v1565
      %v1567 = vpop.f32.mrf.mxu0
      %1568 = vmatprep.mubr.bf16.mxu0 %v1483
      %1569 = vmatmul.mubr.bf16.gmra.mxu0 %v1397
      %v1570 = vpop.f32.mrf.mxu0
      %v1571 = vadd.f32 0.0, %v1570
      %v1572 = vpop.f32.mrf.mxu0
      %v1573 = vpop.f32.mrf.mxu0
      %v1574 = vadd.f32 0.0, %v1573
      %v1575 = vpop.f32.mrf.mxu0
      %1576 = vmatprep.mubr.bf16.mxu0 %v1486
      %1577 = vmatmul.mubr.bf16.gmra.mxu0 %v1399
      %v1578 = vpop.f32.mrf.mxu0
      %v1579 = vadd.f32 0.0, %v1578
      %v1580 = vpop.f32.mrf.mxu0
      %v1581 = vpop.f32.mrf.mxu0
      %v1582 = vadd.f32 0.0, %v1581
      %v1583 = vpop.f32.mrf.mxu0
      %1584 = vdwg.mxu0
      %v1587 = vunpack.c.l.b16 %v1282
      %v1588 = vunpack.c.h.b16 %v1282
      %v1589 = vunpack.c.l.b16 %v1283
      %v1590 = vunpack.c.h.b16 %v1283
      %v1591 = vpack.c.b16 %v1589, %v1587
      %v1592 = vpack.c.b16 %v1590, %v1588
      %v1612 = vunpack.c.l.b16 %v1298
      %v1613 = vunpack.c.l.b16 %v1299
      %v1614 = vunpack.c.l.b16 %v1300
      %v1615 = vunpack.c.l.b16 %v1301
      %v1616 = vunpack.c.l.b16 %v1302
      %v1617 = vunpack.c.l.b16 %v1303
      %v1618 = vunpack.c.l.b16 %v1304
      %v1619 = vunpack.c.l.b16 %v1305
      %v1620 = vunpack.c.l.b16 %v1306
      %v1621 = vunpack.c.l.b16 %v1307
      %v1622 = vunpack.c.l.b16 %v1308
      %v1623 = vunpack.c.l.b16 %v1309
      %v1624 = vunpack.c.l.b16 %v1310
      %v1625 = vunpack.c.l.b16 %v1311
      %v1626 = vunpack.c.l.b16 %v1312
      %v1627 = vunpack.c.l.b16 %v1313
      %v1628 = vunpack.c.l.b16 %v1314
      %v1629 = vunpack.c.l.b16 %v1315
      %v1630 = vpack.c.b16 %v1613, %v1612
      %v1631 = vpack.c.b16 %v1615, %v1614
      %v1632 = vpack.c.b16 %v1617, %v1616
      %v1633 = vpack.c.b16 %v1619, %v1618
      %v1634 = vpack.c.b16 %v1621, %v1620
      %v1635 = vpack.c.b16 %v1623, %v1622
      %v1636 = vpack.c.b16 %v1625, %v1624
      %v1637 = vpack.c.b16 %v1627, %v1626
      %v1638 = vpack.c.b16 %v1629, %v1628
      %v1649 = vsel %vm1463, %v1592, 0
      %1651 = vmatprep.subr.bf16.mxu0 0
      %1652 = vmatpush1.bf16.msra.mxu0 %v1637
      %1653 = vmatprep.subr.bf16.mxu0 0
      %1654 = vmatpush1.bf16.msra.mxu0 %v1636
      %1655 = vmatprep.subr.bf16.mxu0 0
      %1656 = vmatpush1.bf16.msra.mxu0 %v1635
      %1657 = vmatprep.subr.bf16.mxu0 0
      %1658 = vmatpush1.bf16.msra.mxu0 %v1634
      %1659 = vmatprep.subr.bf16.mxu0 0
      %1660 = vmatpush1.bf16.msra.mxu0 %v1633
      %1661 = vmatprep.subr.bf16.mxu0 0
      %1662 = vmatpush1.bf16.msra.mxu0 %v1632
      %1663 = vmatprep.subr.bf16.mxu0 0
      %1664 = vmatpush1.bf16.msra.mxu0 %v1631
      %1665 = vmatprep.subr.bf16.mxu0 0
      %1666 = vmatpush1.bf16.msra.mxu0 %v1630
      %1667 = vmatprep.subr.bf16.mxu0 0
      %1668 = vmatpush2.bf16.msra.mxu0 0
      %1669 = vmatprep.subr.bf16.mxu0 0
      %1670 = vmatpush2.bf16.msra.mxu0 0
      %1671 = vmatprep.subr.bf16.mxu0 0
      %1672 = vmatpush2.bf16.msra.mxu0 0
      %1673 = vmatprep.subr.bf16.mxu0 0
      %1674 = vmatpush2.bf16.msra.mxu0 0
      %1675 = vmatprep.subr.bf16.mxu0 0
      %1676 = vmatpush2.bf16.msra.mxu0 0
      %1677 = vmatprep.subr.bf16.mxu0 0
      %1678 = vmatpush2.bf16.msra.mxu0 0
      %1679 = vmatprep.subr.bf16.mxu0 0
      %1680 = vmatpush2.bf16.msra.mxu0 0
      %1681 = vmatprep.subr.bf16.mxu0 0
      %1682 = vmatpush2.bf16.msra.mxu0 %v1638
      %1683 = vmatprep.mubr.bf16.mxu0 %v1649
      %1684 = vmatmul.mubr.bf16.gmra.mxu0 %v1591
      %v1685 = vpop.f32.mrf.mxu0
      %v1686 = vadd.f32 %v1523, %v1685
      %v1687 = vpop.f32.mrf.mxu0
      %v1688 = vpop.f32.mrf.mxu0
      %v1689 = vadd.f32 %v1526, %v1688
      %v1690 = vpop.f32.mrf.mxu0
      %1691 = vmatprep.mubr.bf16.mxu0 %v1465
      %1692 = vmatmul.mubr.bf16.gmra.mxu0 %v1385
      %v1693 = vpop.f32.mrf.mxu0
      %v1694 = vadd.f32 %v1531, %v1693
      %v1695 = vpop.f32.mrf.mxu0
      %v1696 = vpop.f32.mrf.mxu0
      %v1697 = vadd.f32 %v1534, %v1696
      %v1698 = vpop.f32.mrf.mxu0
      %1699 = vmatprep.mubr.bf16.mxu0 %v1468
      %1700 = vmatmul.mubr.bf16.gmra.mxu0 %v1387
      %v1701 = vpop.f32.mrf.mxu0
      %v1702 = vadd.f32 %v1539, %v1701
      %v1703 = vpop.f32.mrf.mxu0
      %v1704 = vpop.f32.mrf.mxu0
      %v1705 = vadd.f32 %v1542, %v1704
      %v1706 = vpop.f32.mrf.mxu0
      %1707 = vmatprep.mubr.bf16.mxu0 %v1471
      %1708 = vmatmul.mubr.bf16.gmra.mxu0 %v1389
      %v1709 = vpop.f32.mrf.mxu0
      %v1710 = vadd.f32 %v1547, %v1709
      %v1711 = vpop.f32.mrf.mxu0
      %v1712 = vpop.f32.mrf.mxu0
      %v1713 = vadd.f32 %v1550, %v1712
      %v1714 = vpop.f32.mrf.mxu0
      %1715 = vmatprep.mubr.bf16.mxu0 %v1474
      %1716 = vmatmul.mubr.bf16.gmra.mxu0 %v1391
      %v1717 = vpop.f32.mrf.mxu0
      %v1718 = vadd.f32 %v1555, %v1717
      %v1719 = vpop.f32.mrf.mxu0
      %v1720 = vpop.f32.mrf.mxu0
      %v1721 = vadd.f32 %v1558, %v1720
      %v1722 = vpop.f32.mrf.mxu0
      %1723 = vmatprep.mubr.bf16.mxu0 %v1477
      %1724 = vmatmul.mubr.bf16.gmra.mxu0 %v1393
      %v1725 = vpop.f32.mrf.mxu0
      %v1726 = vadd.f32 %v1563, %v1725
      %v1727 = vpop.f32.mrf.mxu0
      %v1728 = vpop.f32.mrf.mxu0
      %v1729 = vadd.f32 %v1566, %v1728
      %v1730 = vpop.f32.mrf.mxu0
      %1731 = vmatprep.mubr.bf16.mxu0 %v1480
      %1732 = vmatmul.mubr.bf16.gmra.mxu0 %v1395
      %v1733 = vpop.f32.mrf.mxu0
      %v1734 = vadd.f32 %v1571, %v1733
      %v1735 = vpop.f32.mrf.mxu0
      %v1736 = vpop.f32.mrf.mxu0
      %v1737 = vadd.f32 %v1574, %v1736
      %v1738 = vpop.f32.mrf.mxu0
      %1739 = vmatprep.mubr.bf16.mxu0 %v1483
      %1740 = vmatmul.mubr.bf16.gmra.mxu0 %v1397
      %v1741 = vpop.f32.mrf.mxu0
      %v1742 = vadd.f32 %v1579, %v1741
      %v1743 = vpop.f32.mrf.mxu0
      %v1744 = vpop.f32.mrf.mxu0
      %v1745 = vadd.f32 %v1582, %v1744
      %v1746 = vpop.f32.mrf.mxu0
      %1747 = vdwg.mxu0
      %v1748 = vld [vmem:[#allocation2 + $0x20] sm:$0xff]
      %v1749 = vld [vmem:[#allocation2 + $0x28] sm:$0xff]
      %v1750 = vld [vmem:[#allocation2 + $0x30] sm:$0xff]
      %v1751 = vld [vmem:[#allocation2 + $0x38] sm:$0xff]
      %v1752 = vld [vmem:[#allocation2 + $0x40] sm:$0xff]
      %v1753 = vld [vmem:[#allocation2 + $0x48] sm:$0xff]
      %v1754 = vld [vmem:[#allocation2 + $0x50] sm:$0xff]
      %v1755 = vld [vmem:[#allocation2 + $0x58] sm:$0xff]
      %v1756 = vld [vmem:[#allocation2 + $0x60] sm:$0xff]
      %v1757 = vld [vmem:[#allocation2 + $0x68] sm:$0xff]
      %v1758 = vld [vmem:[#allocation2 + $0x70] sm:$0xff]
      %v1759 = vld [vmem:[#allocation2 + $0x78] sm:$0xff]
      %v1760 = vld [vmem:[#allocation2 + $0x80] sm:$0xff]
      %v1761 = vld [vmem:[#allocation2 + $0x88] sm:$0xff]
      %v1762 = vld [vmem:[#allocation2 + $0x90] sm:$0xff]
      %v1763 = vld [vmem:[#allocation2 + $0x98] sm:$0xff]
      %s1764 = scalar_lea.vmem %s2, 144
      %v1765 = vld [vmem:[%s1764] sm:$0xf]
      %v1766 = vld [vmem:[%s1764 + $0x4] sm:$0xf]
      %v1767 = vld [vmem:[%s1764 + $0x8] sm:$0xf]
      %v1768 = vld [vmem:[%s1764 + $0xc] sm:$0xf]
      %v1769 = vld [vmem:[%s1764 + $0x10] sm:$0xf]
      %v1770 = vld [vmem:[%s1764 + $0x14] sm:$0xf]
      %v1771 = vld [vmem:[%s1764 + $0x18] sm:$0xf]
      %v1772 = vld [vmem:[%s1764 + $0x1c] sm:$0xf]
      %v1773 = vld [vmem:[%s1764 + $0x20] sm:$0xf]
      %v1774 = vld [vmem:[%s1764 + $0x24] sm:$0xf]
      %v1775 = vld [vmem:[%s1764 + $0x28] sm:$0xf]
      %v1776 = vld [vmem:[%s1764 + $0x2c] sm:$0xf]
      %v1777 = vld [vmem:[%s1764 + $0x30] sm:$0xf]
      %v1778 = vld [vmem:[%s1764 + $0x34] sm:$0xf]
      %v1779 = vld [vmem:[%s1764 + $0x38] sm:$0xf]
      %v1780 = vld [vmem:[%s1764 + $0x3c] sm:$0xf]
      %v1781 = vld [vmem:[%s1764 + $0x40] sm:$0xf]
      %v1782 = vld [vmem:[%s1764 + $0x44] sm:$0xf]
      %v1799 = vunpack.c.l.b16 %v1748
      %v1800 = vunpack.c.h.b16 %v1748
      %v1801 = vunpack.c.l.b16 %v1749
      %v1802 = vunpack.c.h.b16 %v1749
      %v1803 = vunpack.c.l.b16 %v1750
      %v1804 = vunpack.c.h.b16 %v1750
      %v1805 = vunpack.c.l.b16 %v1751
      %v1806 = vunpack.c.h.b16 %v1751
      %v1807 = vunpack.c.l.b16 %v1752
      %v1808 = vunpack.c.h.b16 %v1752
      %v1809 = vunpack.c.l.b16 %v1753
      %v1810 = vunpack.c.h.b16 %v1753
      %v1811 = vunpack.c.l.b16 %v1754
      %v1812 = vunpack.c.h.b16 %v1754
      %v1813 = vunpack.c.l.b16 %v1755
      %v1814 = vunpack.c.h.b16 %v1755
      %v1815 = vunpack.c.l.b16 %v1756
      %v1816 = vunpack.c.h.b16 %v1756
      %v1817 = vunpack.c.l.b16 %v1757
      %v1818 = vunpack.c.h.b16 %v1757
      %v1819 = vunpack.c.l.b16 %v1758
      %v1820 = vunpack.c.h.b16 %v1758
      %v1821 = vunpack.c.l.b16 %v1759
      %v1822 = vunpack.c.h.b16 %v1759
      %v1823 = vunpack.c.l.b16 %v1760
      %v1824 = vunpack.c.h.b16 %v1760
      %v1825 = vunpack.c.l.b16 %v1761
      %v1826 = vunpack.c.h.b16 %v1761
      %v1827 = vunpack.c.l.b16 %v1762
      %v1828 = vunpack.c.h.b16 %v1762
      %v1829 = vunpack.c.l.b16 %v1763
      %v1830 = vunpack.c.h.b16 %v1763
      %v1831 = vpack.c.b16 %v1801, %v1799
      %v1832 = vpack.c.b16 %v1802, %v1800
      %v1833 = vpack.c.b16 %v1805, %v1803
      %v1834 = vpack.c.b16 %v1806, %v1804
      %v1835 = vpack.c.b16 %v1809, %v1807
      %v1836 = vpack.c.b16 %v1810, %v1808
      %v1837 = vpack.c.b16 %v1813, %v1811
      %v1838 = vpack.c.b16 %v1814, %v1812
      %v1839 = vpack.c.b16 %v1817, %v1815
      %v1840 = vpack.c.b16 %v1818, %v1816
      %v1841 = vpack.c.b16 %v1821, %v1819
      %v1842 = vpack.c.b16 %v1822, %v1820
      %v1843 = vpack.c.b16 %v1825, %v1823
      %v1844 = vpack.c.b16 %v1826, %v1824
      %v1845 = vpack.c.b16 %v1829, %v1827
      %v1846 = vpack.c.b16 %v1830, %v1828
      %v1873 = vunpack.c.l.b16 %v1765
      %v1874 = vunpack.c.l.b16 %v1766
      %v1875 = vunpack.c.l.b16 %v1767
      %v1876 = vunpack.c.l.b16 %v1768
      %v1877 = vunpack.c.l.b16 %v1769
      %v1878 = vunpack.c.l.b16 %v1770
      %v1879 = vunpack.c.l.b16 %v1771
      %v1880 = vunpack.c.l.b16 %v1772
      %v1881 = vunpack.c.l.b16 %v1773
      %v1882 = vunpack.c.l.b16 %v1774
      %v1883 = vunpack.c.l.b16 %v1775
      %v1884 = vunpack.c.l.b16 %v1776
      %v1885 = vunpack.c.l.b16 %v1777
      %v1886 = vunpack.c.l.b16 %v1778
      %v1887 = vunpack.c.l.b16 %v1779
      %v1888 = vunpack.c.l.b16 %v1780
      %v1889 = vunpack.c.l.b16 %v1781
      %v1890 = vunpack.c.l.b16 %v1782
      %v1891 = vpack.c.b16 %v1874, %v1873
      %v1892 = vpack.c.b16 %v1876, %v1875
      %v1893 = vpack.c.b16 %v1878, %v1877
      %v1894 = vpack.c.b16 %v1880, %v1879
      %v1895 = vpack.c.b16 %v1882, %v1881
      %v1896 = vpack.c.b16 %v1884, %v1883
      %v1897 = vpack.c.b16 %v1886, %v1885
      %v1898 = vpack.c.b16 %v1888, %v1887
      %v1899 = vpack.c.b16 %v1890, %v1889
      %v1910 = vsel %vm1463, %v1832, 0
      %v1913 = vsel %vm1463, %v1834, 0
      %v1916 = vsel %vm1463, %v1836, 0
      %v1919 = vsel %vm1463, %v1838, 0
      %v1922 = vsel %vm1463, %v1840, 0
      %v1925 = vsel %vm1463, %v1842, 0
      %v1928 = vsel %vm1463, %v1844, 0
      %v1931 = vsel %vm1463, %v1846, 0
      %1933 = vmatprep.subr.bf16.mxu0 0
      %1934 = vmatpush1.bf16.msra.mxu0 %v1898
      %1935 = vmatprep.subr.bf16.mxu0 0
      %1936 = vmatpush1.bf16.msra.mxu0 %v1897
      %1937 = vmatprep.subr.bf16.mxu0 0
      %1938 = vmatpush1.bf16.msra.mxu0 %v1896
      %1939 = vmatprep.subr.bf16.mxu0 0
      %1940 = vmatpush1.bf16.msra.mxu0 %v1895
      %1941 = vmatprep.subr.bf16.mxu0 0
      %1942 = vmatpush1.bf16.msra.mxu0 %v1894
      %1943 = vmatprep.subr.bf16.mxu0 0
      %1944 = vmatpush1.bf16.msra.mxu0 %v1893
      %1945 = vmatprep.subr.bf16.mxu0 0
      %1946 = vmatpush1.bf16.msra.mxu0 %v1892
      %1947 = vmatprep.subr.bf16.mxu0 0
      %1948 = vmatpush1.bf16.msra.mxu0 %v1891
      %1949 = vmatprep.subr.bf16.mxu0 0
      %1950 = vmatpush2.bf16.msra.mxu0 0
      %1951 = vmatprep.subr.bf16.mxu0 0
      %1952 = vmatpush2.bf16.msra.mxu0 0
      %1953 = vmatprep.subr.bf16.mxu0 0
      %1954 = vmatpush2.bf16.msra.mxu0 0
      %1955 = vmatprep.subr.bf16.mxu0 0
      %1956 = vmatpush2.bf16.msra.mxu0 0
      %1957 = vmatprep.subr.bf16.mxu0 0
      %1958 = vmatpush2.bf16.msra.mxu0 0
      %1959 = vmatprep.subr.bf16.mxu0 0
      %1960 = vmatpush2.bf16.msra.mxu0 0
      %1961 = vmatprep.subr.bf16.mxu0 0
      %1962 = vmatpush2.bf16.msra.mxu0 0
      %1963 = vmatprep.subr.bf16.mxu0 0
      %1964 = vmatpush2.bf16.msra.mxu0 %v1899
      %1965 = vmatprep.mubr.bf16.mxu0 %v1910
      %1966 = vmatmul.mubr.bf16.gmra.mxu0 %v1831
      %v1967 = vpop.f32.mrf.mxu0
      %v1968 = vadd.f32 0.0, %v1967
      %v1969 = vpop.f32.mrf.mxu0
      %v1970 = vpop.f32.mrf.mxu0
      %v1971 = vadd.f32 0.0, %v1970
      %v1972 = vpop.f32.mrf.mxu0
      %1973 = vmatprep.mubr.bf16.mxu0 %v1913
      %1974 = vmatmul.mubr.bf16.gmra.mxu0 %v1833
      %v1975 = vpop.f32.mrf.mxu0
      %v1976 = vadd.f32 0.0, %v1975
      %v1977 = vpop.f32.mrf.mxu0
      %v1978 = vpop.f32.mrf.mxu0
      %v1979 = vadd.f32 0.0, %v1978
      %v1980 = vpop.f32.mrf.mxu0
      %1981 = vmatprep.mubr.bf16.mxu0 %v1916
      %1982 = vmatmul.mubr.bf16.gmra.mxu0 %v1835
      %v1983 = vpop.f32.mrf.mxu0
      %v1984 = vadd.f32 0.0, %v1983
      %v1985 = vpop.f32.mrf.mxu0
      %v1986 = vpop.f32.mrf.mxu0
      %v1987 = vadd.f32 0.0, %v1986
      %v1988 = vpop.f32.mrf.mxu0
      %1989 = vmatprep.mubr.bf16.mxu0 %v1919
      %1990 = vmatmul.mubr.bf16.gmra.mxu0 %v1837
      %v1991 = vpop.f32.mrf.mxu0
      %v1992 = vadd.f32 0.0, %v1991
      %v1993 = vpop.f32.mrf.mxu0
      %v1994 = vpop.f32.mrf.mxu0
      %v1995 = vadd.f32 0.0, %v1994
      %v1996 = vpop.f32.mrf.mxu0
      %1997 = vmatprep.mubr.bf16.mxu0 %v1922
      %1998 = vmatmul.mubr.bf16.gmra.mxu0 %v1839
      %v1999 = vpop.f32.mrf.mxu0
      %v2000 = vadd.f32 0.0, %v1999
      %v2001 = vpop.f32.mrf.mxu0
      %v2002 = vpop.f32.mrf.mxu0
      %v2003 = vadd.f32 0.0, %v2002
      %v2004 = vpop.f32.mrf.mxu0
      %2005 = vmatprep.mubr.bf16.mxu0 %v1925
      %2006 = vmatmul.mubr.bf16.gmra.mxu0 %v1841
      %v2007 = vpop.f32.mrf.mxu0
      %v2008 = vadd.f32 0.0, %v2007
      %v2009 = vpop.f32.mrf.mxu0
      %v2010 = vpop.f32.mrf.mxu0
      %v2011 = vadd.f32 0.0, %v2010
      %v2012 = vpop.f32.mrf.mxu0
      %2013 = vmatprep.mubr.bf16.mxu0 %v1928
      %2014 = vmatmul.mubr.bf16.gmra.mxu0 %v1843
      %v2015 = vpop.f32.mrf.mxu0
      %v2016 = vadd.f32 0.0, %v2015
      %v2017 = vpop.f32.mrf.mxu0
      %v2018 = vpop.f32.mrf.mxu0
      %v2019 = vadd.f32 0.0, %v2018
      %v2020 = vpop.f32.mrf.mxu0
      %2021 = vmatprep.mubr.bf16.mxu0 %v1931
      %2022 = vmatmul.mubr.bf16.gmra.mxu0 %v1845
      %v2023 = vpop.f32.mrf.mxu0
      %v2024 = vadd.f32 0.0, %v2023
      %v2025 = vpop.f32.mrf.mxu0
      %v2026 = vpop.f32.mrf.mxu0
      %v2027 = vadd.f32 0.0, %v2026
      %v2028 = vpop.f32.mrf.mxu0
      %2029 = vdwg.mxu0
      %v2030 = vadd.f32 %v1686, %v1968
      %v2031 = vadd.f32 %v1689, %v1971
      %v2032 = vadd.f32 %v1694, %v1976
      %v2033 = vadd.f32 %v1697, %v1979
      %v2034 = vadd.f32 %v1702, %v1984
      %v2035 = vadd.f32 %v1705, %v1987
      %v2036 = vadd.f32 %v1710, %v1992
      %v2037 = vadd.f32 %v1713, %v1995
      %v2038 = vadd.f32 %v1718, %v2000
      %v2039 = vadd.f32 %v1721, %v2003
      %v2040 = vadd.f32 %v1726, %v2008
      %v2041 = vadd.f32 %v1729, %v2011
      %v2042 = vadd.f32 %v1734, %v2016
      %v2043 = vadd.f32 %v1737, %v2019
      %v2044 = vadd.f32 %v1742, %v2024
      %v2045 = vadd.f32 %v1745, %v2027
      %v2046 = vld [vmem:[%s3] sm:$0x1]
      %v2048 = vlaneseq
      %v2049 = vshrl.u32 %v2048, 7
      %v2050 = vsub.s32 0, %v2049
      %v2051 = vrot.slane %v2046, %v2050
      %v2053 = vadd.f32 %v2030, %v2051
      %v2054 = vadd.f32 %v2031, %v2051
      %v2055 = vadd.f32 %v2032, %v2051
      %v2056 = vadd.f32 %v2033, %v2051
      %v2057 = vadd.f32 %v2034, %v2051
      %v2058 = vadd.f32 %v2035, %v2051
      %v2059 = vadd.f32 %v2036, %v2051
      %v2060 = vadd.f32 %v2037, %v2051
      %v2061 = vadd.f32 %v2038, %v2051
      %v2062 = vadd.f32 %v2039, %v2051
      %v2063 = vadd.f32 %v2040, %v2051
      %v2064 = vadd.f32 %v2041, %v2051
      %v2065 = vadd.f32 %v2042, %v2051
      %v2066 = vadd.f32 %v2043, %v2051
      %v2067 = vadd.f32 %v2044, %v2051
      %v2068 = vadd.f32 %v2045, %v2051
      %v2069 = vxor.u32 %v2053, 2147483648
      %v2070 = vxor.u32 %v2054, 2147483648
      %v2071 = vxor.u32 %v2055, 2147483648
      %v2072 = vxor.u32 %v2056, 2147483648
      %v2073 = vxor.u32 %v2057, 2147483648
      %v2074 = vxor.u32 %v2058, 2147483648
      %v2075 = vxor.u32 %v2059, 2147483648
      %v2076 = vxor.u32 %v2060, 2147483648
      %v2077 = vxor.u32 %v2061, 2147483648
      %v2078 = vxor.u32 %v2062, 2147483648
      %v2079 = vxor.u32 %v2063, 2147483648
      %v2080 = vxor.u32 %v2064, 2147483648
      %v2081 = vxor.u32 %v2065, 2147483648
      %v2082 = vxor.u32 %v2066, 2147483648
      %v2083 = vxor.u32 %v2067, 2147483648
      %v2084 = vxor.u32 %v2068, 2147483648
      %v2085 = vmul.f32 %v2069, 1.442695
      %v2086 = vpow.pop %v2085
      %v2087 = vmul.f32 %v2070, 1.442695
      %v2088 = vpow.pop %v2087
      %v2089 = vmul.f32 %v2071, 1.442695
      %v2090 = vpow.pop %v2089
      %v2091 = vmul.f32 %v2072, 1.442695
      %v2092 = vpow.pop %v2091
      %v2093 = vmul.f32 %v2073, 1.442695
      %v2094 = vpow.pop %v2093
      %v2095 = vmul.f32 %v2074, 1.442695
      %v2096 = vpow.pop %v2095
      %v2097 = vmul.f32 %v2075, 1.442695
      %v2098 = vpow.pop %v2097
      %v2099 = vmul.f32 %v2076, 1.442695
      %v2100 = vpow.pop %v2099
      %v2101 = vmul.f32 %v2077, 1.442695
      %v2102 = vpow.pop %v2101
      %v2103 = vmul.f32 %v2078, 1.442695
      %v2104 = vpow.pop %v2103
      %v2105 = vmul.f32 %v2079, 1.442695
      %v2106 = vpow.pop %v2105
      %v2107 = vmul.f32 %v2080, 1.442695
      %v2108 = vpow.pop %v2107
      %v2109 = vmul.f32 %v2081, 1.442695
      %v2110 = vpow.pop %v2109
      %v2111 = vmul.f32 %v2082, 1.442695
      %v2112 = vpow.pop %v2111
      %v2113 = vmul.f32 %v2083, 1.442695
      %v2114 = vpow.pop %v2113
      %v2115 = vmul.f32 %v2084, 1.442695
      %v2116 = vpow.pop %v2115
      %v2117 = vadd.f32 %v2086, 1.0
      %v2118 = vadd.f32 %v2088, 1.0
      %v2119 = vadd.f32 %v2090, 1.0
      %v2120 = vadd.f32 %v2092, 1.0
      %v2121 = vadd.f32 %v2094, 1.0
      %v2122 = vadd.f32 %v2096, 1.0
      %v2123 = vadd.f32 %v2098, 1.0
      %v2124 = vadd.f32 %v2100, 1.0
      %v2125 = vadd.f32 %v2102, 1.0
      %v2126 = vadd.f32 %v2104, 1.0
      %v2127 = vadd.f32 %v2106, 1.0
      %v2128 = vadd.f32 %v2108, 1.0
      %v2129 = vadd.f32 %v2110, 1.0
      %v2130 = vadd.f32 %v2112, 1.0
      %v2131 = vadd.f32 %v2114, 1.0
      %v2132 = vadd.f32 %v2116, 1.0
      %v2133 = vrcp.pop %v2117
      %v2134 = vmul.f32 1.0, %v2133
      %v2135 = vrcp.pop %v2118
      %v2136 = vmul.f32 1.0, %v2135
      %v2137 = vrcp.pop %v2119
      %v2138 = vmul.f32 1.0, %v2137
      %v2139 = vrcp.pop %v2120
      %v2140 = vmul.f32 1.0, %v2139
      %v2141 = vrcp.pop %v2121
      %v2142 = vmul.f32 1.0, %v2141
      %v2143 = vrcp.pop %v2122
      %v2144 = vmul.f32 1.0, %v2143
      %v2145 = vrcp.pop %v2123
      %v2146 = vmul.f32 1.0, %v2145
      %v2147 = vrcp.pop %v2124
      %v2148 = vmul.f32 1.0, %v2147
      %v2149 = vrcp.pop %v2125
      %v2150 = vmul.f32 1.0, %v2149
      %v2151 = vrcp.pop %v2126
      %v2152 = vmul.f32 1.0, %v2151
      %v2153 = vrcp.pop %v2127
      %v2154 = vmul.f32 1.0, %v2153
      %v2155 = vrcp.pop %v2128
      %v2156 = vmul.f32 1.0, %v2155
      %v2157 = vrcp.pop %v2129
      %v2158 = vmul.f32 1.0, %v2157
      %v2159 = vrcp.pop %v2130
      %v2160 = vmul.f32 1.0, %v2159
      %v2161 = vrcp.pop %v2131
      %v2162 = vmul.f32 1.0, %v2161
      %v2163 = vrcp.pop %v2132
      %v2164 = vmul.f32 1.0, %v2163
      %v2165 = vtanh.pop %v2053
      %v2166 = vtanh.pop %v2054
      %v2167 = vtanh.pop %v2055
      %v2168 = vtanh.pop %v2056
      %v2169 = vtanh.pop %v2057
      %v2170 = vtanh.pop %v2058
      %v2171 = vtanh.pop %v2059
      %v2172 = vtanh.pop %v2060
      %v2173 = vtanh.pop %v2061
      %v2174 = vtanh.pop %v2062
      %v2175 = vtanh.pop %v2063
      %v2176 = vtanh.pop %v2064
      %v2177 = vtanh.pop %v2065
      %v2178 = vtanh.pop %v2066
      %v2179 = vtanh.pop %v2067
      %v2180 = vtanh.pop %v2068
      %v2181 = vld [vmem:[%s266] sm:$0xff]
      %v2182 = vld [vmem:[%s266 + $0x8] sm:$0xff]
      %v2183 = vld [vmem:[%s266 + $0x10] sm:$0xff]
      %v2184 = vld [vmem:[%s266 + $0x18] sm:$0xff]
      %v2185 = vld [vmem:[%s266 + $0x20] sm:$0xff]
      %v2186 = vld [vmem:[%s266 + $0x28] sm:$0xff]
      %v2187 = vld [vmem:[%s266 + $0x30] sm:$0xff]
      %v2188 = vld [vmem:[%s266 + $0x38] sm:$0xff]
      %v2189 = vld [vmem:[%s266 + $0x40] sm:$0xff]
      %v2190 = vld [vmem:[%s266 + $0x48] sm:$0xff]
      %v2191 = vld [vmem:[%s266 + $0x50] sm:$0xff]
      %v2192 = vld [vmem:[%s266 + $0x58] sm:$0xff]
      %v2193 = vld [vmem:[%s266 + $0x60] sm:$0xff]
      %v2194 = vld [vmem:[%s266 + $0x68] sm:$0xff]
      %v2195 = vld [vmem:[%s266 + $0x70] sm:$0xff]
      %v2196 = vld [vmem:[%s266 + $0x78] sm:$0xff]
      %v2197 = vmul.f32 %v2134, %v2181
      %v2198 = vmul.f32 %v2136, %v2182
      %v2199 = vmul.f32 %v2138, %v2183
      %v2200 = vmul.f32 %v2140, %v2184
      %v2201 = vmul.f32 %v2142, %v2185
      %v2202 = vmul.f32 %v2144, %v2186
      %v2203 = vmul.f32 %v2146, %v2187
      %v2204 = vmul.f32 %v2148, %v2188
      %v2205 = vmul.f32 %v2150, %v2189
      %v2206 = vmul.f32 %v2152, %v2190
      %v2207 = vmul.f32 %v2154, %v2191
      %v2208 = vmul.f32 %v2156, %v2192
      %v2209 = vmul.f32 %v2158, %v2193
      %v2210 = vmul.f32 %v2160, %v2194
      %v2211 = vmul.f32 %v2162, %v2195
      %v2212 = vmul.f32 %v2164, %v2196
      %2229 = vrot.lane.b32.xlu0 %v2165, 32
      %v2230 = vpop.permute.xlu0 %2229
      %2231 = vrot.lane.b32.xlu0 %v2166, 32
      %v2232 = vpop.permute.xlu0 %2231
      %2233 = vrot.lane.b32.xlu0 %v2167, 32
      %v2234 = vpop.permute.xlu0 %2233
      %2235 = vrot.lane.b32.xlu0 %v2168, 32
      %v2236 = vpop.permute.xlu0 %2235
      %2237 = vrot.lane.b32.xlu0 %v2169, 32
      %v2238 = vpop.permute.xlu0 %2237
      %2239 = vrot.lane.b32.xlu0 %v2170, 32
      %v2240 = vpop.permute.xlu0 %2239
      %2241 = vrot.lane.b32.xlu0 %v2171, 32
      %v2242 = vpop.permute.xlu0 %2241
      %2243 = vrot.lane.b32.xlu0 %v2172, 32
      %v2244 = vpop.permute.xlu0 %2243
      %2245 = vrot.lane.b32.xlu0 %v2173, 32
      %v2246 = vpop.permute.xlu0 %2245
      %2247 = vrot.lane.b32.xlu0 %v2174, 32
      %v2248 = vpop.permute.xlu0 %2247
      %2249 = vrot.lane.b32.xlu0 %v2175, 32
      %v2250 = vpop.permute.xlu0 %2249
      %2251 = vrot.lane.b32.xlu0 %v2176, 32
      %v2252 = vpop.permute.xlu0 %2251
      %2253 = vrot.lane.b32.xlu0 %v2177, 32
      %v2254 = vpop.permute.xlu0 %2253
      %2255 = vrot.lane.b32.xlu0 %v2178, 32
      %v2256 = vpop.permute.xlu0 %2255
      %2257 = vrot.lane.b32.xlu0 %v2179, 32
      %v2258 = vpop.permute.xlu0 %2257
      %2259 = vrot.lane.b32.xlu0 %v2180, 32
      %v2260 = vpop.permute.xlu0 %2259
      %v2277 = vmul.f32 %v2134, %v2230
      %v2278 = vmul.f32 %v2136, %v2232
      %v2279 = vmul.f32 %v2138, %v2234
      %v2280 = vmul.f32 %v2140, %v2236
      %v2281 = vmul.f32 %v2142, %v2238
      %v2282 = vmul.f32 %v2144, %v2240
      %v2283 = vmul.f32 %v2146, %v2242
      %v2284 = vmul.f32 %v2148, %v2244
      %v2285 = vmul.f32 %v2150, %v2246
      %v2286 = vmul.f32 %v2152, %v2248
      %v2287 = vmul.f32 %v2154, %v2250
      %v2288 = vmul.f32 %v2156, %v2252
      %v2289 = vmul.f32 %v2158, %v2254
      %v2290 = vmul.f32 %v2160, %v2256
      %v2291 = vmul.f32 %v2162, %v2258
      %v2292 = vmul.f32 %v2164, %v2260
      %2309 = vrot.lane.b32.xlu0 %v2277, 32
      %v2310 = vpop.permute.xlu0 %2309
      %2311 = vrot.lane.b32.xlu0 %v2278, 32
      %v2312 = vpop.permute.xlu0 %2311
      %2313 = vrot.lane.b32.xlu0 %v2279, 32
      %v2314 = vpop.permute.xlu0 %2313
      %2315 = vrot.lane.b32.xlu0 %v2280, 32
      %v2316 = vpop.permute.xlu0 %2315
      %2317 = vrot.lane.b32.xlu0 %v2281, 32
      %v2318 = vpop.permute.xlu0 %2317
      %2319 = vrot.lane.b32.xlu0 %v2282, 32
      %v2320 = vpop.permute.xlu0 %2319
      %2321 = vrot.lane.b32.xlu0 %v2283, 32
      %v2322 = vpop.permute.xlu0 %2321
      %2323 = vrot.lane.b32.xlu0 %v2284, 32
      %v2324 = vpop.permute.xlu0 %2323
      %2325 = vrot.lane.b32.xlu0 %v2285, 32
      %v2326 = vpop.permute.xlu0 %2325
      %2327 = vrot.lane.b32.xlu0 %v2286, 32
      %v2328 = vpop.permute.xlu0 %2327
      %2329 = vrot.lane.b32.xlu0 %v2287, 32
      %v2330 = vpop.permute.xlu0 %2329
      %2331 = vrot.lane.b32.xlu0 %v2288, 32
      %v2332 = vpop.permute.xlu0 %2331
      %2333 = vrot.lane.b32.xlu0 %v2289, 32
      %v2334 = vpop.permute.xlu0 %2333
      %2335 = vrot.lane.b32.xlu0 %v2290, 32
      %v2336 = vpop.permute.xlu0 %2335
      %2337 = vrot.lane.b32.xlu0 %v2291, 32
      %v2338 = vpop.permute.xlu0 %2337
      %2339 = vrot.lane.b32.xlu0 %v2292, 32
      %v2340 = vpop.permute.xlu0 %2339
      %v2357 = vadd.f32 %v2197, %v2310
      %v2358 = vadd.f32 %v2198, %v2312
      %v2359 = vadd.f32 %v2199, %v2314
      %v2360 = vadd.f32 %v2200, %v2316
      %v2361 = vadd.f32 %v2201, %v2318
      %v2362 = vadd.f32 %v2202, %v2320
      %v2363 = vadd.f32 %v2203, %v2322
      %v2364 = vadd.f32 %v2204, %v2324
      %v2365 = vadd.f32 %v2205, %v2326
      %v2366 = vadd.f32 %v2206, %v2328
      %v2367 = vadd.f32 %v2207, %v2330
      %v2368 = vadd.f32 %v2208, %v2332
      %v2369 = vadd.f32 %v2209, %v2334
      %v2370 = vadd.f32 %v2210, %v2336
      %v2371 = vadd.f32 %v2211, %v2338
      %v2372 = vadd.f32 %v2212, %v2340
      %v2373 = vtanh.pop %v2357
      %v2374 = vtanh.pop %v2358
      %v2375 = vtanh.pop %v2359
      %v2376 = vtanh.pop %v2360
      %v2377 = vtanh.pop %v2361
      %v2378 = vtanh.pop %v2362
      %v2379 = vtanh.pop %v2363
      %v2380 = vtanh.pop %v2364
      %v2381 = vtanh.pop %v2365
      %v2382 = vtanh.pop %v2366
      %v2383 = vtanh.pop %v2367
      %v2384 = vtanh.pop %v2368
      %v2385 = vtanh.pop %v2369
      %v2386 = vtanh.pop %v2370
      %v2387 = vtanh.pop %v2371
      %v2388 = vtanh.pop %v2372
      %2405 = vrot.lane.b32.xlu0 %v2373, 32
      %v2406 = vpop.permute.xlu0 %2405
      %2407 = vrot.lane.b32.xlu0 %v2374, 32
      %v2408 = vpop.permute.xlu0 %2407
      %2409 = vrot.lane.b32.xlu0 %v2375, 32
      %v2410 = vpop.permute.xlu0 %2409
      %2411 = vrot.lane.b32.xlu0 %v2376, 32
      %v2412 = vpop.permute.xlu0 %2411
      %2413 = vrot.lane.b32.xlu0 %v2377, 32
      %v2414 = vpop.permute.xlu0 %2413
      %2415 = vrot.lane.b32.xlu0 %v2378, 32
      %v2416 = vpop.permute.xlu0 %2415
      %2417 = vrot.lane.b32.xlu0 %v2379, 32
      %v2418 = vpop.permute.xlu0 %2417
      %2419 = vrot.lane.b32.xlu0 %v2380, 32
      %v2420 = vpop.permute.xlu0 %2419
      %2421 = vrot.lane.b32.xlu0 %v2381, 32
      %v2422 = vpop.permute.xlu0 %2421
      %2423 = vrot.lane.b32.xlu0 %v2382, 32
      %v2424 = vpop.permute.xlu0 %2423
      %2425 = vrot.lane.b32.xlu0 %v2383, 32
      %v2426 = vpop.permute.xlu0 %2425
      %2427 = vrot.lane.b32.xlu0 %v2384, 32
      %v2428 = vpop.permute.xlu0 %2427
      %2429 = vrot.lane.b32.xlu0 %v2385, 32
      %v2430 = vpop.permute.xlu0 %2429
      %2431 = vrot.lane.b32.xlu0 %v2386, 32
      %v2432 = vpop.permute.xlu0 %2431
      %2433 = vrot.lane.b32.xlu0 %v2387, 32
      %v2434 = vpop.permute.xlu0 %2433
      %2435 = vrot.lane.b32.xlu0 %v2388, 32
      %v2436 = vpop.permute.xlu0 %2435
      %v2453 = vmul.f32 %v2134, %v2406
      %v2454 = vmul.f32 %v2136, %v2408
      %v2455 = vmul.f32 %v2138, %v2410
      %v2456 = vmul.f32 %v2140, %v2412
      %v2457 = vmul.f32 %v2142, %v2414
      %v2458 = vmul.f32 %v2144, %v2416
      %v2459 = vmul.f32 %v2146, %v2418
      %v2460 = vmul.f32 %v2148, %v2420
      %v2461 = vmul.f32 %v2150, %v2422
      %v2462 = vmul.f32 %v2152, %v2424
      %v2463 = vmul.f32 %v2154, %v2426
      %v2464 = vmul.f32 %v2156, %v2428
      %v2465 = vmul.f32 %v2158, %v2430
      %v2466 = vmul.f32 %v2160, %v2432
      %v2467 = vmul.f32 %v2162, %v2434
      %v2468 = vmul.f32 %v2164, %v2436
      %v2469 = vld [vmem:[#allocation2 + $0x80] sm:$0xff]
      %v2470 = vld [vmem:[#allocation2 + $0x88] sm:$0xff]
      %v2471 = vld [vmem:[#allocation2 + $0x90] sm:$0xff]
      %v2472 = vld [vmem:[#allocation2 + $0x98] sm:$0xff]
      %v2473 = vld [vmem:[#allocation2 + $0xa0] sm:$0xff]
      %v2474 = vld [vmem:[#allocation2 + $0xa8] sm:$0xff]
      %v2475 = vld [vmem:[#allocation2 + $0xb0] sm:$0xff]
      %v2476 = vld [vmem:[#allocation2 + $0xb8] sm:$0xff]
      %v2477 = vld [vmem:[#allocation2 + $0xc0] sm:$0xff]
      %v2478 = vld [vmem:[#allocation2 + $0xc8] sm:$0xff]
      %v2479 = vld [vmem:[#allocation2 + $0xd0] sm:$0xff]
      %v2480 = vld [vmem:[#allocation2 + $0xd8] sm:$0xff]
      %v2481 = vld [vmem:[#allocation2 + $0xe0] sm:$0xff]
      %v2482 = vld [vmem:[#allocation2 + $0xe8] sm:$0xff]
      %v2483 = vld [vmem:[#allocation2 + $0xf0] sm:$0xff]
      %v2484 = vld [vmem:[#allocation2 + $0xf8] sm:$0xff]
      %v2485 = vld [vmem:[#allocation2 + $0x100] sm:$0xff]
      %v2486 = vld [vmem:[#allocation2 + $0x108] sm:$0xff]
      %v2503 = vunpack.c.l.b16 %v2471
      %v2504 = vunpack.c.h.b16 %v2471
      %v2505 = vunpack.c.l.b16 %v2472
      %v2506 = vunpack.c.h.b16 %v2472
      %v2507 = vunpack.c.l.b16 %v2473
      %v2508 = vunpack.c.h.b16 %v2473
      %v2509 = vunpack.c.l.b16 %v2474
      %v2510 = vunpack.c.h.b16 %v2474
      %v2511 = vunpack.c.l.b16 %v2475
      %v2512 = vunpack.c.h.b16 %v2475
      %v2513 = vunpack.c.l.b16 %v2476
      %v2514 = vunpack.c.h.b16 %v2476
      %v2515 = vunpack.c.l.b16 %v2477
      %v2516 = vunpack.c.h.b16 %v2477
      %v2517 = vunpack.c.l.b16 %v2478
      %v2518 = vunpack.c.h.b16 %v2478
      %v2519 = vunpack.c.l.b16 %v2479
      %v2520 = vunpack.c.h.b16 %v2479
      %v2521 = vunpack.c.l.b16 %v2480
      %v2522 = vunpack.c.h.b16 %v2480
      %v2523 = vunpack.c.l.b16 %v2481
      %v2524 = vunpack.c.h.b16 %v2481
      %v2525 = vunpack.c.l.b16 %v2482
      %v2526 = vunpack.c.h.b16 %v2482
      %v2527 = vunpack.c.l.b16 %v2483
      %v2528 = vunpack.c.h.b16 %v2483
      %v2529 = vunpack.c.l.b16 %v2484
      %v2530 = vunpack.c.h.b16 %v2484
      %v2531 = vunpack.c.l.b16 %v2485
      %v2532 = vunpack.c.h.b16 %v2485
      %v2533 = vunpack.c.l.b16 %v2486
      %v2534 = vunpack.c.h.b16 %v2486
      %v2535 = vpack.c.b16 %v2505, %v2503
      %v2536 = vpack.c.b16 %v2506, %v2504
      %v2537 = vpack.c.b16 %v2509, %v2507
      %v2538 = vpack.c.b16 %v2510, %v2508
      %v2539 = vpack.c.b16 %v2513, %v2511
      %v2540 = vpack.c.b16 %v2514, %v2512
      %v2541 = vpack.c.b16 %v2517, %v2515
      %v2542 = vpack.c.b16 %v2518, %v2516
      %v2543 = vpack.c.b16 %v2521, %v2519
      %v2544 = vpack.c.b16 %v2522, %v2520
      %v2545 = vpack.c.b16 %v2525, %v2523
      %v2546 = vpack.c.b16 %v2526, %v2524
      %v2547 = vpack.c.b16 %v2529, %v2527
      %v2548 = vpack.c.b16 %v2530, %v2528
      %v2549 = vpack.c.b16 %v2533, %v2531
      %v2550 = vpack.c.b16 %v2534, %v2532
      %v2560 = vsel %vm1463, %v2536, 0
      %v2563 = vsel %vm1463, %v2538, 0
      %v2566 = vsel %vm1463, %v2540, 0
      %v2569 = vsel %vm1463, %v2542, 0
      %v2572 = vsel %vm1463, %v2544, 0
      %v2575 = vsel %vm1463, %v2546, 0
      %v2578 = vsel %vm1463, %v2548, 0
      %v2581 = vsel %vm1463, %v2550, 0
      %2583 = vmatprep.subr.bf16.mxu0 0
      %2584 = vmatpush1.bf16.msra.mxu0 %v1452
      %2585 = vmatprep.subr.bf16.mxu0 0
      %2586 = vmatpush1.bf16.msra.mxu0 %v1451
      %2587 = vmatprep.subr.bf16.mxu0 0
      %2588 = vmatpush1.bf16.msra.mxu0 %v1450
      %2589 = vmatprep.subr.bf16.mxu0 0
      %2590 = vmatpush1.bf16.msra.mxu0 %v1449
      %2591 = vmatprep.subr.bf16.mxu0 0
      %2592 = vmatpush1.bf16.msra.mxu0 %v1448
      %2593 = vmatprep.subr.bf16.mxu0 0
      %2594 = vmatpush1.bf16.msra.mxu0 %v1447
      %2595 = vmatprep.subr.bf16.mxu0 0
      %2596 = vmatpush1.bf16.msra.mxu0 %v1446
      %2597 = vmatprep.subr.bf16.mxu0 0
      %2598 = vmatpush1.bf16.msra.mxu0 %v1445
      %2599 = vmatprep.subr.bf16.mxu0 0
      %2600 = vmatpush2.bf16.msra.mxu0 0
      %2601 = vmatprep.subr.bf16.mxu0 0
      %2602 = vmatpush2.bf16.msra.mxu0 0
      %2603 = vmatprep.subr.bf16.mxu0 0
      %2604 = vmatpush2.bf16.msra.mxu0 0
      %2605 = vmatprep.subr.bf16.mxu0 0
      %2606 = vmatpush2.bf16.msra.mxu0 0
      %2607 = vmatprep.subr.bf16.mxu0 0
      %2608 = vmatpush2.bf16.msra.mxu0 0
      %2609 = vmatprep.subr.bf16.mxu0 0
      %2610 = vmatpush2.bf16.msra.mxu0 0
      %2611 = vmatprep.subr.bf16.mxu0 0
      %2612 = vmatpush2.bf16.msra.mxu0 0
      %2613 = vmatprep.subr.bf16.mxu0 0
      %2614 = vmatpush2.bf16.msra.mxu0 %v1453
      %2615 = vmatprep.mubr.bf16.mxu0 %v2560
      %2616 = vmatmul.mubr.bf16.gmra.mxu0 %v2535
      %v2617 = vpop.f32.mrf.mxu0
      %v2618 = vadd.f32 0.0, %v2617
      %v2619 = vpop.f32.mrf.mxu0
      %v2620 = vpop.f32.mrf.mxu0
      %v2621 = vadd.f32 0.0, %v2620
      %v2622 = vpop.f32.mrf.mxu0
      %2623 = vmatprep.mubr.bf16.mxu0 %v2563
      %2624 = vmatmul.mubr.bf16.gmra.mxu0 %v2537
      %v2625 = vpop.f32.mrf.mxu0
      %v2626 = vadd.f32 0.0, %v2625
      %v2627 = vpop.f32.mrf.mxu0
      %v2628 = vpop.f32.mrf.mxu0
      %v2629 = vadd.f32 0.0, %v2628
      %v2630 = vpop.f32.mrf.mxu0
      %2631 = vmatprep.mubr.bf16.mxu0 %v2566
      %2632 = vmatmul.mubr.bf16.gmra.mxu0 %v2539
      %v2633 = vpop.f32.mrf.mxu0
      %v2634 = vadd.f32 0.0, %v2633
      %v2635 = vpop.f32.mrf.mxu0
      %v2636 = vpop.f32.mrf.mxu0
      %v2637 = vadd.f32 0.0, %v2636
      %v2638 = vpop.f32.mrf.mxu0
      %2639 = vmatprep.mubr.bf16.mxu0 %v2569
      %2640 = vmatmul.mubr.bf16.gmra.mxu0 %v2541
      %v2641 = vpop.f32.mrf.mxu0
      %v2642 = vadd.f32 0.0, %v2641
      %v2643 = vpop.f32.mrf.mxu0
      %v2644 = vpop.f32.mrf.mxu0
      %v2645 = vadd.f32 0.0, %v2644
      %v2646 = vpop.f32.mrf.mxu0
      %2647 = vmatprep.mubr.bf16.mxu0 %v2572
      %2648 = vmatmul.mubr.bf16.gmra.mxu0 %v2543
      %v2649 = vpop.f32.mrf.mxu0
      %v2650 = vadd.f32 0.0, %v2649
      %v2651 = vpop.f32.mrf.mxu0
      %v2652 = vpop.f32.mrf.mxu0
      %v2653 = vadd.f32 0.0, %v2652
      %v2654 = vpop.f32.mrf.mxu0
      %2655 = vmatprep.mubr.bf16.mxu0 %v2575
      %2656 = vmatmul.mubr.bf16.gmra.mxu0 %v2545
      %v2657 = vpop.f32.mrf.mxu0
      %v2658 = vadd.f32 0.0, %v2657
      %v2659 = vpop.f32.mrf.mxu0
      %v2660 = vpop.f32.mrf.mxu0
      %v2661 = vadd.f32 0.0, %v2660
      %v2662 = vpop.f32.mrf.mxu0
      %2663 = vmatprep.mubr.bf16.mxu0 %v2578
      %2664 = vmatmul.mubr.bf16.gmra.mxu0 %v2547
      %v2665 = vpop.f32.mrf.mxu0
      %v2666 = vadd.f32 0.0, %v2665
      %v2667 = vpop.f32.mrf.mxu0
      %v2668 = vpop.f32.mrf.mxu0
      %v2669 = vadd.f32 0.0, %v2668
      %v2670 = vpop.f32.mrf.mxu0
      %2671 = vmatprep.mubr.bf16.mxu0 %v2581
      %2672 = vmatmul.mubr.bf16.gmra.mxu0 %v2549
      %v2673 = vpop.f32.mrf.mxu0
      %v2674 = vadd.f32 0.0, %v2673
      %v2675 = vpop.f32.mrf.mxu0
      %v2676 = vpop.f32.mrf.mxu0
      %v2677 = vadd.f32 0.0, %v2676
      %v2678 = vpop.f32.mrf.mxu0
      %2679 = vdwg.mxu0
      %v2682 = vunpack.c.l.b16 %v2469
      %v2683 = vunpack.c.h.b16 %v2469
      %v2684 = vunpack.c.l.b16 %v2470
      %v2685 = vunpack.c.h.b16 %v2470
      %v2686 = vpack.c.b16 %v2684, %v2682
      %v2687 = vpack.c.b16 %v2685, %v2683
      %v2690 = vsel %vm1463, %v2687, 0
      %2692 = vmatprep.subr.bf16.mxu0 0
      %2693 = vmatpush1.bf16.msra.mxu0 %v1637
      %2694 = vmatprep.subr.bf16.mxu0 0
      %2695 = vmatpush1.bf16.msra.mxu0 %v1636
      %2696 = vmatprep.subr.bf16.mxu0 0
      %2697 = vmatpush1.bf16.msra.mxu0 %v1635
      %2698 = vmatprep.subr.bf16.mxu0 0
      %2699 = vmatpush1.bf16.msra.mxu0 %v1634
      %2700 = vmatprep.subr.bf16.mxu0 0
      %2701 = vmatpush1.bf16.msra.mxu0 %v1633
      %2702 = vmatprep.subr.bf16.mxu0 0
      %2703 = vmatpush1.bf16.msra.mxu0 %v1632
      %2704 = vmatprep.subr.bf16.mxu0 0
      %2705 = vmatpush1.bf16.msra.mxu0 %v1631
      %2706 = vmatprep.subr.bf16.mxu0 0
      %2707 = vmatpush1.bf16.msra.mxu0 %v1630
      %2708 = vmatprep.subr.bf16.mxu0 0
      %2709 = vmatpush2.bf16.msra.mxu0 0
      %2710 = vmatprep.subr.bf16.mxu0 0
      %2711 = vmatpush2.bf16.msra.mxu0 0
      %2712 = vmatprep.subr.bf16.mxu0 0
      %2713 = vmatpush2.bf16.msra.mxu0 0
      %2714 = vmatprep.subr.bf16.mxu0 0
      %2715 = vmatpush2.bf16.msra.mxu0 0
      %2716 = vmatprep.subr.bf16.mxu0 0
      %2717 = vmatpush2.bf16.msra.mxu0 0
      %2718 = vmatprep.subr.bf16.mxu0 0
      %2719 = vmatpush2.bf16.msra.mxu0 0
      %2720 = vmatprep.subr.bf16.mxu0 0
      %2721 = vmatpush2.bf16.msra.mxu0 0
      %2722 = vmatprep.subr.bf16.mxu0 0
      %2723 = vmatpush2.bf16.msra.mxu0 %v1638
      %2724 = vmatprep.mubr.bf16.mxu0 %v2690
      %2725 = vmatmul.mubr.bf16.gmra.mxu0 %v2686
      %v2726 = vpop.f32.mrf.mxu0
      %v2727 = vadd.f32 %v2618, %v2726
      %v2728 = vpop.f32.mrf.mxu0
      %v2729 = vpop.f32.mrf.mxu0
      %v2730 = vadd.f32 %v2621, %v2729
      %v2731 = vpop.f32.mrf.mxu0
      %2732 = vmatprep.mubr.bf16.mxu0 %v2560
      %2733 = vmatmul.mubr.bf16.gmra.mxu0 %v2535
      %v2734 = vpop.f32.mrf.mxu0
      %v2735 = vadd.f32 %v2626, %v2734
      %v2736 = vpop.f32.mrf.mxu0
      %v2737 = vpop.f32.mrf.mxu0
      %v2738 = vadd.f32 %v2629, %v2737
      %v2739 = vpop.f32.mrf.mxu0
      %2740 = vmatprep.mubr.bf16.mxu0 %v2563
      %2741 = vmatmul.mubr.bf16.gmra.mxu0 %v2537
      %v2742 = vpop.f32.mrf.mxu0
      %v2743 = vadd.f32 %v2634, %v2742
      %v2744 = vpop.f32.mrf.mxu0
      %v2745 = vpop.f32.mrf.mxu0
      %v2746 = vadd.f32 %v2637, %v2745
      %v2747 = vpop.f32.mrf.mxu0
      %2748 = vmatprep.mubr.bf16.mxu0 %v2566
      %2749 = vmatmul.mubr.bf16.gmra.mxu0 %v2539
      %v2750 = vpop.f32.mrf.mxu0
      %v2751 = vadd.f32 %v2642, %v2750
      %v2752 = vpop.f32.mrf.mxu0
      %v2753 = vpop.f32.mrf.mxu0
      %v2754 = vadd.f32 %v2645, %v2753
      %v2755 = vpop.f32.mrf.mxu0
      %2756 = vmatprep.mubr.bf16.mxu0 %v2569
      %2757 = vmatmul.mubr.bf16.gmra.mxu0 %v2541
      %v2758 = vpop.f32.mrf.mxu0
      %v2759 = vadd.f32 %v2650, %v2758
      %v2760 = vpop.f32.mrf.mxu0
      %v2761 = vpop.f32.mrf.mxu0
      %v2762 = vadd.f32 %v2653, %v2761
      %v2763 = vpop.f32.mrf.mxu0
      %2764 = vmatprep.mubr.bf16.mxu0 %v2572
      %2765 = vmatmul.mubr.bf16.gmra.mxu0 %v2543
      %v2766 = vpop.f32.mrf.mxu0
      %v2767 = vadd.f32 %v2658, %v2766
      %v2768 = vpop.f32.mrf.mxu0
      %v2769 = vpop.f32.mrf.mxu0
      %v2770 = vadd.f32 %v2661, %v2769
      %v2771 = vpop.f32.mrf.mxu0
      %2772 = vmatprep.mubr.bf16.mxu0 %v2575
      %2773 = vmatmul.mubr.bf16.gmra.mxu0 %v2545
      %v2774 = vpop.f32.mrf.mxu0
      %v2775 = vadd.f32 %v2666, %v2774
      %v2776 = vpop.f32.mrf.mxu0
      %v2777 = vpop.f32.mrf.mxu0
      %v2778 = vadd.f32 %v2669, %v2777
      %v2779 = vpop.f32.mrf.mxu0
      %2780 = vmatprep.mubr.bf16.mxu0 %v2578
      %2781 = vmatmul.mubr.bf16.gmra.mxu0 %v2547
      %v2782 = vpop.f32.mrf.mxu0
      %v2783 = vadd.f32 %v2674, %v2782
      %v2784 = vpop.f32.mrf.mxu0
      %v2785 = vpop.f32.mrf.mxu0
      %v2786 = vadd.f32 %v2677, %v2785
      %v2787 = vpop.f32.mrf.mxu0
      %2788 = vdwg.mxu0
      %v2789 = vld [vmem:[#allocation2 + $0xa0] sm:$0xff]
      %v2790 = vld [vmem:[#allocation2 + $0xa8] sm:$0xff]
      %v2791 = vld [vmem:[#allocation2 + $0xb0] sm:$0xff]
      %v2792 = vld [vmem:[#allocation2 + $0xb8] sm:$0xff]
      %v2793 = vld [vmem:[#allocation2 + $0xc0] sm:$0xff]
      %v2794 = vld [vmem:[#allocation2 + $0xc8] sm:$0xff]
      %v2795 = vld [vmem:[#allocation2 + $0xd0] sm:$0xff]
      %v2796 = vld [vmem:[#allocation2 + $0xd8] sm:$0xff]
      %v2797 = vld [vmem:[#allocation2 + $0xe0] sm:$0xff]
      %v2798 = vld [vmem:[#allocation2 + $0xe8] sm:$0xff]
      %v2799 = vld [vmem:[#allocation2 + $0xf0] sm:$0xff]
      %v2800 = vld [vmem:[#allocation2 + $0xf8] sm:$0xff]
      %v2801 = vld [vmem:[#allocation2 + $0x100] sm:$0xff]
      %v2802 = vld [vmem:[#allocation2 + $0x108] sm:$0xff]
      %v2803 = vld [vmem:[#allocation2 + $0x110] sm:$0xff]
      %v2804 = vld [vmem:[#allocation2 + $0x118] sm:$0xff]
      %v2821 = vunpack.c.l.b16 %v2789
      %v2822 = vunpack.c.h.b16 %v2789
      %v2823 = vunpack.c.l.b16 %v2790
      %v2824 = vunpack.c.h.b16 %v2790
      %v2825 = vunpack.c.l.b16 %v2791
      %v2826 = vunpack.c.h.b16 %v2791
      %v2827 = vunpack.c.l.b16 %v2792
      %v2828 = vunpack.c.h.b16 %v2792
      %v2829 = vunpack.c.l.b16 %v2793
      %v2830 = vunpack.c.h.b16 %v2793
      %v2831 = vunpack.c.l.b16 %v2794
      %v2832 = vunpack.c.h.b16 %v2794
      %v2833 = vunpack.c.l.b16 %v2795
      %v2834 = vunpack.c.h.b16 %v2795
      %v2835 = vunpack.c.l.b16 %v2796
      %v2836 = vunpack.c.h.b16 %v2796
      %v2837 = vunpack.c.l.b16 %v2797
      %v2838 = vunpack.c.h.b16 %v2797
      %v2839 = vunpack.c.l.b16 %v2798
      %v2840 = vunpack.c.h.b16 %v2798
      %v2841 = vunpack.c.l.b16 %v2799
      %v2842 = vunpack.c.h.b16 %v2799
      %v2843 = vunpack.c.l.b16 %v2800
      %v2844 = vunpack.c.h.b16 %v2800
      %v2845 = vunpack.c.l.b16 %v2801
      %v2846 = vunpack.c.h.b16 %v2801
      %v2847 = vunpack.c.l.b16 %v2802
      %v2848 = vunpack.c.h.b16 %v2802
      %v2849 = vunpack.c.l.b16 %v2803
      %v2850 = vunpack.c.h.b16 %v2803
      %v2851 = vunpack.c.l.b16 %v2804
      %v2852 = vunpack.c.h.b16 %v2804
      %v2853 = vpack.c.b16 %v2823, %v2821
      %v2854 = vpack.c.b16 %v2824, %v2822
      %v2855 = vpack.c.b16 %v2827, %v2825
      %v2856 = vpack.c.b16 %v2828, %v2826
      %v2857 = vpack.c.b16 %v2831, %v2829
      %v2858 = vpack.c.b16 %v2832, %v2830
      %v2859 = vpack.c.b16 %v2835, %v2833
      %v2860 = vpack.c.b16 %v2836, %v2834
      %v2861 = vpack.c.b16 %v2839, %v2837
      %v2862 = vpack.c.b16 %v2840, %v2838
      %v2863 = vpack.c.b16 %v2843, %v2841
      %v2864 = vpack.c.b16 %v2844, %v2842
      %v2865 = vpack.c.b16 %v2847, %v2845
      %v2866 = vpack.c.b16 %v2848, %v2846
      %v2867 = vpack.c.b16 %v2851, %v2849
      %v2868 = vpack.c.b16 %v2852, %v2850
      %v2878 = vsel %vm1463, %v2854, 0
      %v2881 = vsel %vm1463, %v2856, 0
      %v2884 = vsel %vm1463, %v2858, 0
      %v2887 = vsel %vm1463, %v2860, 0
      %v2890 = vsel %vm1463, %v2862, 0
      %v2893 = vsel %vm1463, %v2864, 0
      %v2896 = vsel %vm1463, %v2866, 0
      %v2899 = vsel %vm1463, %v2868, 0
      %2901 = vmatprep.subr.bf16.mxu0 0
      %2902 = vmatpush1.bf16.msra.mxu0 %v1898
      %2903 = vmatprep.subr.bf16.mxu0 0
      %2904 = vmatpush1.bf16.msra.mxu0 %v1897
      %2905 = vmatprep.subr.bf16.mxu0 0
      %2906 = vmatpush1.bf16.msra.mxu0 %v1896
      %2907 = vmatprep.subr.bf16.mxu0 0
      %2908 = vmatpush1.bf16.msra.mxu0 %v1895
      %2909 = vmatprep.subr.bf16.mxu0 0
      %2910 = vmatpush1.bf16.msra.mxu0 %v1894
      %2911 = vmatprep.subr.bf16.mxu0 0
      %2912 = vmatpush1.bf16.msra.mxu0 %v1893
      %2913 = vmatprep.subr.bf16.mxu0 0
      %2914 = vmatpush1.bf16.msra.mxu0 %v1892
      %2915 = vmatprep.subr.bf16.mxu0 0
      %2916 = vmatpush1.bf16.msra.mxu0 %v1891
      %2917 = vmatprep.subr.bf16.mxu0 0
      %2918 = vmatpush2.bf16.msra.mxu0 0
      %2919 = vmatprep.subr.bf16.mxu0 0
      %2920 = vmatpush2.bf16.msra.mxu0 0
      %2921 = vmatprep.subr.bf16.mxu0 0
      %2922 = vmatpush2.bf16.msra.mxu0 0
      %2923 = vmatprep.subr.bf16.mxu0 0
      %2924 = vmatpush2.bf16.msra.mxu0 0
      %2925 = vmatprep.subr.bf16.mxu0 0
      %2926 = vmatpush2.bf16.msra.mxu0 0
      %2927 = vmatprep.subr.bf16.mxu0 0
      %2928 = vmatpush2.bf16.msra.mxu0 0
      %2929 = vmatprep.subr.bf16.mxu0 0
      %2930 = vmatpush2.bf16.msra.mxu0 0
      %2931 = vmatprep.subr.bf16.mxu0 0
      %2932 = vmatpush2.bf16.msra.mxu0 %v1899
      %2933 = vmatprep.mubr.bf16.mxu0 %v2878
      %2934 = vmatmul.mubr.bf16.gmra.mxu0 %v2853
      %v2935 = vpop.f32.mrf.mxu0
      %v2936 = vadd.f32 0.0, %v2935
      %v2937 = vpop.f32.mrf.mxu0
      %v2938 = vpop.f32.mrf.mxu0
      %v2939 = vadd.f32 0.0, %v2938
      %v2940 = vpop.f32.mrf.mxu0
      %2941 = vmatprep.mubr.bf16.mxu0 %v2881
      %2942 = vmatmul.mubr.bf16.gmra.mxu0 %v2855
      %v2943 = vpop.f32.mrf.mxu0
      %v2944 = vadd.f32 0.0, %v2943
      %v2945 = vpop.f32.mrf.mxu0
      %v2946 = vpop.f32.mrf.mxu0
      %v2947 = vadd.f32 0.0, %v2946
      %v2948 = vpop.f32.mrf.mxu0
      %2949 = vmatprep.mubr.bf16.mxu0 %v2884
      %2950 = vmatmul.mubr.bf16.gmra.mxu0 %v2857
      %v2951 = vpop.f32.mrf.mxu0
      %v2952 = vadd.f32 0.0, %v2951
      %v2953 = vpop.f32.mrf.mxu0
      %v2954 = vpop.f32.mrf.mxu0
      %v2955 = vadd.f32 0.0, %v2954
      %v2956 = vpop.f32.mrf.mxu0
      %2957 = vmatprep.mubr.bf16.mxu0 %v2887
      %2958 = vmatmul.mubr.bf16.gmra.mxu0 %v2859
      %v2959 = vpop.f32.mrf.mxu0
      %v2960 = vadd.f32 0.0, %v2959
      %v2961 = vpop.f32.mrf.mxu0
      %v2962 = vpop.f32.mrf.mxu0
      %v2963 = vadd.f32 0.0, %v2962
      %v2964 = vpop.f32.mrf.mxu0
      %2965 = vmatprep.mubr.bf16.mxu0 %v2890
      %2966 = vmatmul.mubr.bf16.gmra.mxu0 %v2861
      %v2967 = vpop.f32.mrf.mxu0
      %v2968 = vadd.f32 0.0, %v2967
      %v2969 = vpop.f32.mrf.mxu0
      %v2970 = vpop.f32.mrf.mxu0
      %v2971 = vadd.f32 0.0, %v2970
      %v2972 = vpop.f32.mrf.mxu0
      %2973 = vmatprep.mubr.bf16.mxu0 %v2893
      %2974 = vmatmul.mubr.bf16.gmra.mxu0 %v2863
      %v2975 = vpop.f32.mrf.mxu0
      %v2976 = vadd.f32 0.0, %v2975
      %v2977 = vpop.f32.mrf.mxu0
      %v2978 = vpop.f32.mrf.mxu0
      %v2979 = vadd.f32 0.0, %v2978
      %v2980 = vpop.f32.mrf.mxu0
      %2981 = vmatprep.mubr.bf16.mxu0 %v2896
      %2982 = vmatmul.mubr.bf16.gmra.mxu0 %v2865
      %v2983 = vpop.f32.mrf.mxu0
      %v2984 = vadd.f32 0.0, %v2983
      %v2985 = vpop.f32.mrf.mxu0
      %v2986 = vpop.f32.mrf.mxu0
      %v2987 = vadd.f32 0.0, %v2986
      %v2988 = vpop.f32.mrf.mxu0
      %2989 = vmatprep.mubr.bf16.mxu0 %v2899
      %2990 = vmatmul.mubr.bf16.gmra.mxu0 %v2867
      %v2991 = vpop.f32.mrf.mxu0
      %v2992 = vadd.f32 0.0, %v2991
      %v2993 = vpop.f32.mrf.mxu0
      %v2994 = vpop.f32.mrf.mxu0
      %v2995 = vadd.f32 0.0, %v2994
      %v2996 = vpop.f32.mrf.mxu0
      %2997 = vdwg.mxu0
      %v2998 = vadd.f32 %v2727, %v2936
      %v2999 = vadd.f32 %v2730, %v2939
      %v3000 = vadd.f32 %v2735, %v2944
      %v3001 = vadd.f32 %v2738, %v2947
      %v3002 = vadd.f32 %v2743, %v2952
      %v3003 = vadd.f32 %v2746, %v2955
      %v3004 = vadd.f32 %v2751, %v2960
      %v3005 = vadd.f32 %v2754, %v2963
      %v3006 = vadd.f32 %v2759, %v2968
      %v3007 = vadd.f32 %v2762, %v2971
      %v3008 = vadd.f32 %v2767, %v2976
      %v3009 = vadd.f32 %v2770, %v2979
      %v3010 = vadd.f32 %v2775, %v2984
      %v3011 = vadd.f32 %v2778, %v2987
      %v3012 = vadd.f32 %v2783, %v2992
      %v3013 = vadd.f32 %v2786, %v2995
      %v3014 = vadd.f32 %v2998, %v2051
      %v3015 = vadd.f32 %v2999, %v2051
      %v3016 = vadd.f32 %v3000, %v2051
      %v3017 = vadd.f32 %v3001, %v2051
      %v3018 = vadd.f32 %v3002, %v2051
      %v3019 = vadd.f32 %v3003, %v2051
      %v3020 = vadd.f32 %v3004, %v2051
      %v3021 = vadd.f32 %v3005, %v2051
      %v3022 = vadd.f32 %v3006, %v2051
      %v3023 = vadd.f32 %v3007, %v2051
      %v3024 = vadd.f32 %v3008, %v2051
      %v3025 = vadd.f32 %v3009, %v2051
      %v3026 = vadd.f32 %v3010, %v2051
      %v3027 = vadd.f32 %v3011, %v2051
      %v3028 = vadd.f32 %v3012, %v2051
      %v3029 = vadd.f32 %v3013, %v2051
      %v3030 = vxor.u32 %v3014, 2147483648
      %v3031 = vxor.u32 %v3015, 2147483648
      %v3032 = vxor.u32 %v3016, 2147483648
      %v3033 = vxor.u32 %v3017, 2147483648
      %v3034 = vxor.u32 %v3018, 2147483648
      %v3035 = vxor.u32 %v3019, 2147483648
      %v3036 = vxor.u32 %v3020, 2147483648
      %v3037 = vxor.u32 %v3021, 2147483648
      %v3038 = vxor.u32 %v3022, 2147483648
      %v3039 = vxor.u32 %v3023, 2147483648
      %v3040 = vxor.u32 %v3024, 2147483648
      %v3041 = vxor.u32 %v3025, 2147483648
      %v3042 = vxor.u32 %v3026, 2147483648
      %v3043 = vxor.u32 %v3027, 2147483648
      %v3044 = vxor.u32 %v3028, 2147483648
      %v3045 = vxor.u32 %v3029, 2147483648
      %v3046 = vmul.f32 %v3030, 1.442695
      %v3047 = vpow.pop %v3046
      %v3048 = vmul.f32 %v3031, 1.442695
      %v3049 = vpow.pop %v3048
      %v3050 = vmul.f32 %v3032, 1.442695
      %v3051 = vpow.pop %v3050
      %v3052 = vmul.f32 %v3033, 1.442695
      %v3053 = vpow.pop %v3052
      %v3054 = vmul.f32 %v3034, 1.442695
      %v3055 = vpow.pop %v3054
      %v3056 = vmul.f32 %v3035, 1.442695
      %v3057 = vpow.pop %v3056
      %v3058 = vmul.f32 %v3036, 1.442695
      %v3059 = vpow.pop %v3058
      %v3060 = vmul.f32 %v3037, 1.442695
      %v3061 = vpow.pop %v3060
      %v3062 = vmul.f32 %v3038, 1.442695
      %v3063 = vpow.pop %v3062
      %v3064 = vmul.f32 %v3039, 1.442695
      %v3065 = vpow.pop %v3064
      %v3066 = vmul.f32 %v3040, 1.442695
      %v3067 = vpow.pop %v3066
      %v3068 = vmul.f32 %v3041, 1.442695
      %v3069 = vpow.pop %v3068
      %v3070 = vmul.f32 %v3042, 1.442695
      %v3071 = vpow.pop %v3070
      %v3072 = vmul.f32 %v3043, 1.442695
      %v3073 = vpow.pop %v3072
      %v3074 = vmul.f32 %v3044, 1.442695
      %v3075 = vpow.pop %v3074
      %v3076 = vmul.f32 %v3045, 1.442695
      %v3077 = vpow.pop %v3076
      %v3078 = vadd.f32 %v3047, 1.0
      %v3079 = vadd.f32 %v3049, 1.0
      %v3080 = vadd.f32 %v3051, 1.0
      %v3081 = vadd.f32 %v3053, 1.0
      %v3082 = vadd.f32 %v3055, 1.0
      %v3083 = vadd.f32 %v3057, 1.0
      %v3084 = vadd.f32 %v3059, 1.0
      %v3085 = vadd.f32 %v3061, 1.0
      %v3086 = vadd.f32 %v3063, 1.0
      %v3087 = vadd.f32 %v3065, 1.0
      %v3088 = vadd.f32 %v3067, 1.0
      %v3089 = vadd.f32 %v3069, 1.0
      %v3090 = vadd.f32 %v3071, 1.0
      %v3091 = vadd.f32 %v3073, 1.0
      %v3092 = vadd.f32 %v3075, 1.0
      %v3093 = vadd.f32 %v3077, 1.0
      %v3094 = vrcp.pop %v3078
      %v3095 = vmul.f32 1.0, %v3094
      %v3096 = vrcp.pop %v3079
      %v3097 = vmul.f32 1.0, %v3096
      %v3098 = vrcp.pop %v3080
      %v3099 = vmul.f32 1.0, %v3098
      %v3100 = vrcp.pop %v3081
      %v3101 = vmul.f32 1.0, %v3100
      %v3102 = vrcp.pop %v3082
      %v3103 = vmul.f32 1.0, %v3102
      %v3104 = vrcp.pop %v3083
      %v3105 = vmul.f32 1.0, %v3104
      %v3106 = vrcp.pop %v3084
      %v3107 = vmul.f32 1.0, %v3106
      %v3108 = vrcp.pop %v3085
      %v3109 = vmul.f32 1.0, %v3108
      %v3110 = vrcp.pop %v3086
      %v3111 = vmul.f32 1.0, %v3110
      %v3112 = vrcp.pop %v3087
      %v3113 = vmul.f32 1.0, %v3112
      %v3114 = vrcp.pop %v3088
      %v3115 = vmul.f32 1.0, %v3114
      %v3116 = vrcp.pop %v3089
      %v3117 = vmul.f32 1.0, %v3116
      %v3118 = vrcp.pop %v3090
      %v3119 = vmul.f32 1.0, %v3118
      %v3120 = vrcp.pop %v3091
      %v3121 = vmul.f32 1.0, %v3120
      %v3122 = vrcp.pop %v3092
      %v3123 = vmul.f32 1.0, %v3122
      %v3124 = vrcp.pop %v3093
      %v3125 = vmul.f32 1.0, %v3124
      %v3126 = vtanh.pop %v3014
      %v3127 = vtanh.pop %v3015
      %v3128 = vtanh.pop %v3016
      %v3129 = vtanh.pop %v3017
      %v3130 = vtanh.pop %v3018
      %v3131 = vtanh.pop %v3019
      %v3132 = vtanh.pop %v3020
      %v3133 = vtanh.pop %v3021
      %v3134 = vtanh.pop %v3022
      %v3135 = vtanh.pop %v3023
      %v3136 = vtanh.pop %v3024
      %v3137 = vtanh.pop %v3025
      %v3138 = vtanh.pop %v3026
      %v3139 = vtanh.pop %v3027
      %v3140 = vtanh.pop %v3028
      %v3141 = vtanh.pop %v3029
      %v3142 = vld [vmem:[%s266 + $0x80] sm:$0xff]
      %v3143 = vld [vmem:[%s266 + $0x88] sm:$0xff]
      %v3144 = vld [vmem:[%s266 + $0x90] sm:$0xff]
      %v3145 = vld [vmem:[%s266 + $0x98] sm:$0xff]
      %v3146 = vld [vmem:[%s266 + $0xa0] sm:$0xff]
      %v3147 = vld [vmem:[%s266 + $0xa8] sm:$0xff]
      %v3148 = vld [vmem:[%s266 + $0xb0] sm:$0xff]
      %v3149 = vld [vmem:[%s266 + $0xb8] sm:$0xff]
      %v3150 = vld [vmem:[%s266 + $0xc0] sm:$0xff]
      %v3151 = vld [vmem:[%s266 + $0xc8] sm:$0xff]
      %v3152 = vld [vmem:[%s266 + $0xd0] sm:$0xff]
      %v3153 = vld [vmem:[%s266 + $0xd8] sm:$0xff]
      %v3154 = vld [vmem:[%s266 + $0xe0] sm:$0xff]
      %v3155 = vld [vmem:[%s266 + $0xe8] sm:$0xff]
      %v3156 = vld [vmem:[%s266 + $0xf0] sm:$0xff]
      %v3157 = vld [vmem:[%s266 + $0xf8] sm:$0xff]
      %v3158 = vmul.f32 %v3095, %v3142
      %v3159 = vmul.f32 %v3097, %v3143
      %v3160 = vmul.f32 %v3099, %v3144
      %v3161 = vmul.f32 %v3101, %v3145
      %v3162 = vmul.f32 %v3103, %v3146
      %v3163 = vmul.f32 %v3105, %v3147
      %v3164 = vmul.f32 %v3107, %v3148
      %v3165 = vmul.f32 %v3109, %v3149
      %v3166 = vmul.f32 %v3111, %v3150
      %v3167 = vmul.f32 %v3113, %v3151
      %v3168 = vmul.f32 %v3115, %v3152
      %v3169 = vmul.f32 %v3117, %v3153
      %v3170 = vmul.f32 %v3119, %v3154
      %v3171 = vmul.f32 %v3121, %v3155
      %v3172 = vmul.f32 %v3123, %v3156
      %v3173 = vmul.f32 %v3125, %v3157
      %3190 = vrot.lane.b32.xlu0 %v3126, 32
      %v3191 = vpop.permute.xlu0 %3190
      %3192 = vrot.lane.b32.xlu0 %v3127, 32
      %v3193 = vpop.permute.xlu0 %3192
      %3194 = vrot.lane.b32.xlu0 %v3128, 32
      %v3195 = vpop.permute.xlu0 %3194
      %3196 = vrot.lane.b32.xlu0 %v3129, 32
      %v3197 = vpop.permute.xlu0 %3196
      %3198 = vrot.lane.b32.xlu0 %v3130, 32
      %v3199 = vpop.permute.xlu0 %3198
      %3200 = vrot.lane.b32.xlu0 %v3131, 32
      %v3201 = vpop.permute.xlu0 %3200
      %3202 = vrot.lane.b32.xlu0 %v3132, 32
      %v3203 = vpop.permute.xlu0 %3202
      %3204 = vrot.lane.b32.xlu0 %v3133, 32
      %v3205 = vpop.permute.xlu0 %3204
      %3206 = vrot.lane.b32.xlu0 %v3134, 32
      %v3207 = vpop.permute.xlu0 %3206
      %3208 = vrot.lane.b32.xlu0 %v3135, 32
      %v3209 = vpop.permute.xlu0 %3208
      %3210 = vrot.lane.b32.xlu0 %v3136, 32
      %v3211 = vpop.permute.xlu0 %3210
      %3212 = vrot.lane.b32.xlu0 %v3137, 32
      %v3213 = vpop.permute.xlu0 %3212
      %3214 = vrot.lane.b32.xlu0 %v3138, 32
      %v3215 = vpop.permute.xlu0 %3214
      %3216 = vrot.lane.b32.xlu0 %v3139, 32
      %v3217 = vpop.permute.xlu0 %3216
      %3218 = vrot.lane.b32.xlu0 %v3140, 32
      %v3219 = vpop.permute.xlu0 %3218
      %3220 = vrot.lane.b32.xlu0 %v3141, 32
      %v3221 = vpop.permute.xlu0 %3220
      %v3238 = vmul.f32 %v3095, %v3191
      %v3239 = vmul.f32 %v3097, %v3193
      %v3240 = vmul.f32 %v3099, %v3195
      %v3241 = vmul.f32 %v3101, %v3197
      %v3242 = vmul.f32 %v3103, %v3199
      %v3243 = vmul.f32 %v3105, %v3201
      %v3244 = vmul.f32 %v3107, %v3203
      %v3245 = vmul.f32 %v3109, %v3205
      %v3246 = vmul.f32 %v3111, %v3207
      %v3247 = vmul.f32 %v3113, %v3209
      %v3248 = vmul.f32 %v3115, %v3211
      %v3249 = vmul.f32 %v3117, %v3213
      %v3250 = vmul.f32 %v3119, %v3215
      %v3251 = vmul.f32 %v3121, %v3217
      %v3252 = vmul.f32 %v3123, %v3219
      %v3253 = vmul.f32 %v3125, %v3221
      %3270 = vrot.lane.b32.xlu0 %v3238, 32
      %v3271 = vpop.permute.xlu0 %3270
      %3272 = vrot.lane.b32.xlu0 %v3239, 32
      %v3273 = vpop.permute.xlu0 %3272
      %3274 = vrot.lane.b32.xlu0 %v3240, 32
      %v3275 = vpop.permute.xlu0 %3274
      %3276 = vrot.lane.b32.xlu0 %v3241, 32
      %v3277 = vpop.permute.xlu0 %3276
      %3278 = vrot.lane.b32.xlu0 %v3242, 32
      %v3279 = vpop.permute.xlu0 %3278
      %3280 = vrot.lane.b32.xlu0 %v3243, 32
      %v3281 = vpop.permute.xlu0 %3280
      %3282 = vrot.lane.b32.xlu0 %v3244, 32
      %v3283 = vpop.permute.xlu0 %3282
      %3284 = vrot.lane.b32.xlu0 %v3245, 32
      %v3285 = vpop.permute.xlu0 %3284
      %3286 = vrot.lane.b32.xlu0 %v3246, 32
      %v3287 = vpop.permute.xlu0 %3286
      %3288 = vrot.lane.b32.xlu0 %v3247, 32
      %v3289 = vpop.permute.xlu0 %3288
      %3290 = vrot.lane.b32.xlu0 %v3248, 32
      %v3291 = vpop.permute.xlu0 %3290
      %3292 = vrot.lane.b32.xlu0 %v3249, 32
      %v3293 = vpop.permute.xlu0 %3292
      %3294 = vrot.lane.b32.xlu0 %v3250, 32
      %v3295 = vpop.permute.xlu0 %3294
      %3296 = vrot.lane.b32.xlu0 %v3251, 32
      %v3297 = vpop.permute.xlu0 %3296
      %3298 = vrot.lane.b32.xlu0 %v3252, 32
      %v3299 = vpop.permute.xlu0 %3298
      %3300 = vrot.lane.b32.xlu0 %v3253, 32
      %v3301 = vpop.permute.xlu0 %3300
      %v3318 = vadd.f32 %v3158, %v3271
      %v3319 = vadd.f32 %v3159, %v3273
      %v3320 = vadd.f32 %v3160, %v3275
      %v3321 = vadd.f32 %v3161, %v3277
      %v3322 = vadd.f32 %v3162, %v3279
      %v3323 = vadd.f32 %v3163, %v3281
      %v3324 = vadd.f32 %v3164, %v3283
      %v3325 = vadd.f32 %v3165, %v3285
      %v3326 = vadd.f32 %v3166, %v3287
      %v3327 = vadd.f32 %v3167, %v3289
      %v3328 = vadd.f32 %v3168, %v3291
      %v3329 = vadd.f32 %v3169, %v3293
      %v3330 = vadd.f32 %v3170, %v3295
      %v3331 = vadd.f32 %v3171, %v3297
      %v3332 = vadd.f32 %v3172, %v3299
      %v3333 = vadd.f32 %v3173, %v3301
      %v3334 = vtanh.pop %v3318
      %v3335 = vtanh.pop %v3319
      %v3336 = vtanh.pop %v3320
      %v3337 = vtanh.pop %v3321
      %v3338 = vtanh.pop %v3322
      %v3339 = vtanh.pop %v3323
      %v3340 = vtanh.pop %v3324
      %v3341 = vtanh.pop %v3325
      %v3342 = vtanh.pop %v3326
      %v3343 = vtanh.pop %v3327
      %v3344 = vtanh.pop %v3328
      %v3345 = vtanh.pop %v3329
      %v3346 = vtanh.pop %v3330
      %v3347 = vtanh.pop %v3331
      %v3348 = vtanh.pop %v3332
      %v3349 = vtanh.pop %v3333
      %3366 = vrot.lane.b32.xlu0 %v3334, 32
      %v3367 = vpop.permute.xlu0 %3366
      %3368 = vrot.lane.b32.xlu0 %v3335, 32
      %v3369 = vpop.permute.xlu0 %3368
      %3370 = vrot.lane.b32.xlu0 %v3336, 32
      %v3371 = vpop.permute.xlu0 %3370
      %3372 = vrot.lane.b32.xlu0 %v3337, 32
      %v3373 = vpop.permute.xlu0 %3372
      %3374 = vrot.lane.b32.xlu0 %v3338, 32
      %v3375 = vpop.permute.xlu0 %3374
      %3376 = vrot.lane.b32.xlu0 %v3339, 32
      %v3377 = vpop.permute.xlu0 %3376
      %3378 = vrot.lane.b32.xlu0 %v3340, 32
      %v3379 = vpop.permute.xlu0 %3378
      %3380 = vrot.lane.b32.xlu0 %v3341, 32
      %v3381 = vpop.permute.xlu0 %3380
      %3382 = vrot.lane.b32.xlu0 %v3342, 32
      %v3383 = vpop.permute.xlu0 %3382
      %3384 = vrot.lane.b32.xlu0 %v3343, 32
      %v3385 = vpop.permute.xlu0 %3384
      %3386 = vrot.lane.b32.xlu0 %v3344, 32
      %v3387 = vpop.permute.xlu0 %3386
      %3388 = vrot.lane.b32.xlu0 %v3345, 32
      %v3389 = vpop.permute.xlu0 %3388
      %3390 = vrot.lane.b32.xlu0 %v3346, 32
      %v3391 = vpop.permute.xlu0 %3390
      %3392 = vrot.lane.b32.xlu0 %v3347, 32
      %v3393 = vpop.permute.xlu0 %3392
      %3394 = vrot.lane.b32.xlu0 %v3348, 32
      %v3395 = vpop.permute.xlu0 %3394
      %3396 = vrot.lane.b32.xlu0 %v3349, 32
      %v3397 = vpop.permute.xlu0 %3396
      %v3414 = vmul.f32 %v3095, %v3367
      %v3415 = vmul.f32 %v3097, %v3369
      %v3416 = vmul.f32 %v3099, %v3371
      %v3417 = vmul.f32 %v3101, %v3373
      %v3418 = vmul.f32 %v3103, %v3375
      %v3419 = vmul.f32 %v3105, %v3377
      %v3420 = vmul.f32 %v3107, %v3379
      %v3421 = vmul.f32 %v3109, %v3381
      %v3422 = vmul.f32 %v3111, %v3383
      %v3423 = vmul.f32 %v3113, %v3385
      %v3424 = vmul.f32 %v3115, %v3387
      %v3425 = vmul.f32 %v3117, %v3389
      %v3426 = vmul.f32 %v3119, %v3391
      %v3427 = vmul.f32 %v3121, %v3393
      %v3428 = vmul.f32 %v3123, %v3395
      %v3429 = vmul.f32 %v3125, %v3397
      %v3430 = vld [vmem:[%s266] sm:$0xff]
      %v3431 = vld [vmem:[%s266 + $0x8] sm:$0xff]
      %v3432 = vld [vmem:[%s266 + $0x10] sm:$0xff]
      %v3433 = vld [vmem:[%s266 + $0x18] sm:$0xff]
      %v3434 = vld [vmem:[%s266 + $0x20] sm:$0xff]
      %v3435 = vld [vmem:[%s266 + $0x28] sm:$0xff]
      %v3436 = vld [vmem:[%s266 + $0x30] sm:$0xff]
      %v3437 = vld [vmem:[%s266 + $0x38] sm:$0xff]
      %v3438 = vld [vmem:[%s266 + $0x40] sm:$0xff]
      %v3439 = vld [vmem:[%s266 + $0x48] sm:$0xff]
      %v3440 = vld [vmem:[%s266 + $0x50] sm:$0xff]
      %v3441 = vld [vmem:[%s266 + $0x58] sm:$0xff]
      %v3442 = vld [vmem:[%s266 + $0x60] sm:$0xff]
      %v3443 = vld [vmem:[%s266 + $0x68] sm:$0xff]
      %v3444 = vld [vmem:[%s266 + $0x70] sm:$0xff]
      %v3445 = vld [vmem:[%s266 + $0x78] sm:$0xff]
      %3478 = vrot.lane.b32.xlu0 %v2453, 64
      %v3479 = vpop.permute.xlu0 %3478
      %3480 = vrot.lane.b32.xlu0 %v2454, 64
      %v3481 = vpop.permute.xlu0 %3480
      %3482 = vrot.lane.b32.xlu0 %v2455, 64
      %v3483 = vpop.permute.xlu0 %3482
      %3484 = vrot.lane.b32.xlu0 %v2456, 64
      %v3485 = vpop.permute.xlu0 %3484
      %3486 = vrot.lane.b32.xlu0 %v2457, 64
      %v3487 = vpop.permute.xlu0 %3486
      %3488 = vrot.lane.b32.xlu0 %v2458, 64
      %v3489 = vpop.permute.xlu0 %3488
      %3490 = vrot.lane.b32.xlu0 %v2459, 64
      %v3491 = vpop.permute.xlu0 %3490
      %3492 = vrot.lane.b32.xlu0 %v2460, 64
      %v3493 = vpop.permute.xlu0 %3492
      %3494 = vrot.lane.b32.xlu0 %v2461, 64
      %v3495 = vpop.permute.xlu0 %3494
      %3496 = vrot.lane.b32.xlu0 %v2462, 64
      %v3497 = vpop.permute.xlu0 %3496
      %3498 = vrot.lane.b32.xlu0 %v2463, 64
      %v3499 = vpop.permute.xlu0 %3498
      %3500 = vrot.lane.b32.xlu0 %v2464, 64
      %v3501 = vpop.permute.xlu0 %3500
      %3502 = vrot.lane.b32.xlu0 %v2465, 64
      %v3503 = vpop.permute.xlu0 %3502
      %3504 = vrot.lane.b32.xlu0 %v2466, 64
      %v3505 = vpop.permute.xlu0 %3504
      %3506 = vrot.lane.b32.xlu0 %v2467, 64
      %v3507 = vpop.permute.xlu0 %3506
      %3508 = vrot.lane.b32.xlu0 %v2468, 64
      %v3509 = vpop.permute.xlu0 %3508
      %3510 = vrot.lane.b32.xlu0 %v3414, 64
      %v3511 = vpop.permute.xlu0 %3510
      %3512 = vrot.lane.b32.xlu0 %v3415, 64
      %v3513 = vpop.permute.xlu0 %3512
      %3514 = vrot.lane.b32.xlu0 %v3416, 64
      %v3515 = vpop.permute.xlu0 %3514
      %3516 = vrot.lane.b32.xlu0 %v3417, 64
      %v3517 = vpop.permute.xlu0 %3516
      %3518 = vrot.lane.b32.xlu0 %v3418, 64
      %v3519 = vpop.permute.xlu0 %3518
      %3520 = vrot.lane.b32.xlu0 %v3419, 64
      %v3521 = vpop.permute.xlu0 %3520
      %3522 = vrot.lane.b32.xlu0 %v3420, 64
      %v3523 = vpop.permute.xlu0 %3522
      %3524 = vrot.lane.b32.xlu0 %v3421, 64
      %v3525 = vpop.permute.xlu0 %3524
      %3526 = vrot.lane.b32.xlu0 %v3422, 64
      %v3527 = vpop.permute.xlu0 %3526
      %3528 = vrot.lane.b32.xlu0 %v3423, 64
      %v3529 = vpop.permute.xlu0 %3528
      %3530 = vrot.lane.b32.xlu0 %v3424, 64
      %v3531 = vpop.permute.xlu0 %3530
      %3532 = vrot.lane.b32.xlu0 %v3425, 64
      %v3533 = vpop.permute.xlu0 %3532
      %3534 = vrot.lane.b32.xlu0 %v3426, 64
      %v3535 = vpop.permute.xlu0 %3534
      %3536 = vrot.lane.b32.xlu0 %v3427, 64
      %v3537 = vpop.permute.xlu0 %3536
      %3538 = vrot.lane.b32.xlu0 %v3428, 64
      %v3539 = vpop.permute.xlu0 %3538
      %3540 = vrot.lane.b32.xlu0 %v3429, 64
      %v3541 = vpop.permute.xlu0 %3540
      %3606 = vrot.lane.b32.xlu0 %v3430, 96
      %v3607 = vpop.permute.xlu0 %3606
      %3608 = vrot.lane.b32.xlu0 %v3431, 96
      %v3609 = vpop.permute.xlu0 %3608
      %3610 = vrot.lane.b32.xlu0 %v3432, 96
      %v3611 = vpop.permute.xlu0 %3610
      %3612 = vrot.lane.b32.xlu0 %v3433, 96
      %v3613 = vpop.permute.xlu0 %3612
      %3614 = vrot.lane.b32.xlu0 %v3434, 96
      %v3615 = vpop.permute.xlu0 %3614
      %3616 = vrot.lane.b32.xlu0 %v3435, 96
      %v3617 = vpop.permute.xlu0 %3616
      %3618 = vrot.lane.b32.xlu0 %v3436, 96
      %v3619 = vpop.permute.xlu0 %3618
      %3620 = vrot.lane.b32.xlu0 %v3437, 96
      %v3621 = vpop.permute.xlu0 %3620
      %3622 = vrot.lane.b32.xlu0 %v3438, 96
      %v3623 = vpop.permute.xlu0 %3622
      %3624 = vrot.lane.b32.xlu0 %v3439, 96
      %v3625 = vpop.permute.xlu0 %3624
      %3626 = vrot.lane.b32.xlu0 %v3440, 96
      %v3627 = vpop.permute.xlu0 %3626
      %3628 = vrot.lane.b32.xlu0 %v3441, 96
      %v3629 = vpop.permute.xlu0 %3628
      %3630 = vrot.lane.b32.xlu0 %v3442, 96
      %v3631 = vpop.permute.xlu0 %3630
      %3632 = vrot.lane.b32.xlu0 %v3443, 96
      %v3633 = vpop.permute.xlu0 %3632
      %3634 = vrot.lane.b32.xlu0 %v3444, 96
      %v3635 = vpop.permute.xlu0 %3634
      %3636 = vrot.lane.b32.xlu0 %v3445, 96
      %v3637 = vpop.permute.xlu0 %3636
      %3638 = vrot.lane.b32.xlu0 %v3142, 96
      %v3639 = vpop.permute.xlu0 %3638
      %3640 = vrot.lane.b32.xlu0 %v3143, 96
      %v3641 = vpop.permute.xlu0 %3640
      %3642 = vrot.lane.b32.xlu0 %v3144, 96
      %v3643 = vpop.permute.xlu0 %3642
      %3644 = vrot.lane.b32.xlu0 %v3145, 96
      %v3645 = vpop.permute.xlu0 %3644
      %3646 = vrot.lane.b32.xlu0 %v3146, 96
      %v3647 = vpop.permute.xlu0 %3646
      %3648 = vrot.lane.b32.xlu0 %v3147, 96
      %v3649 = vpop.permute.xlu0 %3648
      %3650 = vrot.lane.b32.xlu0 %v3148, 96
      %v3651 = vpop.permute.xlu0 %3650
      %3652 = vrot.lane.b32.xlu0 %v3149, 96
      %v3653 = vpop.permute.xlu0 %3652
      %3654 = vrot.lane.b32.xlu0 %v3150, 96
      %v3655 = vpop.permute.xlu0 %3654
      %3656 = vrot.lane.b32.xlu0 %v3151, 96
      %v3657 = vpop.permute.xlu0 %3656
      %3658 = vrot.lane.b32.xlu0 %v3152, 96
      %v3659 = vpop.permute.xlu0 %3658
      %3660 = vrot.lane.b32.xlu0 %v3153, 96
      %v3661 = vpop.permute.xlu0 %3660
      %3662 = vrot.lane.b32.xlu0 %v3154, 96
      %v3663 = vpop.permute.xlu0 %3662
      %3664 = vrot.lane.b32.xlu0 %v3155, 96
      %v3665 = vpop.permute.xlu0 %3664
      %3666 = vrot.lane.b32.xlu0 %v3156, 96
      %v3667 = vpop.permute.xlu0 %3666
      %3668 = vrot.lane.b32.xlu0 %v3157, 96
      %v3669 = vpop.permute.xlu0 %3668
      %vm3702 = vcmask 261120
      %v3703 = vsel %vm3702, %v3479, %v3607
      %v3704 = vsel %vm3702, %v3481, %v3609
      %v3705 = vsel %vm3702, %v3483, %v3611
      %v3706 = vsel %vm3702, %v3485, %v3613
      %v3707 = vsel %vm3702, %v3487, %v3615
      %v3708 = vsel %vm3702, %v3489, %v3617
      %v3709 = vsel %vm3702, %v3491, %v3619
      %v3710 = vsel %vm3702, %v3493, %v3621
      %v3711 = vsel %vm3702, %v3495, %v3623
      %v3712 = vsel %vm3702, %v3497, %v3625
      %v3713 = vsel %vm3702, %v3499, %v3627
      %v3714 = vsel %vm3702, %v3501, %v3629
      %v3715 = vsel %vm3702, %v3503, %v3631
      %v3716 = vsel %vm3702, %v3505, %v3633
      %v3717 = vsel %vm3702, %v3507, %v3635
      %v3718 = vsel %vm3702, %v3509, %v3637
      %v3719 = vsel %vm3702, %v3511, %v3639
      %v3720 = vsel %vm3702, %v3513, %v3641
      %v3721 = vsel %vm3702, %v3515, %v3643
      %v3722 = vsel %vm3702, %v3517, %v3645
      %v3723 = vsel %vm3702, %v3519, %v3647
      %v3724 = vsel %vm3702, %v3521, %v3649
      %v3725 = vsel %vm3702, %v3523, %v3651
      %v3726 = vsel %vm3702, %v3525, %v3653
      %v3727 = vsel %vm3702, %v3527, %v3655
      %v3728 = vsel %vm3702, %v3529, %v3657
      %v3729 = vsel %vm3702, %v3531, %v3659
      %v3730 = vsel %vm3702, %v3533, %v3661
      %v3731 = vsel %vm3702, %v3535, %v3663
      %v3732 = vsel %vm3702, %v3537, %v3665
      %v3733 = vsel %vm3702, %v3539, %v3667
      %v3734 = vsel %vm3702, %v3541, %v3669
      %v3767 = vrot.slane %v3703, 7
      %v3768 = vrot.slane %v3704, 7
      %v3769 = vsel %vm564, %v3767, %v3768
      %v3770 = vrot.slane %v3705, 7
      %v3771 = vrot.slane %v3706, 7
      %v3772 = vsel %vm564, %v3770, %v3771
      %v3773 = vrot.slane %v3707, 7
      %v3774 = vrot.slane %v3708, 7
      %v3775 = vsel %vm564, %v3773, %v3774
      %v3776 = vrot.slane %v3709, 7
      %v3777 = vrot.slane %v3710, 7
      %v3778 = vsel %vm564, %v3776, %v3777
      %v3779 = vrot.slane %v3711, 7
      %v3780 = vrot.slane %v3712, 7
      %v3781 = vsel %vm564, %v3779, %v3780
      %v3782 = vrot.slane %v3713, 7
      %v3783 = vrot.slane %v3714, 7
      %v3784 = vsel %vm564, %v3782, %v3783
      %v3785 = vrot.slane %v3715, 7
      %v3786 = vrot.slane %v3716, 7
      %v3787 = vsel %vm564, %v3785, %v3786
      %v3788 = vrot.slane %v3717, 7
      %v3789 = vrot.slane %v3718, 7
      %v3790 = vsel %vm564, %v3788, %v3789
      %v3791 = vrot.slane %v3719, 7
      %v3792 = vrot.slane %v3720, 7
      %v3793 = vsel %vm564, %v3791, %v3792
      %v3794 = vrot.slane %v3721, 7
      %v3795 = vrot.slane %v3722, 7
      %v3796 = vsel %vm564, %v3794, %v3795
      %v3797 = vrot.slane %v3723, 7
      %v3798 = vrot.slane %v3724, 7
      %v3799 = vsel %vm564, %v3797, %v3798
      %v3800 = vrot.slane %v3725, 7
      %v3801 = vrot.slane %v3726, 7
      %v3802 = vsel %vm564, %v3800, %v3801
      %v3803 = vrot.slane %v3727, 7
      %v3804 = vrot.slane %v3728, 7
      %v3805 = vsel %vm564, %v3803, %v3804
      %v3806 = vrot.slane %v3729, 7
      %v3807 = vrot.slane %v3730, 7
      %v3808 = vsel %vm564, %v3806, %v3807
      %v3809 = vrot.slane %v3731, 7
      %v3810 = vrot.slane %v3732, 7
      %v3811 = vsel %vm564, %v3809, %v3810
      %v3812 = vrot.slane %v3733, 7
      %v3813 = vrot.slane %v3734, 7
      %v3814 = vsel %vm564, %v3812, %v3813
      %v3847 = vsel %vm564, 0.0, %v3767
      %v3848 = vsel %vm564, 0.0, %v3770
      %v3849 = vsel %vm564, 0.0, %v3773
      %v3850 = vsel %vm564, 0.0, %v3776
      %v3851 = vsel %vm564, 0.0, %v3779
      %v3852 = vsel %vm564, 0.0, %v3782
      %v3853 = vsel %vm564, 0.0, %v3785
      %v3854 = vsel %vm564, 0.0, %v3788
      %v3855 = vsel %vm564, 0.0, %v3791
      %v3856 = vsel %vm564, 0.0, %v3794
      %v3857 = vsel %vm564, 0.0, %v3797
      %v3858 = vsel %vm564, 0.0, %v3800
      %v3859 = vsel %vm564, 0.0, %v3803
      %v3860 = vsel %vm564, 0.0, %v3806
      %v3861 = vsel %vm564, 0.0, %v3809
      %v3862 = vsel %vm564, 0.0, %v3812
      %v3863 = vrot.slane %v3703, 1
      %v3864 = vrot.slane %v3704, 1
      %v3865 = vsel %vm666, %v3863, %v3864
      %v3866 = vrot.slane %v3705, 1
      %v3867 = vrot.slane %v3706, 1
      %v3868 = vsel %vm666, %v3866, %v3867
      %v3869 = vrot.slane %v3707, 1
      %v3870 = vrot.slane %v3708, 1
      %v3871 = vsel %vm666, %v3869, %v3870
      %v3872 = vrot.slane %v3709, 1
      %v3873 = vrot.slane %v3710, 1
      %v3874 = vsel %vm666, %v3872, %v3873
      %v3875 = vrot.slane %v3711, 1
      %v3876 = vrot.slane %v3712, 1
      %v3877 = vsel %vm666, %v3875, %v3876
      %v3878 = vrot.slane %v3713, 1
      %v3879 = vrot.slane %v3714, 1
      %v3880 = vsel %vm666, %v3878, %v3879
      %v3881 = vrot.slane %v3715, 1
      %v3882 = vrot.slane %v3716, 1
      %v3883 = vsel %vm666, %v3881, %v3882
      %v3884 = vrot.slane %v3717, 1
      %v3885 = vrot.slane %v3718, 1
      %v3886 = vsel %vm666, %v3884, %v3885
      %v3887 = vrot.slane %v3719, 1
      %v3888 = vrot.slane %v3720, 1
      %v3889 = vsel %vm666, %v3887, %v3888
      %v3890 = vrot.slane %v3721, 1
      %v3891 = vrot.slane %v3722, 1
      %v3892 = vsel %vm666, %v3890, %v3891
      %v3893 = vrot.slane %v3723, 1
      %v3894 = vrot.slane %v3724, 1
      %v3895 = vsel %vm666, %v3893, %v3894
      %v3896 = vrot.slane %v3725, 1
      %v3897 = vrot.slane %v3726, 1
      %v3898 = vsel %vm666, %v3896, %v3897
      %v3899 = vrot.slane %v3727, 1
      %v3900 = vrot.slane %v3728, 1
      %v3901 = vsel %vm666, %v3899, %v3900
      %v3902 = vrot.slane %v3729, 1
      %v3903 = vrot.slane %v3730, 1
      %v3904 = vsel %vm666, %v3902, %v3903
      %v3905 = vrot.slane %v3731, 1
      %v3906 = vrot.slane %v3732, 1
      %v3907 = vsel %vm666, %v3905, %v3906
      %v3908 = vrot.slane %v3733, 1
      %v3909 = vrot.slane %v3734, 1
      %v3910 = vsel %vm666, %v3908, %v3909
      %v3944 = vsel %vm666, %v3864, 0.0
      %v3945 = vsel %vm666, %v3867, 0.0
      %v3946 = vsel %vm666, %v3870, 0.0
      %v3947 = vsel %vm666, %v3873, 0.0
      %v3948 = vsel %vm666, %v3876, 0.0
      %v3949 = vsel %vm666, %v3879, 0.0
      %v3950 = vsel %vm666, %v3882, 0.0
      %v3951 = vsel %vm666, %v3885, 0.0
      %v3952 = vsel %vm666, %v3888, 0.0
      %v3953 = vsel %vm666, %v3891, 0.0
      %v3954 = vsel %vm666, %v3894, 0.0
      %v3955 = vsel %vm666, %v3897, 0.0
      %v3956 = vsel %vm666, %v3900, 0.0
      %v3957 = vsel %vm666, %v3903, 0.0
      %v3958 = vsel %vm666, %v3906, 0.0
      %v3959 = vsel %vm666, %v3909, 0.0
      %3960 = vrot.lane.b32.xlu0 0.0, 64
      %v3961 = vpop.permute.xlu0 %3960
      %3962 = vrot.lane.b32.xlu0 %v3703, 64
      %v3963 = vpop.permute.xlu0 %3962
      %3964 = vrot.lane.b32.xlu0 %v3704, 64
      %v3965 = vpop.permute.xlu0 %3964
      %3966 = vrot.lane.b32.xlu0 %v3705, 64
      %v3967 = vpop.permute.xlu0 %3966
      %3968 = vrot.lane.b32.xlu0 %v3706, 64
      %v3969 = vpop.permute.xlu0 %3968
      %3970 = vrot.lane.b32.xlu0 %v3707, 64
      %v3971 = vpop.permute.xlu0 %3970
      %3972 = vrot.lane.b32.xlu0 %v3708, 64
      %v3973 = vpop.permute.xlu0 %3972
      %3974 = vrot.lane.b32.xlu0 %v3709, 64
      %v3975 = vpop.permute.xlu0 %3974
      %3976 = vrot.lane.b32.xlu0 %v3710, 64
      %v3977 = vpop.permute.xlu0 %3976
      %3978 = vrot.lane.b32.xlu0 %v3711, 64
      %v3979 = vpop.permute.xlu0 %3978
      %3980 = vrot.lane.b32.xlu0 %v3712, 64
      %v3981 = vpop.permute.xlu0 %3980
      %3982 = vrot.lane.b32.xlu0 %v3713, 64
      %v3983 = vpop.permute.xlu0 %3982
      %3984 = vrot.lane.b32.xlu0 %v3714, 64
      %v3985 = vpop.permute.xlu0 %3984
      %3986 = vrot.lane.b32.xlu0 %v3715, 64
      %v3987 = vpop.permute.xlu0 %3986
      %3988 = vrot.lane.b32.xlu0 %v3716, 64
      %v3989 = vpop.permute.xlu0 %3988
      %3990 = vrot.lane.b32.xlu0 %v3717, 64
      %v3991 = vpop.permute.xlu0 %3990
      %3992 = vrot.lane.b32.xlu0 %v3718, 64
      %v3993 = vpop.permute.xlu0 %3992
      %3994 = vrot.lane.b32.xlu0 %v3719, 64
      %v3995 = vpop.permute.xlu0 %3994
      %3996 = vrot.lane.b32.xlu0 %v3720, 64
      %v3997 = vpop.permute.xlu0 %3996
      %3998 = vrot.lane.b32.xlu0 %v3721, 64
      %v3999 = vpop.permute.xlu0 %3998
      %4000 = vrot.lane.b32.xlu0 %v3722, 64
      %v4001 = vpop.permute.xlu0 %4000
      %4002 = vrot.lane.b32.xlu0 %v3723, 64
      %v4003 = vpop.permute.xlu0 %4002
      %4004 = vrot.lane.b32.xlu0 %v3724, 64
      %v4005 = vpop.permute.xlu0 %4004
      %4006 = vrot.lane.b32.xlu0 %v3725, 64
      %v4007 = vpop.permute.xlu0 %4006
      %4008 = vrot.lane.b32.xlu0 %v3726, 64
      %v4009 = vpop.permute.xlu0 %4008
      %4010 = vrot.lane.b32.xlu0 %v3727, 64
      %v4011 = vpop.permute.xlu0 %4010
      %4012 = vrot.lane.b32.xlu0 %v3728, 64
      %v4013 = vpop.permute.xlu0 %4012
      %4014 = vrot.lane.b32.xlu0 %v3729, 64
      %v4015 = vpop.permute.xlu0 %4014
      %4016 = vrot.lane.b32.xlu0 %v3730, 64
      %v4017 = vpop.permute.xlu0 %4016
      %4018 = vrot.lane.b32.xlu0 %v3731, 64
      %v4019 = vpop.permute.xlu0 %4018
      %4020 = vrot.lane.b32.xlu0 %v3732, 64
      %v4021 = vpop.permute.xlu0 %4020
      %4022 = vrot.lane.b32.xlu0 %v3733, 64
      %v4023 = vpop.permute.xlu0 %4022
      %4024 = vrot.lane.b32.xlu0 %v3734, 64
      %v4025 = vpop.permute.xlu0 %4024
      %vm4059 = vcmask 523264
      %v4060 = vsel %vm4059, %v649, %v3961
      %v4061 = vsel %vm4059, %v566, %v3961
      %v4062 = vsel %vm4059, %v3847, %v3963
      %v4063 = vsel %vm4059, %v3769, %v3965
      %v4064 = vsel %vm4059, %v3848, %v3967
      %v4065 = vsel %vm4059, %v3772, %v3969
      %v4066 = vsel %vm4059, %v3849, %v3971
      %v4067 = vsel %vm4059, %v3775, %v3973
      %v4068 = vsel %vm4059, %v3850, %v3975
      %v4069 = vsel %vm4059, %v3778, %v3977
      %v4070 = vsel %vm4059, %v3851, %v3979
      %v4071 = vsel %vm4059, %v3781, %v3981
      %v4072 = vsel %vm4059, %v3852, %v3983
      %v4073 = vsel %vm4059, %v3784, %v3985
      %v4074 = vsel %vm4059, %v3853, %v3987
      %v4075 = vsel %vm4059, %v3787, %v3989
      %v4076 = vsel %vm4059, %v3854, %v3991
      %v4077 = vsel %vm4059, %v3790, %v3993
      %v4078 = vsel %vm4059, %v3855, %v3995
      %v4079 = vsel %vm4059, %v3793, %v3997
      %v4080 = vsel %vm4059, %v3856, %v3999
      %v4081 = vsel %vm4059, %v3796, %v4001
      %v4082 = vsel %vm4059, %v3857, %v4003
      %v4083 = vsel %vm4059, %v3799, %v4005
      %v4084 = vsel %vm4059, %v3858, %v4007
      %v4085 = vsel %vm4059, %v3802, %v4009
      %v4086 = vsel %vm4059, %v3859, %v4011
      %v4087 = vsel %vm4059, %v3805, %v4013
      %v4088 = vsel %vm4059, %v3860, %v4015
      %v4089 = vsel %vm4059, %v3808, %v4017
      %v4090 = vsel %vm4059, %v3861, %v4019
      %v4091 = vsel %vm4059, %v3811, %v4021
      %v4092 = vsel %vm4059, %v3862, %v4023
      %v4093 = vsel %vm4059, %v3814, %v4025
      %v4094 = vpack.c.bf16 %v4061, %v4060
      %v4095 = vpack.c.bf16 %v734, %v668
      %v4096 = vpack.c.bf16 %v4063, %v4062
      %v4097 = vpack.c.bf16 %v3944, %v3865
      %v4098 = vpack.c.bf16 %v4065, %v4064
      %v4099 = vpack.c.bf16 %v3945, %v3868
      %v4100 = vpack.c.bf16 %v4067, %v4066
      %v4101 = vpack.c.bf16 %v3946, %v3871
      %v4102 = vpack.c.bf16 %v4069, %v4068
      %v4103 = vpack.c.bf16 %v3947, %v3874
      %v4104 = vpack.c.bf16 %v4071, %v4070
      %v4105 = vpack.c.bf16 %v3948, %v3877
      %v4106 = vpack.c.bf16 %v4073, %v4072
      %v4107 = vpack.c.bf16 %v3949, %v3880
      %v4108 = vpack.c.bf16 %v4075, %v4074
      %v4109 = vpack.c.bf16 %v3950, %v3883
      %v4110 = vpack.c.bf16 %v4077, %v4076
      %v4111 = vpack.c.bf16 %v3951, %v3886
      %v4112 = vpack.c.bf16 %v4079, %v4078
      %v4113 = vpack.c.bf16 %v3952, %v3889
      %v4114 = vpack.c.bf16 %v4081, %v4080
      %v4115 = vpack.c.bf16 %v3953, %v3892
      %v4116 = vpack.c.bf16 %v4083, %v4082
      %v4117 = vpack.c.bf16 %v3954, %v3895
      %v4118 = vpack.c.bf16 %v4085, %v4084
      %v4119 = vpack.c.bf16 %v3955, %v3898
      %v4120 = vpack.c.bf16 %v4087, %v4086
      %v4121 = vpack.c.bf16 %v3956, %v3901
      %v4122 = vpack.c.bf16 %v4089, %v4088
      %v4123 = vpack.c.bf16 %v3957, %v3904
      %v4124 = vpack.c.bf16 %v4091, %v4090
      %v4125 = vpack.c.bf16 %v3958, %v3907
      %v4126 = vpack.c.bf16 %v4093, %v4092
      %v4127 = vpack.c.bf16 %v3959, %v3910
      %v4162 = vunpack.c.l.b16 %v4094
      %v4163 = vunpack.c.l.b16 %v4095
      %v4164 = vunpack.c.h.b16 %v4094
      %v4165 = vunpack.c.h.b16 %v4095
      %v4166 = vunpack.c.l.b16 %v4096
      %v4167 = vunpack.c.l.b16 %v4097
      %v4168 = vunpack.c.h.b16 %v4096
      %v4169 = vunpack.c.h.b16 %v4097
      %v4170 = vunpack.c.l.b16 %v4098
      %v4171 = vunpack.c.l.b16 %v4099
      %v4172 = vunpack.c.h.b16 %v4098
      %v4173 = vunpack.c.h.b16 %v4099
      %v4174 = vunpack.c.l.b16 %v4100
      %v4175 = vunpack.c.l.b16 %v4101
      %v4176 = vunpack.c.h.b16 %v4100
      %v4177 = vunpack.c.h.b16 %v4101
      %v4178 = vunpack.c.l.b16 %v4102
      %v4179 = vunpack.c.l.b16 %v4103
      %v4180 = vunpack.c.h.b16 %v4102
      %v4181 = vunpack.c.h.b16 %v4103
      %v4182 = vunpack.c.l.b16 %v4104
      %v4183 = vunpack.c.l.b16 %v4105
      %v4184 = vunpack.c.h.b16 %v4104
      %v4185 = vunpack.c.h.b16 %v4105
      %v4186 = vunpack.c.l.b16 %v4106
      %v4187 = vunpack.c.l.b16 %v4107
      %v4188 = vunpack.c.h.b16 %v4106
      %v4189 = vunpack.c.h.b16 %v4107
      %v4190 = vunpack.c.l.b16 %v4108
      %v4191 = vunpack.c.l.b16 %v4109
      %v4192 = vunpack.c.h.b16 %v4108
      %v4193 = vunpack.c.h.b16 %v4109
      %v4194 = vunpack.c.l.b16 %v4110
      %v4195 = vunpack.c.l.b16 %v4111
      %v4196 = vunpack.c.h.b16 %v4110
      %v4197 = vunpack.c.h.b16 %v4111
      %v4198 = vunpack.c.l.b16 %v4112
      %v4199 = vunpack.c.l.b16 %v4113
      %v4200 = vunpack.c.h.b16 %v4112
      %v4201 = vunpack.c.h.b16 %v4113
      %v4202 = vunpack.c.l.b16 %v4114
      %v4203 = vunpack.c.l.b16 %v4115
      %v4204 = vunpack.c.h.b16 %v4114
      %v4205 = vunpack.c.h.b16 %v4115
      %v4206 = vunpack.c.l.b16 %v4116
      %v4207 = vunpack.c.l.b16 %v4117
      %v4208 = vunpack.c.h.b16 %v4116
      %v4209 = vunpack.c.h.b16 %v4117
      %v4210 = vunpack.c.l.b16 %v4118
      %v4211 = vunpack.c.l.b16 %v4119
      %v4212 = vunpack.c.h.b16 %v4118
      %v4213 = vunpack.c.h.b16 %v4119
      %v4214 = vunpack.c.l.b16 %v4120
      %v4215 = vunpack.c.l.b16 %v4121
      %v4216 = vunpack.c.h.b16 %v4120
      %v4217 = vunpack.c.h.b16 %v4121
      %v4218 = vunpack.c.l.b16 %v4122
      %v4219 = vunpack.c.l.b16 %v4123
      %v4220 = vunpack.c.h.b16 %v4122
      %v4221 = vunpack.c.h.b16 %v4123
      %v4222 = vunpack.c.l.b16 %v4124
      %v4223 = vunpack.c.l.b16 %v4125
      %v4224 = vunpack.c.h.b16 %v4124
      %v4225 = vunpack.c.h.b16 %v4125
      %v4226 = vunpack.c.l.b16 %v4126
      %v4227 = vunpack.c.l.b16 %v4127
      %v4228 = vunpack.c.h.b16 %v4126
      %v4229 = vunpack.c.h.b16 %v4127
      %v4230 = vpack.c.b16 %v4163, %v4162
      %v4231 = vpack.c.b16 %v4165, %v4164
      %v4232 = vpack.c.b16 %v4167, %v4166
      %v4233 = vpack.c.b16 %v4169, %v4168
      %v4234 = vpack.c.b16 %v4171, %v4170
      %v4235 = vpack.c.b16 %v4173, %v4172
      %v4236 = vpack.c.b16 %v4175, %v4174
      %v4237 = vpack.c.b16 %v4177, %v4176
      %v4238 = vpack.c.b16 %v4179, %v4178
      %v4239 = vpack.c.b16 %v4181, %v4180
      %v4240 = vpack.c.b16 %v4183, %v4182
      %v4241 = vpack.c.b16 %v4185, %v4184
      %v4242 = vpack.c.b16 %v4187, %v4186
      %v4243 = vpack.c.b16 %v4189, %v4188
      %v4244 = vpack.c.b16 %v4191, %v4190
      %v4245 = vpack.c.b16 %v4193, %v4192
      %v4246 = vpack.c.b16 %v4195, %v4194
      %v4247 = vpack.c.b16 %v4197, %v4196
      %v4248 = vpack.c.b16 %v4199, %v4198
      %v4249 = vpack.c.b16 %v4201, %v4200
      %v4250 = vpack.c.b16 %v4203, %v4202
      %v4251 = vpack.c.b16 %v4205, %v4204
      %v4252 = vpack.c.b16 %v4207, %v4206
      %v4253 = vpack.c.b16 %v4209, %v4208
      %v4254 = vpack.c.b16 %v4211, %v4210
      %v4255 = vpack.c.b16 %v4213, %v4212
      %v4256 = vpack.c.b16 %v4215, %v4214
      %v4257 = vpack.c.b16 %v4217, %v4216
      %v4258 = vpack.c.b16 %v4219, %v4218
      %v4259 = vpack.c.b16 %v4221, %v4220
      %v4260 = vpack.c.b16 %v4223, %v4222
      %v4261 = vpack.c.b16 %v4225, %v4224
      %v4262 = vpack.c.b16 %v4227, %v4226
      %v4263 = vpack.c.b16 %v4229, %v4228
      %vm4298 = vcmask 523268
      %vm4299 = vmor %vm4298, %vm1243
      %4300 = vst.msk [vmem:[#allocation3] sm:$0xff] %vm4299, %v4230
      %4301 = vst.msk [vmem:[#allocation3 + $0x8] sm:$0xff] %vm4299, %v4231
      %4302 = vst.msk [vmem:[#allocation3 + $0x10] sm:$0xff] %vm4299, %v4232
      %4303 = vst.msk [vmem:[#allocation3 + $0x18] sm:$0xff] %vm4299, %v4233
      %4304 = vst.msk [vmem:[#allocation3 + $0x20] sm:$0xff] %vm4299, %v4234
      %4305 = vst.msk [vmem:[#allocation3 + $0x28] sm:$0xff] %vm4299, %v4235
      %4306 = vst.msk [vmem:[#allocation3 + $0x30] sm:$0xff] %vm4299, %v4236
      %4307 = vst.msk [vmem:[#allocation3 + $0x38] sm:$0xff] %vm4299, %v4237
      %4308 = vst.msk [vmem:[#allocation3 + $0x40] sm:$0xff] %vm4299, %v4238
      %4309 = vst.msk [vmem:[#allocation3 + $0x48] sm:$0xff] %vm4299, %v4239
      %4310 = vst.msk [vmem:[#allocation3 + $0x50] sm:$0xff] %vm4299, %v4240
      %4311 = vst.msk [vmem:[#allocation3 + $0x58] sm:$0xff] %vm4299, %v4241
      %4312 = vst.msk [vmem:[#allocation3 + $0x60] sm:$0xff] %vm4299, %v4242
      %4313 = vst.msk [vmem:[#allocation3 + $0x68] sm:$0xff] %vm4299, %v4243
      %4314 = vst.msk [vmem:[#allocation3 + $0x70] sm:$0xff] %vm4299, %v4244
      %4315 = vst.msk [vmem:[#allocation3 + $0x78] sm:$0xff] %vm4299, %v4245
      %4316 = vst.msk [vmem:[#allocation3 + $0x80] sm:$0xff] %vm4299, %v4246
      %4317 = vst.msk [vmem:[#allocation3 + $0x88] sm:$0xff] %vm4299, %v4247
      %4318 = vst.msk [vmem:[#allocation3 + $0x90] sm:$0xff] %vm4299, %v4248
      %4319 = vst.msk [vmem:[#allocation3 + $0x98] sm:$0xff] %vm4299, %v4249
      %4320 = vst.msk [vmem:[#allocation3 + $0xa0] sm:$0xff] %vm4299, %v4250
      %4321 = vst.msk [vmem:[#allocation3 + $0xa8] sm:$0xff] %vm4299, %v4251
      %4322 = vst.msk [vmem:[#allocation3 + $0xb0] sm:$0xff] %vm4299, %v4252
      %4323 = vst.msk [vmem:[#allocation3 + $0xb8] sm:$0xff] %vm4299, %v4253
      %4324 = vst.msk [vmem:[#allocation3 + $0xc0] sm:$0xff] %vm4299, %v4254
      %4325 = vst.msk [vmem:[#allocation3 + $0xc8] sm:$0xff] %vm4299, %v4255
      %4326 = vst.msk [vmem:[#allocation3 + $0xd0] sm:$0xff] %vm4299, %v4256
      %4327 = vst.msk [vmem:[#allocation3 + $0xd8] sm:$0xff] %vm4299, %v4257
      %4328 = vst.msk [vmem:[#allocation3 + $0xe0] sm:$0xff] %vm4299, %v4258
      %4329 = vst.msk [vmem:[#allocation3 + $0xe8] sm:$0xff] %vm4299, %v4259
      %4330 = vst.msk [vmem:[#allocation3 + $0xf0] sm:$0xff] %vm4299, %v4260
      %4331 = vst.msk [vmem:[#allocation3 + $0xf8] sm:$0xff] %vm4299, %v4261
      %4332 = vst.msk [vmem:[#allocation3 + $0x100] sm:$0xff] %vm4299, %v4262
      %4333 = vst.msk [vmem:[#allocation3 + $0x108] sm:$0xff] %vm4299, %v4263
      %4334 = vst.msk [vmem:[#allocation3 + $0x110] sm:$0xff] %vm4299, %v4230
      %4335 = vst.msk [vmem:[#allocation3 + $0x118] sm:$0xff] %vm4299, %v4231
      %v4336 = vld [vmem:[#allocation3] sm:$0xff]
      %v4337 = vld [vmem:[#allocation3 + $0x8] sm:$0xff]
      %v4338 = vld [vmem:[#allocation3 + $0x10] sm:$0xff]
      %v4339 = vld [vmem:[#allocation3 + $0x18] sm:$0xff]
      %v4340 = vld [vmem:[#allocation3 + $0x20] sm:$0xff]
      %v4341 = vld [vmem:[#allocation3 + $0x28] sm:$0xff]
      %v4342 = vld [vmem:[#allocation3 + $0x30] sm:$0xff]
      %v4343 = vld [vmem:[#allocation3 + $0x38] sm:$0xff]
      %v4344 = vld [vmem:[#allocation3 + $0x40] sm:$0xff]
      %v4345 = vld [vmem:[#allocation3 + $0x48] sm:$0xff]
      %v4346 = vld [vmem:[#allocation3 + $0x50] sm:$0xff]
      %v4347 = vld [vmem:[#allocation3 + $0x58] sm:$0xff]
      %v4348 = vld [vmem:[#allocation3 + $0x60] sm:$0xff]
      %v4349 = vld [vmem:[#allocation3 + $0x68] sm:$0xff]
      %v4350 = vld [vmem:[#allocation3 + $0x70] sm:$0xff]
      %v4351 = vld [vmem:[#allocation3 + $0x78] sm:$0xff]
      %v4352 = vld [vmem:[%s4] sm:$0xf]
      %v4353 = vld [vmem:[%s4 + $0x4] sm:$0xf]
      %v4354 = vld [vmem:[%s4 + $0x8] sm:$0xf]
      %v4355 = vld [vmem:[%s4 + $0xc] sm:$0xf]
      %v4356 = vld [vmem:[%s4 + $0x10] sm:$0xf]
      %v4357 = vld [vmem:[%s4 + $0x14] sm:$0xf]
      %v4358 = vld [vmem:[%s4 + $0x18] sm:$0xf]
      %v4359 = vld [vmem:[%s4 + $0x1c] sm:$0xf]
      %v4360 = vld [vmem:[%s4 + $0x20] sm:$0xf]
      %v4361 = vld [vmem:[%s4 + $0x24] sm:$0xf]
      %v4362 = vld [vmem:[%s4 + $0x28] sm:$0xf]
      %v4363 = vld [vmem:[%s4 + $0x2c] sm:$0xf]
      %v4364 = vld [vmem:[%s4 + $0x30] sm:$0xf]
      %v4365 = vld [vmem:[%s4 + $0x34] sm:$0xf]
      %v4366 = vld [vmem:[%s4 + $0x38] sm:$0xf]
      %v4367 = vld [vmem:[%s4 + $0x3c] sm:$0xf]
      %v4368 = vld [vmem:[%s4 + $0x40] sm:$0xf]
      %v4369 = vld [vmem:[%s4 + $0x44] sm:$0xf]
      %v4370 = vld [vmem:[%s4 + $0x48] sm:$0xf]
      %v4371 = vld [vmem:[%s4 + $0x4c] sm:$0xf]
      %v4372 = vld [vmem:[%s4 + $0x50] sm:$0xf]
      %v4373 = vld [vmem:[%s4 + $0x54] sm:$0xf]
      %v4374 = vld [vmem:[%s4 + $0x58] sm:$0xf]
      %v4375 = vld [vmem:[%s4 + $0x5c] sm:$0xf]
      %v4376 = vld [vmem:[#allocation3 + $0x80] sm:$0xff]
      %v4377 = vld [vmem:[#allocation3 + $0x88] sm:$0xff]
      %s4378 = scalar_lea.vmem %s4, 96
      %v4379 = vld [vmem:[%s4378] sm:$0xf]
      %v4380 = vld [vmem:[%s4378 + $0x4] sm:$0xf]
      %v4381 = vld [vmem:[%s4378 + $0x8] sm:$0xf]
      %v4382 = vld [vmem:[%s4378 + $0xc] sm:$0xf]
      %v4383 = vld [vmem:[%s4378 + $0x10] sm:$0xf]
      %v4384 = vld [vmem:[%s4378 + $0x14] sm:$0xf]
      %v4385 = vld [vmem:[%s4378 + $0x18] sm:$0xf]
      %v4386 = vld [vmem:[%s4378 + $0x1c] sm:$0xf]
      %v4387 = vld [vmem:[%s4378 + $0x20] sm:$0xf]
      %v4388 = vld [vmem:[%s4378 + $0x24] sm:$0xf]
      %v4389 = vld [vmem:[%s4378 + $0x28] sm:$0xf]
      %v4390 = vld [vmem:[%s4378 + $0x2c] sm:$0xf]
      %v4391 = vld [vmem:[%s4378 + $0x30] sm:$0xf]
      %v4392 = vld [vmem:[%s4378 + $0x34] sm:$0xf]
      %v4393 = vld [vmem:[%s4378 + $0x38] sm:$0xf]
      %v4394 = vld [vmem:[%s4378 + $0x3c] sm:$0xf]
      %v4395 = vld [vmem:[%s4378 + $0x40] sm:$0xf]
      %v4396 = vld [vmem:[%s4378 + $0x44] sm:$0xf]
      %v4397 = vld [vmem:[%s4378 + $0x48] sm:$0xf]
      %v4398 = vld [vmem:[%s4378 + $0x4c] sm:$0xf]
      %v4399 = vld [vmem:[%s4378 + $0x50] sm:$0xf]
      %v4400 = vld [vmem:[%s4378 + $0x54] sm:$0xf]
      %v4401 = vld [vmem:[%s4378 + $0x58] sm:$0xf]
      %v4402 = vld [vmem:[%s4378 + $0x5c] sm:$0xf]
      %v4419 = vunpack.c.l.b16 %v4338
      %v4420 = vunpack.c.h.b16 %v4338
      %v4421 = vunpack.c.l.b16 %v4339
      %v4422 = vunpack.c.h.b16 %v4339
      %v4423 = vunpack.c.l.b16 %v4340
      %v4424 = vunpack.c.h.b16 %v4340
      %v4425 = vunpack.c.l.b16 %v4341
      %v4426 = vunpack.c.h.b16 %v4341
      %v4427 = vunpack.c.l.b16 %v4342
      %v4428 = vunpack.c.h.b16 %v4342
      %v4429 = vunpack.c.l.b16 %v4343
      %v4430 = vunpack.c.h.b16 %v4343
      %v4431 = vunpack.c.l.b16 %v4344
      %v4432 = vunpack.c.h.b16 %v4344
      %v4433 = vunpack.c.l.b16 %v4345
      %v4434 = vunpack.c.h.b16 %v4345
      %v4435 = vunpack.c.l.b16 %v4346
      %v4436 = vunpack.c.h.b16 %v4346
      %v4437 = vunpack.c.l.b16 %v4347
      %v4438 = vunpack.c.h.b16 %v4347
      %v4439 = vunpack.c.l.b16 %v4348
      %v4440 = vunpack.c.h.b16 %v4348
      %v4441 = vunpack.c.l.b16 %v4349
      %v4442 = vunpack.c.h.b16 %v4349
      %v4443 = vunpack.c.l.b16 %v4350
      %v4444 = vunpack.c.h.b16 %v4350
      %v4445 = vunpack.c.l.b16 %v4351
      %v4446 = vunpack.c.h.b16 %v4351
      %v4447 = vunpack.c.l.b16 %v4376
      %v4448 = vunpack.c.h.b16 %v4376
      %v4449 = vunpack.c.l.b16 %v4377
      %v4450 = vunpack.c.h.b16 %v4377
      %v4451 = vpack.c.b16 %v4421, %v4419
      %v4452 = vpack.c.b16 %v4422, %v4420
      %v4453 = vpack.c.b16 %v4425, %v4423
      %v4454 = vpack.c.b16 %v4426, %v4424
      %v4455 = vpack.c.b16 %v4429, %v4427
      %v4456 = vpack.c.b16 %v4430, %v4428
      %v4457 = vpack.c.b16 %v4433, %v4431
      %v4458 = vpack.c.b16 %v4434, %v4432
      %v4459 = vpack.c.b16 %v4437, %v4435
      %v4460 = vpack.c.b16 %v4438, %v4436
      %v4461 = vpack.c.b16 %v4441, %v4439
      %v4462 = vpack.c.b16 %v4442, %v4440
      %v4463 = vpack.c.b16 %v4445, %v4443
      %v4464 = vpack.c.b16 %v4446, %v4444
      %v4465 = vpack.c.b16 %v4449, %v4447
      %v4466 = vpack.c.b16 %v4450, %v4448
      %v4499 = vunpack.c.l.b16 %v4379
      %v4500 = vunpack.c.l.b16 %v4380
      %v4501 = vunpack.c.l.b16 %v4381
      %v4502 = vunpack.c.l.b16 %v4382
      %v4503 = vunpack.c.l.b16 %v4383
      %v4504 = vunpack.c.l.b16 %v4384
      %v4505 = vunpack.c.l.b16 %v4385
      %v4506 = vunpack.c.l.b16 %v4386
      %v4507 = vunpack.c.l.b16 %v4387
      %v4508 = vunpack.c.l.b16 %v4388
      %v4509 = vunpack.c.l.b16 %v4389
      %v4510 = vunpack.c.l.b16 %v4390
      %v4511 = vunpack.c.l.b16 %v4391
      %v4512 = vunpack.c.l.b16 %v4392
      %v4513 = vunpack.c.l.b16 %v4393
      %v4514 = vunpack.c.l.b16 %v4394
      %v4515 = vunpack.c.l.b16 %v4395
      %v4516 = vunpack.c.l.b16 %v4396
      %v4517 = vunpack.c.l.b16 %v4397
      %v4518 = vunpack.c.l.b16 %v4398
      %v4519 = vunpack.c.l.b16 %v4399
      %v4520 = vunpack.c.l.b16 %v4400
      %v4521 = vunpack.c.l.b16 %v4401
      %v4522 = vunpack.c.l.b16 %v4402
      %v4523 = vpack.c.b16 %v4500, %v4499
      %v4524 = vpack.c.b16 %v4502, %v4501
      %v4525 = vpack.c.b16 %v4504, %v4503
      %v4526 = vpack.c.b16 %v4506, %v4505
      %v4527 = vpack.c.b16 %v4508, %v4507
      %v4528 = vpack.c.b16 %v4510, %v4509
      %v4529 = vpack.c.b16 %v4512, %v4511
      %v4530 = vpack.c.b16 %v4514, %v4513
      %v4531 = vpack.c.b16 %v4516, %v4515
      %v4532 = vpack.c.b16 %v4518, %v4517
      %v4533 = vpack.c.b16 %v4520, %v4519
      %v4534 = vpack.c.b16 %v4522, %v4521
      %v4548 = vsel %vm4059, %v4452, 0
      %v4551 = vsel %vm4059, %v4454, 0
      %v4554 = vsel %vm4059, %v4456, 0
      %v4557 = vsel %vm4059, %v4458, 0
      %v4560 = vsel %vm4059, %v4460, 0
      %v4563 = vsel %vm4059, %v4462, 0
      %v4566 = vsel %vm4059, %v4464, 0
      %v4569 = vsel %vm4059, %v4466, 0
      %4571 = vmatprep.subr.bf16.mxu0 0
      %4572 = vmatpush1.bf16.msra.mxu0 %v4530
      %4573 = vmatprep.subr.bf16.mxu0 0
      %4574 = vmatpush1.bf16.msra.mxu0 %v4529
      %4575 = vmatprep.subr.bf16.mxu0 0
      %4576 = vmatpush1.bf16.msra.mxu0 %v4528
      %4577 = vmatprep.subr.bf16.mxu0 0
      %4578 = vmatpush1.bf16.msra.mxu0 %v4527
      %4579 = vmatprep.subr.bf16.mxu0 0
      %4580 = vmatpush1.bf16.msra.mxu0 %v4526
      %4581 = vmatprep.subr.bf16.mxu0 0
      %4582 = vmatpush1.bf16.msra.mxu0 %v4525
      %4583 = vmatprep.subr.bf16.mxu0 0
      %4584 = vmatpush1.bf16.msra.mxu0 %v4524
      %4585 = vmatprep.subr.bf16.mxu0 0
      %4586 = vmatpush1.bf16.msra.mxu0 %v4523
      %4587 = vmatprep.subr.bf16.mxu0 0
      %4588 = vmatpush2.bf16.msra.mxu0 0
      %4589 = vmatprep.subr.bf16.mxu0 0
      %4590 = vmatpush2.bf16.msra.mxu0 0
      %4591 = vmatprep.subr.bf16.mxu0 0
      %4592 = vmatpush2.bf16.msra.mxu0 0
      %4593 = vmatprep.subr.bf16.mxu0 0
      %4594 = vmatpush2.bf16.msra.mxu0 0
      %4595 = vmatprep.subr.bf16.mxu0 0
      %4596 = vmatpush2.bf16.msra.mxu0 %v4534
      %4597 = vmatprep.subr.bf16.mxu0 0
      %4598 = vmatpush2.bf16.msra.mxu0 %v4533
      %4599 = vmatprep.subr.bf16.mxu0 0
      %4600 = vmatpush2.bf16.msra.mxu0 %v4532
      %4601 = vmatprep.subr.bf16.mxu0 0
      %4602 = vmatpush2.bf16.msra.mxu0 %v4531
      %4603 = vmatprep.mubr.bf16.mxu0 %v4548
      %4604 = vmatmul.mubr.bf16.gmra.mxu0 %v4451
      %v4605 = vpop.f32.mrf.mxu0
      %v4606 = vadd.f32 0.0, %v4605
      %v4607 = vpop.f32.mrf.mxu0
      %v4608 = vpop.f32.mrf.mxu0
      %v4609 = vadd.f32 0.0, %v4608
      %v4610 = vpop.f32.mrf.mxu0
      %4611 = vmatprep.mubr.bf16.mxu0 %v4551
      %4612 = vmatmul.mubr.bf16.gmra.mxu0 %v4453
      %v4613 = vpop.f32.mrf.mxu0
      %v4614 = vadd.f32 0.0, %v4613
      %v4615 = vpop.f32.mrf.mxu0
      %v4616 = vpop.f32.mrf.mxu0
      %v4617 = vadd.f32 0.0, %v4616
      %v4618 = vpop.f32.mrf.mxu0
      %4619 = vmatprep.mubr.bf16.mxu0 %v4554
      %4620 = vmatmul.mubr.bf16.gmra.mxu0 %v4455
      %v4621 = vpop.f32.mrf.mxu0
      %v4622 = vadd.f32 0.0, %v4621
      %v4623 = vpop.f32.mrf.mxu0
      %v4624 = vpop.f32.mrf.mxu0
      %v4625 = vadd.f32 0.0, %v4624
      %v4626 = vpop.f32.mrf.mxu0
      %4627 = vmatprep.mubr.bf16.mxu0 %v4557
      %4628 = vmatmul.mubr.bf16.gmra.mxu0 %v4457
      %v4629 = vpop.f32.mrf.mxu0
      %v4630 = vadd.f32 0.0, %v4629
      %v4631 = vpop.f32.mrf.mxu0
      %v4632 = vpop.f32.mrf.mxu0
      %v4633 = vadd.f32 0.0, %v4632
      %v4634 = vpop.f32.mrf.mxu0
      %4635 = vmatprep.mubr.bf16.mxu0 %v4560
      %4636 = vmatmul.mubr.bf16.gmra.mxu0 %v4459
      %v4637 = vpop.f32.mrf.mxu0
      %v4638 = vadd.f32 0.0, %v4637
      %v4639 = vpop.f32.mrf.mxu0
      %v4640 = vpop.f32.mrf.mxu0
      %v4641 = vadd.f32 0.0, %v4640
      %v4642 = vpop.f32.mrf.mxu0
      %4643 = vmatprep.mubr.bf16.mxu0 %v4563
      %4644 = vmatmul.mubr.bf16.gmra.mxu0 %v4461
      %v4645 = vpop.f32.mrf.mxu0
      %v4646 = vadd.f32 0.0, %v4645
      %v4647 = vpop.f32.mrf.mxu0
      %v4648 = vpop.f32.mrf.mxu0
      %v4649 = vadd.f32 0.0, %v4648
      %v4650 = vpop.f32.mrf.mxu0
      %4651 = vmatprep.mubr.bf16.mxu0 %v4566
      %4652 = vmatmul.mubr.bf16.gmra.mxu0 %v4463
      %v4653 = vpop.f32.mrf.mxu0
      %v4654 = vadd.f32 0.0, %v4653
      %v4655 = vpop.f32.mrf.mxu0
      %v4656 = vpop.f32.mrf.mxu0
      %v4657 = vadd.f32 0.0, %v4656
      %v4658 = vpop.f32.mrf.mxu0
      %4659 = vmatprep.mubr.bf16.mxu0 %v4569
      %4660 = vmatmul.mubr.bf16.gmra.mxu0 %v4465
      %v4661 = vpop.f32.mrf.mxu0
      %v4662 = vadd.f32 0.0, %v4661
      %v4663 = vpop.f32.mrf.mxu0
      %v4664 = vpop.f32.mrf.mxu0
      %v4665 = vadd.f32 0.0, %v4664
      %v4666 = vpop.f32.mrf.mxu0
      %4667 = vdwg.mxu0
      %v4670 = vunpack.c.l.b16 %v4336
      %v4671 = vunpack.c.h.b16 %v4336
      %v4672 = vunpack.c.l.b16 %v4337
      %v4673 = vunpack.c.h.b16 %v4337
      %v4674 = vpack.c.b16 %v4672, %v4670
      %v4675 = vpack.c.b16 %v4673, %v4671
      %v4701 = vunpack.c.l.b16 %v4352
      %v4702 = vunpack.c.l.b16 %v4353
      %v4703 = vunpack.c.l.b16 %v4354
      %v4704 = vunpack.c.l.b16 %v4355
      %v4705 = vunpack.c.l.b16 %v4356
      %v4706 = vunpack.c.l.b16 %v4357
      %v4707 = vunpack.c.l.b16 %v4358
      %v4708 = vunpack.c.l.b16 %v4359
      %v4709 = vunpack.c.l.b16 %v4360
      %v4710 = vunpack.c.l.b16 %v4361
      %v4711 = vunpack.c.l.b16 %v4362
      %v4712 = vunpack.c.l.b16 %v4363
      %v4713 = vunpack.c.l.b16 %v4364
      %v4714 = vunpack.c.l.b16 %v4365
      %v4715 = vunpack.c.l.b16 %v4366
      %v4716 = vunpack.c.l.b16 %v4367
      %v4717 = vunpack.c.l.b16 %v4368
      %v4718 = vunpack.c.l.b16 %v4369
      %v4719 = vunpack.c.l.b16 %v4370
      %v4720 = vunpack.c.l.b16 %v4371
      %v4721 = vunpack.c.l.b16 %v4372
      %v4722 = vunpack.c.l.b16 %v4373
      %v4723 = vunpack.c.l.b16 %v4374
      %v4724 = vunpack.c.l.b16 %v4375
      %v4725 = vpack.c.b16 %v4702, %v4701
      %v4726 = vpack.c.b16 %v4704, %v4703
      %v4727 = vpack.c.b16 %v4706, %v4705
      %v4728 = vpack.c.b16 %v4708, %v4707
      %v4729 = vpack.c.b16 %v4710, %v4709
      %v4730 = vpack.c.b16 %v4712, %v4711
      %v4731 = vpack.c.b16 %v4714, %v4713
      %v4732 = vpack.c.b16 %v4716, %v4715
      %v4733 = vpack.c.b16 %v4718, %v4717
      %v4734 = vpack.c.b16 %v4720, %v4719
      %v4735 = vpack.c.b16 %v4722, %v4721
      %v4736 = vpack.c.b16 %v4724, %v4723
      %v4750 = vsel %vm4059, %v4675, 0
      %4752 = vmatprep.subr.bf16.mxu0 0
      %4753 = vmatpush1.bf16.msra.mxu0 %v4732
      %4754 = vmatprep.subr.bf16.mxu0 0
      %4755 = vmatpush1.bf16.msra.mxu0 %v4731
      %4756 = vmatprep.subr.bf16.mxu0 0
      %4757 = vmatpush1.bf16.msra.mxu0 %v4730
      %4758 = vmatprep.subr.bf16.mxu0 0
      %4759 = vmatpush1.bf16.msra.mxu0 %v4729
      %4760 = vmatprep.subr.bf16.mxu0 0
      %4761 = vmatpush1.bf16.msra.mxu0 %v4728
      %4762 = vmatprep.subr.bf16.mxu0 0
      %4763 = vmatpush1.bf16.msra.mxu0 %v4727
      %4764 = vmatprep.subr.bf16.mxu0 0
      %4765 = vmatpush1.bf16.msra.mxu0 %v4726
      %4766 = vmatprep.subr.bf16.mxu0 0
      %4767 = vmatpush1.bf16.msra.mxu0 %v4725
      %4768 = vmatprep.subr.bf16.mxu0 0
      %4769 = vmatpush2.bf16.msra.mxu0 0
      %4770 = vmatprep.subr.bf16.mxu0 0
      %4771 = vmatpush2.bf16.msra.mxu0 0
      %4772 = vmatprep.subr.bf16.mxu0 0
      %4773 = vmatpush2.bf16.msra.mxu0 0
      %4774 = vmatprep.subr.bf16.mxu0 0
      %4775 = vmatpush2.bf16.msra.mxu0 0
      %4776 = vmatprep.subr.bf16.mxu0 0
      %4777 = vmatpush2.bf16.msra.mxu0 %v4736
      %4778 = vmatprep.subr.bf16.mxu0 0
      %4779 = vmatpush2.bf16.msra.mxu0 %v4735
      %4780 = vmatprep.subr.bf16.mxu0 0
      %4781 = vmatpush2.bf16.msra.mxu0 %v4734
      %4782 = vmatprep.subr.bf16.mxu0 0
      %4783 = vmatpush2.bf16.msra.mxu0 %v4733
      %4784 = vmatprep.mubr.bf16.mxu0 %v4750
      %4785 = vmatmul.mubr.bf16.gmra.mxu0 %v4674
      %v4786 = vpop.f32.mrf.mxu0
      %v4787 = vadd.f32 %v4606, %v4786
      %v4788 = vpop.f32.mrf.mxu0
      %v4789 = vpop.f32.mrf.mxu0
      %v4790 = vadd.f32 %v4609, %v4789
      %v4791 = vpop.f32.mrf.mxu0
      %4792 = vmatprep.mubr.bf16.mxu0 %v4548
      %4793 = vmatmul.mubr.bf16.gmra.mxu0 %v4451
      %v4794 = vpop.f32.mrf.mxu0
      %v4795 = vadd.f32 %v4614, %v4794
      %v4796 = vpop.f32.mrf.mxu0
      %v4797 = vpop.f32.mrf.mxu0
      %v4798 = vadd.f32 %v4617, %v4797
      %v4799 = vpop.f32.mrf.mxu0
      %4800 = vmatprep.mubr.bf16.mxu0 %v4551
      %4801 = vmatmul.mubr.bf16.gmra.mxu0 %v4453
      %v4802 = vpop.f32.mrf.mxu0
      %v4803 = vadd.f32 %v4622, %v4802
      %v4804 = vpop.f32.mrf.mxu0
      %v4805 = vpop.f32.mrf.mxu0
      %v4806 = vadd.f32 %v4625, %v4805
      %v4807 = vpop.f32.mrf.mxu0
      %4808 = vmatprep.mubr.bf16.mxu0 %v4554
      %4809 = vmatmul.mubr.bf16.gmra.mxu0 %v4455
      %v4810 = vpop.f32.mrf.mxu0
      %v4811 = vadd.f32 %v4630, %v4810
      %v4812 = vpop.f32.mrf.mxu0
      %v4813 = vpop.f32.mrf.mxu0
      %v4814 = vadd.f32 %v4633, %v4813
      %v4815 = vpop.f32.mrf.mxu0
      %4816 = vmatprep.mubr.bf16.mxu0 %v4557
      %4817 = vmatmul.mubr.bf16.gmra.mxu0 %v4457
      %v4818 = vpop.f32.mrf.mxu0
      %v4819 = vadd.f32 %v4638, %v4818
      %v4820 = vpop.f32.mrf.mxu0
      %v4821 = vpop.f32.mrf.mxu0
      %v4822 = vadd.f32 %v4641, %v4821
      %v4823 = vpop.f32.mrf.mxu0
      %4824 = vmatprep.mubr.bf16.mxu0 %v4560
      %4825 = vmatmul.mubr.bf16.gmra.mxu0 %v4459
      %v4826 = vpop.f32.mrf.mxu0
      %v4827 = vadd.f32 %v4646, %v4826
      %v4828 = vpop.f32.mrf.mxu0
      %v4829 = vpop.f32.mrf.mxu0
      %v4830 = vadd.f32 %v4649, %v4829
      %v4831 = vpop.f32.mrf.mxu0
      %4832 = vmatprep.mubr.bf16.mxu0 %v4563
      %4833 = vmatmul.mubr.bf16.gmra.mxu0 %v4461
      %v4834 = vpop.f32.mrf.mxu0
      %v4835 = vadd.f32 %v4654, %v4834
      %v4836 = vpop.f32.mrf.mxu0
      %v4837 = vpop.f32.mrf.mxu0
      %v4838 = vadd.f32 %v4657, %v4837
      %v4839 = vpop.f32.mrf.mxu0
      %4840 = vmatprep.mubr.bf16.mxu0 %v4566
      %4841 = vmatmul.mubr.bf16.gmra.mxu0 %v4463
      %v4842 = vpop.f32.mrf.mxu0
      %v4843 = vadd.f32 %v4662, %v4842
      %v4844 = vpop.f32.mrf.mxu0
      %v4845 = vpop.f32.mrf.mxu0
      %v4846 = vadd.f32 %v4665, %v4845
      %v4847 = vpop.f32.mrf.mxu0
      %4848 = vdwg.mxu0
      %v4849 = vld [vmem:[#allocation3 + $0x20] sm:$0xff]
      %v4850 = vld [vmem:[#allocation3 + $0x28] sm:$0xff]
      %v4851 = vld [vmem:[#allocation3 + $0x30] sm:$0xff]
      %v4852 = vld [vmem:[#allocation3 + $0x38] sm:$0xff]
      %v4853 = vld [vmem:[#allocation3 + $0x40] sm:$0xff]
      %v4854 = vld [vmem:[#allocation3 + $0x48] sm:$0xff]
      %v4855 = vld [vmem:[#allocation3 + $0x50] sm:$0xff]
      %v4856 = vld [vmem:[#allocation3 + $0x58] sm:$0xff]
      %v4857 = vld [vmem:[#allocation3 + $0x60] sm:$0xff]
      %v4858 = vld [vmem:[#allocation3 + $0x68] sm:$0xff]
      %v4859 = vld [vmem:[#allocation3 + $0x70] sm:$0xff]
      %v4860 = vld [vmem:[#allocation3 + $0x78] sm:$0xff]
      %v4861 = vld [vmem:[#allocation3 + $0x80] sm:$0xff]
      %v4862 = vld [vmem:[#allocation3 + $0x88] sm:$0xff]
      %v4863 = vld [vmem:[#allocation3 + $0x90] sm:$0xff]
      %v4864 = vld [vmem:[#allocation3 + $0x98] sm:$0xff]
      %s4865 = scalar_lea.vmem %s4, 192
      %v4866 = vld [vmem:[%s4865] sm:$0xf]
      %v4867 = vld [vmem:[%s4865 + $0x4] sm:$0xf]
      %v4868 = vld [vmem:[%s4865 + $0x8] sm:$0xf]
      %v4869 = vld [vmem:[%s4865 + $0xc] sm:$0xf]
      %v4870 = vld [vmem:[%s4865 + $0x10] sm:$0xf]
      %v4871 = vld [vmem:[%s4865 + $0x14] sm:$0xf]
      %v4872 = vld [vmem:[%s4865 + $0x18] sm:$0xf]
      %v4873 = vld [vmem:[%s4865 + $0x1c] sm:$0xf]
      %v4874 = vld [vmem:[%s4865 + $0x20] sm:$0xf]
      %v4875 = vld [vmem:[%s4865 + $0x24] sm:$0xf]
      %v4876 = vld [vmem:[%s4865 + $0x28] sm:$0xf]
      %v4877 = vld [vmem:[%s4865 + $0x2c] sm:$0xf]
      %v4878 = vld [vmem:[%s4865 + $0x30] sm:$0xf]
      %v4879 = vld [vmem:[%s4865 + $0x34] sm:$0xf]
      %v4880 = vld [vmem:[%s4865 + $0x38] sm:$0xf]
      %v4881 = vld [vmem:[%s4865 + $0x3c] sm:$0xf]
      %v4882 = vld [vmem:[%s4865 + $0x40] sm:$0xf]
      %v4883 = vld [vmem:[%s4865 + $0x44] sm:$0xf]
      %v4884 = vld [vmem:[%s4865 + $0x48] sm:$0xf]
      %v4885 = vld [vmem:[%s4865 + $0x4c] sm:$0xf]
      %v4886 = vld [vmem:[%s4865 + $0x50] sm:$0xf]
      %v4887 = vld [vmem:[%s4865 + $0x54] sm:$0xf]
      %v4888 = vld [vmem:[%s4865 + $0x58] sm:$0xf]
      %v4889 = vld [vmem:[%s4865 + $0x5c] sm:$0xf]
      %v4906 = vunpack.c.l.b16 %v4849
      %v4907 = vunpack.c.h.b16 %v4849
      %v4908 = vunpack.c.l.b16 %v4850
      %v4909 = vunpack.c.h.b16 %v4850
      %v4910 = vunpack.c.l.b16 %v4851
      %v4911 = vunpack.c.h.b16 %v4851
      %v4912 = vunpack.c.l.b16 %v4852
      %v4913 = vunpack.c.h.b16 %v4852
      %v4914 = vunpack.c.l.b16 %v4853
      %v4915 = vunpack.c.h.b16 %v4853
      %v4916 = vunpack.c.l.b16 %v4854
      %v4917 = vunpack.c.h.b16 %v4854
      %v4918 = vunpack.c.l.b16 %v4855
      %v4919 = vunpack.c.h.b16 %v4855
      %v4920 = vunpack.c.l.b16 %v4856
      %v4921 = vunpack.c.h.b16 %v4856
      %v4922 = vunpack.c.l.b16 %v4857
      %v4923 = vunpack.c.h.b16 %v4857
      %v4924 = vunpack.c.l.b16 %v4858
      %v4925 = vunpack.c.h.b16 %v4858
      %v4926 = vunpack.c.l.b16 %v4859
      %v4927 = vunpack.c.h.b16 %v4859
      %v4928 = vunpack.c.l.b16 %v4860
      %v4929 = vunpack.c.h.b16 %v4860
      %v4930 = vunpack.c.l.b16 %v4861
      %v4931 = vunpack.c.h.b16 %v4861
      %v4932 = vunpack.c.l.b16 %v4862
      %v4933 = vunpack.c.h.b16 %v4862
      %v4934 = vunpack.c.l.b16 %v4863
      %v4935 = vunpack.c.h.b16 %v4863
      %v4936 = vunpack.c.l.b16 %v4864
      %v4937 = vunpack.c.h.b16 %v4864
      %v4938 = vpack.c.b16 %v4908, %v4906
      %v4939 = vpack.c.b16 %v4909, %v4907
      %v4940 = vpack.c.b16 %v4912, %v4910
      %v4941 = vpack.c.b16 %v4913, %v4911
      %v4942 = vpack.c.b16 %v4916, %v4914
      %v4943 = vpack.c.b16 %v4917, %v4915
      %v4944 = vpack.c.b16 %v4920, %v4918
      %v4945 = vpack.c.b16 %v4921, %v4919
      %v4946 = vpack.c.b16 %v4924, %v4922
      %v4947 = vpack.c.b16 %v4925, %v4923
      %v4948 = vpack.c.b16 %v4928, %v4926
      %v4949 = vpack.c.b16 %v4929, %v4927
      %v4950 = vpack.c.b16 %v4932, %v4930
      %v4951 = vpack.c.b16 %v4933, %v4931
      %v4952 = vpack.c.b16 %v4936, %v4934
      %v4953 = vpack.c.b16 %v4937, %v4935
      %v4986 = vunpack.c.l.b16 %v4866
      %v4987 = vunpack.c.l.b16 %v4867
      %v4988 = vunpack.c.l.b16 %v4868
      %v4989 = vunpack.c.l.b16 %v4869
      %v4990 = vunpack.c.l.b16 %v4870
      %v4991 = vunpack.c.l.b16 %v4871
      %v4992 = vunpack.c.l.b16 %v4872
      %v4993 = vunpack.c.l.b16 %v4873
      %v4994 = vunpack.c.l.b16 %v4874
      %v4995 = vunpack.c.l.b16 %v4875
      %v4996 = vunpack.c.l.b16 %v4876
      %v4997 = vunpack.c.l.b16 %v4877
      %v4998 = vunpack.c.l.b16 %v4878
      %v4999 = vunpack.c.l.b16 %v4879
      %v5000 = vunpack.c.l.b16 %v4880
      %v5001 = vunpack.c.l.b16 %v4881
      %v5002 = vunpack.c.l.b16 %v4882
      %v5003 = vunpack.c.l.b16 %v4883
      %v5004 = vunpack.c.l.b16 %v4884
      %v5005 = vunpack.c.l.b16 %v4885
      %v5006 = vunpack.c.l.b16 %v4886
      %v5007 = vunpack.c.l.b16 %v4887
      %v5008 = vunpack.c.l.b16 %v4888
      %v5009 = vunpack.c.l.b16 %v4889
      %v5010 = vpack.c.b16 %v4987, %v4986
      %v5011 = vpack.c.b16 %v4989, %v4988
      %v5012 = vpack.c.b16 %v4991, %v4990
      %v5013 = vpack.c.b16 %v4993, %v4992
      %v5014 = vpack.c.b16 %v4995, %v4994
      %v5015 = vpack.c.b16 %v4997, %v4996
      %v5016 = vpack.c.b16 %v4999, %v4998
      %v5017 = vpack.c.b16 %v5001, %v5000
      %v5018 = vpack.c.b16 %v5003, %v5002
      %v5019 = vpack.c.b16 %v5005, %v5004
      %v5020 = vpack.c.b16 %v5007, %v5006
      %v5021 = vpack.c.b16 %v5009, %v5008
      %v5035 = vsel %vm4059, %v4939, 0
      %v5038 = vsel %vm4059, %v4941, 0
      %v5041 = vsel %vm4059, %v4943, 0
      %v5044 = vsel %vm4059, %v4945, 0
      %v5047 = vsel %vm4059, %v4947, 0
      %v5050 = vsel %vm4059, %v4949, 0
      %v5053 = vsel %vm4059, %v4951, 0
      %v5056 = vsel %vm4059, %v4953, 0
      %5058 = vmatprep.subr.bf16.mxu0 0
      %5059 = vmatpush1.bf16.msra.mxu0 %v5017
      %5060 = vmatprep.subr.bf16.mxu0 0
      %5061 = vmatpush1.bf16.msra.mxu0 %v5016
      %5062 = vmatprep.subr.bf16.mxu0 0
      %5063 = vmatpush1.bf16.msra.mxu0 %v5015
      %5064 = vmatprep.subr.bf16.mxu0 0
      %5065 = vmatpush1.bf16.msra.mxu0 %v5014
      %5066 = vmatprep.subr.bf16.mxu0 0
      %5067 = vmatpush1.bf16.msra.mxu0 %v5013
      %5068 = vmatprep.subr.bf16.mxu0 0
      %5069 = vmatpush1.bf16.msra.mxu0 %v5012
      %5070 = vmatprep.subr.bf16.mxu0 0
      %5071 = vmatpush1.bf16.msra.mxu0 %v5011
      %5072 = vmatprep.subr.bf16.mxu0 0
      %5073 = vmatpush1.bf16.msra.mxu0 %v5010
      %5074 = vmatprep.subr.bf16.mxu0 0
      %5075 = vmatpush2.bf16.msra.mxu0 0
      %5076 = vmatprep.subr.bf16.mxu0 0
      %5077 = vmatpush2.bf16.msra.mxu0 0
      %5078 = vmatprep.subr.bf16.mxu0 0
      %5079 = vmatpush2.bf16.msra.mxu0 0
      %5080 = vmatprep.subr.bf16.mxu0 0
      %5081 = vmatpush2.bf16.msra.mxu0 0
      %5082 = vmatprep.subr.bf16.mxu0 0
      %5083 = vmatpush2.bf16.msra.mxu0 %v5021
      %5084 = vmatprep.subr.bf16.mxu0 0
      %5085 = vmatpush2.bf16.msra.mxu0 %v5020
      %5086 = vmatprep.subr.bf16.mxu0 0
      %5087 = vmatpush2.bf16.msra.mxu0 %v5019
      %5088 = vmatprep.subr.bf16.mxu0 0
      %5089 = vmatpush2.bf16.msra.mxu0 %v5018
      %5090 = vmatprep.mubr.bf16.mxu0 %v5035
      %5091 = vmatmul.mubr.bf16.gmra.mxu0 %v4938
      %v5092 = vpop.f32.mrf.mxu0
      %v5093 = vadd.f32 0.0, %v5092
      %v5094 = vpop.f32.mrf.mxu0
      %v5095 = vpop.f32.mrf.mxu0
      %v5096 = vadd.f32 0.0, %v5095
      %v5097 = vpop.f32.mrf.mxu0
      %5098 = vmatprep.mubr.bf16.mxu0 %v5038
      %5099 = vmatmul.mubr.bf16.gmra.mxu0 %v4940
      %v5100 = vpop.f32.mrf.mxu0
      %v5101 = vadd.f32 0.0, %v5100
      %v5102 = vpop.f32.mrf.mxu0
      %v5103 = vpop.f32.mrf.mxu0
      %v5104 = vadd.f32 0.0, %v5103
      %v5105 = vpop.f32.mrf.mxu0
      %5106 = vmatprep.mubr.bf16.mxu0 %v5041
      %5107 = vmatmul.mubr.bf16.gmra.mxu0 %v4942
      %v5108 = vpop.f32.mrf.mxu0
      %v5109 = vadd.f32 0.0, %v5108
      %v5110 = vpop.f32.mrf.mxu0
      %v5111 = vpop.f32.mrf.mxu0
      %v5112 = vadd.f32 0.0, %v5111
      %v5113 = vpop.f32.mrf.mxu0
      %5114 = vmatprep.mubr.bf16.mxu0 %v5044
      %5115 = vmatmul.mubr.bf16.gmra.mxu0 %v4944
      %v5116 = vpop.f32.mrf.mxu0
      %v5117 = vadd.f32 0.0, %v5116
      %v5118 = vpop.f32.mrf.mxu0
      %v5119 = vpop.f32.mrf.mxu0
      %v5120 = vadd.f32 0.0, %v5119
      %v5121 = vpop.f32.mrf.mxu0
      %5122 = vmatprep.mubr.bf16.mxu0 %v5047
      %5123 = vmatmul.mubr.bf16.gmra.mxu0 %v4946
      %v5124 = vpop.f32.mrf.mxu0
      %v5125 = vadd.f32 0.0, %v5124
      %v5126 = vpop.f32.mrf.mxu0
      %v5127 = vpop.f32.mrf.mxu0
      %v5128 = vadd.f32 0.0, %v5127
      %v5129 = vpop.f32.mrf.mxu0
      %5130 = vmatprep.mubr.bf16.mxu0 %v5050
      %5131 = vmatmul.mubr.bf16.gmra.mxu0 %v4948
      %v5132 = vpop.f32.mrf.mxu0
      %v5133 = vadd.f32 0.0, %v5132
      %v5134 = vpop.f32.mrf.mxu0
      %v5135 = vpop.f32.mrf.mxu0
      %v5136 = vadd.f32 0.0, %v5135
      %v5137 = vpop.f32.mrf.mxu0
      %5138 = vmatprep.mubr.bf16.mxu0 %v5053
      %5139 = vmatmul.mubr.bf16.gmra.mxu0 %v4950
      %v5140 = vpop.f32.mrf.mxu0
      %v5141 = vadd.f32 0.0, %v5140
      %v5142 = vpop.f32.mrf.mxu0
      %v5143 = vpop.f32.mrf.mxu0
      %v5144 = vadd.f32 0.0, %v5143
      %v5145 = vpop.f32.mrf.mxu0
      %5146 = vmatprep.mubr.bf16.mxu0 %v5056
      %5147 = vmatmul.mubr.bf16.gmra.mxu0 %v4952
      %v5148 = vpop.f32.mrf.mxu0
      %v5149 = vadd.f32 0.0, %v5148
      %v5150 = vpop.f32.mrf.mxu0
      %v5151 = vpop.f32.mrf.mxu0
      %v5152 = vadd.f32 0.0, %v5151
      %v5153 = vpop.f32.mrf.mxu0
      %5154 = vdwg.mxu0
      %v5155 = vadd.f32 %v4787, %v5093
      %v5156 = vadd.f32 %v4790, %v5096
      %v5157 = vadd.f32 %v4795, %v5101
      %v5158 = vadd.f32 %v4798, %v5104
      %v5159 = vadd.f32 %v4803, %v5109
      %v5160 = vadd.f32 %v4806, %v5112
      %v5161 = vadd.f32 %v4811, %v5117
      %v5162 = vadd.f32 %v4814, %v5120
      %v5163 = vadd.f32 %v4819, %v5125
      %v5164 = vadd.f32 %v4822, %v5128
      %v5165 = vadd.f32 %v4827, %v5133
      %v5166 = vadd.f32 %v4830, %v5136
      %v5167 = vadd.f32 %v4835, %v5141
      %v5168 = vadd.f32 %v4838, %v5144
      %v5169 = vadd.f32 %v4843, %v5149
      %v5170 = vadd.f32 %v4846, %v5152
      %v5171 = vld [vmem:[%s5] sm:$0x1]
      %v5173 = vlaneseq
      %v5174 = vshrl.u32 %v5173, 7
      %v5175 = vsub.s32 0, %v5174
      %v5176 = vrot.slane %v5171, %v5175
      %v5178 = vadd.f32 %v5155, %v5176
      %v5179 = vadd.f32 %v5156, %v5176
      %v5180 = vadd.f32 %v5157, %v5176
      %v5181 = vadd.f32 %v5158, %v5176
      %v5182 = vadd.f32 %v5159, %v5176
      %v5183 = vadd.f32 %v5160, %v5176
      %v5184 = vadd.f32 %v5161, %v5176
      %v5185 = vadd.f32 %v5162, %v5176
      %v5186 = vadd.f32 %v5163, %v5176
      %v5187 = vadd.f32 %v5164, %v5176
      %v5188 = vadd.f32 %v5165, %v5176
      %v5189 = vadd.f32 %v5166, %v5176
      %v5190 = vadd.f32 %v5167, %v5176
      %v5191 = vadd.f32 %v5168, %v5176
      %v5192 = vadd.f32 %v5169, %v5176
      %v5193 = vadd.f32 %v5170, %v5176
      %v5194 = vxor.u32 %v5178, 2147483648
      %v5195 = vxor.u32 %v5179, 2147483648
      %v5196 = vxor.u32 %v5180, 2147483648
      %v5197 = vxor.u32 %v5181, 2147483648
      %v5198 = vxor.u32 %v5182, 2147483648
      %v5199 = vxor.u32 %v5183, 2147483648
      %v5200 = vxor.u32 %v5184, 2147483648
      %v5201 = vxor.u32 %v5185, 2147483648
      %v5202 = vxor.u32 %v5186, 2147483648
      %v5203 = vxor.u32 %v5187, 2147483648
      %v5204 = vxor.u32 %v5188, 2147483648
      %v5205 = vxor.u32 %v5189, 2147483648
      %v5206 = vxor.u32 %v5190, 2147483648
      %v5207 = vxor.u32 %v5191, 2147483648
      %v5208 = vxor.u32 %v5192, 2147483648
      %v5209 = vxor.u32 %v5193, 2147483648
      %v5210 = vmul.f32 %v5194, 1.442695
      %v5211 = vpow.pop %v5210
      %v5212 = vmul.f32 %v5195, 1.442695
      %v5213 = vpow.pop %v5212
      %v5214 = vmul.f32 %v5196, 1.442695
      %v5215 = vpow.pop %v5214
      %v5216 = vmul.f32 %v5197, 1.442695
      %v5217 = vpow.pop %v5216
      %v5218 = vmul.f32 %v5198, 1.442695
      %v5219 = vpow.pop %v5218
      %v5220 = vmul.f32 %v5199, 1.442695
      %v5221 = vpow.pop %v5220
      %v5222 = vmul.f32 %v5200, 1.442695
      %v5223 = vpow.pop %v5222
      %v5224 = vmul.f32 %v5201, 1.442695
      %v5225 = vpow.pop %v5224
      %v5226 = vmul.f32 %v5202, 1.442695
      %v5227 = vpow.pop %v5226
      %v5228 = vmul.f32 %v5203, 1.442695
      %v5229 = vpow.pop %v5228
      %v5230 = vmul.f32 %v5204, 1.442695
      %v5231 = vpow.pop %v5230
      %v5232 = vmul.f32 %v5205, 1.442695
      %v5233 = vpow.pop %v5232
      %v5234 = vmul.f32 %v5206, 1.442695
      %v5235 = vpow.pop %v5234
      %v5236 = vmul.f32 %v5207, 1.442695
      %v5237 = vpow.pop %v5236
      %v5238 = vmul.f32 %v5208, 1.442695
      %v5239 = vpow.pop %v5238
      %v5240 = vmul.f32 %v5209, 1.442695
      %v5241 = vpow.pop %v5240
      %v5242 = vadd.f32 %v5211, 1.0
      %v5243 = vadd.f32 %v5213, 1.0
      %v5244 = vadd.f32 %v5215, 1.0
      %v5245 = vadd.f32 %v5217, 1.0
      %v5246 = vadd.f32 %v5219, 1.0
      %v5247 = vadd.f32 %v5221, 1.0
      %v5248 = vadd.f32 %v5223, 1.0
      %v5249 = vadd.f32 %v5225, 1.0
      %v5250 = vadd.f32 %v5227, 1.0
      %v5251 = vadd.f32 %v5229, 1.0
      %v5252 = vadd.f32 %v5231, 1.0
      %v5253 = vadd.f32 %v5233, 1.0
      %v5254 = vadd.f32 %v5235, 1.0
      %v5255 = vadd.f32 %v5237, 1.0
      %v5256 = vadd.f32 %v5239, 1.0
      %v5257 = vadd.f32 %v5241, 1.0
      %v5258 = vrcp.pop %v5242
      %v5259 = vmul.f32 1.0, %v5258
      %v5260 = vrcp.pop %v5243
      %v5261 = vmul.f32 1.0, %v5260
      %v5262 = vrcp.pop %v5244
      %v5263 = vmul.f32 1.0, %v5262
      %v5264 = vrcp.pop %v5245
      %v5265 = vmul.f32 1.0, %v5264
      %v5266 = vrcp.pop %v5246
      %v5267 = vmul.f32 1.0, %v5266
      %v5268 = vrcp.pop %v5247
      %v5269 = vmul.f32 1.0, %v5268
      %v5270 = vrcp.pop %v5248
      %v5271 = vmul.f32 1.0, %v5270
      %v5272 = vrcp.pop %v5249
      %v5273 = vmul.f32 1.0, %v5272
      %v5274 = vrcp.pop %v5250
      %v5275 = vmul.f32 1.0, %v5274
      %v5276 = vrcp.pop %v5251
      %v5277 = vmul.f32 1.0, %v5276
      %v5278 = vrcp.pop %v5252
      %v5279 = vmul.f32 1.0, %v5278
      %v5280 = vrcp.pop %v5253
      %v5281 = vmul.f32 1.0, %v5280
      %v5282 = vrcp.pop %v5254
      %v5283 = vmul.f32 1.0, %v5282
      %v5284 = vrcp.pop %v5255
      %v5285 = vmul.f32 1.0, %v5284
      %v5286 = vrcp.pop %v5256
      %v5287 = vmul.f32 1.0, %v5286
      %v5288 = vrcp.pop %v5257
      %v5289 = vmul.f32 1.0, %v5288
      %v5290 = vtanh.pop %v5178
      %v5291 = vtanh.pop %v5179
      %v5292 = vtanh.pop %v5180
      %v5293 = vtanh.pop %v5181
      %v5294 = vtanh.pop %v5182
      %v5295 = vtanh.pop %v5183
      %v5296 = vtanh.pop %v5184
      %v5297 = vtanh.pop %v5185
      %v5298 = vtanh.pop %v5186
      %v5299 = vtanh.pop %v5187
      %v5300 = vtanh.pop %v5188
      %v5301 = vtanh.pop %v5189
      %v5302 = vtanh.pop %v5190
      %v5303 = vtanh.pop %v5191
      %v5304 = vtanh.pop %v5192
      %v5305 = vtanh.pop %v5193
      %v5306 = vld [vmem:[%s266] sm:$0xff]
      %v5307 = vld [vmem:[%s266 + $0x8] sm:$0xff]
      %v5308 = vld [vmem:[%s266 + $0x10] sm:$0xff]
      %v5309 = vld [vmem:[%s266 + $0x18] sm:$0xff]
      %v5310 = vld [vmem:[%s266 + $0x20] sm:$0xff]
      %v5311 = vld [vmem:[%s266 + $0x28] sm:$0xff]
      %v5312 = vld [vmem:[%s266 + $0x30] sm:$0xff]
      %v5313 = vld [vmem:[%s266 + $0x38] sm:$0xff]
      %v5314 = vld [vmem:[%s266 + $0x40] sm:$0xff]
      %v5315 = vld [vmem:[%s266 + $0x48] sm:$0xff]
      %v5316 = vld [vmem:[%s266 + $0x50] sm:$0xff]
      %v5317 = vld [vmem:[%s266 + $0x58] sm:$0xff]
      %v5318 = vld [vmem:[%s266 + $0x60] sm:$0xff]
      %v5319 = vld [vmem:[%s266 + $0x68] sm:$0xff]
      %v5320 = vld [vmem:[%s266 + $0x70] sm:$0xff]
      %v5321 = vld [vmem:[%s266 + $0x78] sm:$0xff]
      %5338 = vrot.lane.b32.xlu0 %v5306, 64
      %v5339 = vpop.permute.xlu0 %5338
      %5340 = vrot.lane.b32.xlu0 %v5307, 64
      %v5341 = vpop.permute.xlu0 %5340
      %5342 = vrot.lane.b32.xlu0 %v5308, 64
      %v5343 = vpop.permute.xlu0 %5342
      %5344 = vrot.lane.b32.xlu0 %v5309, 64
      %v5345 = vpop.permute.xlu0 %5344
      %5346 = vrot.lane.b32.xlu0 %v5310, 64
      %v5347 = vpop.permute.xlu0 %5346
      %5348 = vrot.lane.b32.xlu0 %v5311, 64
      %v5349 = vpop.permute.xlu0 %5348
      %5350 = vrot.lane.b32.xlu0 %v5312, 64
      %v5351 = vpop.permute.xlu0 %5350
      %5352 = vrot.lane.b32.xlu0 %v5313, 64
      %v5353 = vpop.permute.xlu0 %5352
      %5354 = vrot.lane.b32.xlu0 %v5314, 64
      %v5355 = vpop.permute.xlu0 %5354
      %5356 = vrot.lane.b32.xlu0 %v5315, 64
      %v5357 = vpop.permute.xlu0 %5356
      %5358 = vrot.lane.b32.xlu0 %v5316, 64
      %v5359 = vpop.permute.xlu0 %5358
      %5360 = vrot.lane.b32.xlu0 %v5317, 64
      %v5361 = vpop.permute.xlu0 %5360
      %5362 = vrot.lane.b32.xlu0 %v5318, 64
      %v5363 = vpop.permute.xlu0 %5362
      %5364 = vrot.lane.b32.xlu0 %v5319, 64
      %v5365 = vpop.permute.xlu0 %5364
      %5366 = vrot.lane.b32.xlu0 %v5320, 64
      %v5367 = vpop.permute.xlu0 %5366
      %5368 = vrot.lane.b32.xlu0 %v5321, 64
      %v5369 = vpop.permute.xlu0 %5368
      %v5386 = vmul.f32 %v5259, %v5339
      %v5387 = vmul.f32 %v5261, %v5341
      %v5388 = vmul.f32 %v5263, %v5343
      %v5389 = vmul.f32 %v5265, %v5345
      %v5390 = vmul.f32 %v5267, %v5347
      %v5391 = vmul.f32 %v5269, %v5349
      %v5392 = vmul.f32 %v5271, %v5351
      %v5393 = vmul.f32 %v5273, %v5353
      %v5394 = vmul.f32 %v5275, %v5355
      %v5395 = vmul.f32 %v5277, %v5357
      %v5396 = vmul.f32 %v5279, %v5359
      %v5397 = vmul.f32 %v5281, %v5361
      %v5398 = vmul.f32 %v5283, %v5363
      %v5399 = vmul.f32 %v5285, %v5365
      %v5400 = vmul.f32 %v5287, %v5367
      %v5401 = vmul.f32 %v5289, %v5369
      %5418 = vrot.lane.b32.xlu0 %v5290, 32
      %v5419 = vpop.permute.xlu0 %5418
      %5420 = vrot.lane.b32.xlu0 %v5291, 32
      %v5421 = vpop.permute.xlu0 %5420
      %5422 = vrot.lane.b32.xlu0 %v5292, 32
      %v5423 = vpop.permute.xlu0 %5422
      %5424 = vrot.lane.b32.xlu0 %v5293, 32
      %v5425 = vpop.permute.xlu0 %5424
      %5426 = vrot.lane.b32.xlu0 %v5294, 32
      %v5427 = vpop.permute.xlu0 %5426
      %5428 = vrot.lane.b32.xlu0 %v5295, 32
      %v5429 = vpop.permute.xlu0 %5428
      %5430 = vrot.lane.b32.xlu0 %v5296, 32
      %v5431 = vpop.permute.xlu0 %5430
      %5432 = vrot.lane.b32.xlu0 %v5297, 32
      %v5433 = vpop.permute.xlu0 %5432
      %5434 = vrot.lane.b32.xlu0 %v5298, 32
      %v5435 = vpop.permute.xlu0 %5434
      %5436 = vrot.lane.b32.xlu0 %v5299, 32
      %v5437 = vpop.permute.xlu0 %5436
      %5438 = vrot.lane.b32.xlu0 %v5300, 32
      %v5439 = vpop.permute.xlu0 %5438
      %5440 = vrot.lane.b32.xlu0 %v5301, 32
      %v5441 = vpop.permute.xlu0 %5440
      %5442 = vrot.lane.b32.xlu0 %v5302, 32
      %v5443 = vpop.permute.xlu0 %5442
      %5444 = vrot.lane.b32.xlu0 %v5303, 32
      %v5445 = vpop.permute.xlu0 %5444
      %5446 = vrot.lane.b32.xlu0 %v5304, 32
      %v5447 = vpop.permute.xlu0 %5446
      %5448 = vrot.lane.b32.xlu0 %v5305, 32
      %v5449 = vpop.permute.xlu0 %5448
      %v5466 = vmul.f32 %v5259, %v5419
      %v5467 = vmul.f32 %v5261, %v5421
      %v5468 = vmul.f32 %v5263, %v5423
      %v5469 = vmul.f32 %v5265, %v5425
      %v5470 = vmul.f32 %v5267, %v5427
      %v5471 = vmul.f32 %v5269, %v5429
      %v5472 = vmul.f32 %v5271, %v5431
      %v5473 = vmul.f32 %v5273, %v5433
      %v5474 = vmul.f32 %v5275, %v5435
      %v5475 = vmul.f32 %v5277, %v5437
      %v5476 = vmul.f32 %v5279, %v5439
      %v5477 = vmul.f32 %v5281, %v5441
      %v5478 = vmul.f32 %v5283, %v5443
      %v5479 = vmul.f32 %v5285, %v5445
      %v5480 = vmul.f32 %v5287, %v5447
      %v5481 = vmul.f32 %v5289, %v5449
      %5498 = vrot.lane.b32.xlu0 %v5466, 32
      %v5499 = vpop.permute.xlu0 %5498
      %5500 = vrot.lane.b32.xlu0 %v5467, 32
      %v5501 = vpop.permute.xlu0 %5500
      %5502 = vrot.lane.b32.xlu0 %v5468, 32
      %v5503 = vpop.permute.xlu0 %5502
      %5504 = vrot.lane.b32.xlu0 %v5469, 32
      %v5505 = vpop.permute.xlu0 %5504
      %5506 = vrot.lane.b32.xlu0 %v5470, 32
      %v5507 = vpop.permute.xlu0 %5506
      %5508 = vrot.lane.b32.xlu0 %v5471, 32
      %v5509 = vpop.permute.xlu0 %5508
      %5510 = vrot.lane.b32.xlu0 %v5472, 32
      %v5511 = vpop.permute.xlu0 %5510
      %5512 = vrot.lane.b32.xlu0 %v5473, 32
      %v5513 = vpop.permute.xlu0 %5512
      %5514 = vrot.lane.b32.xlu0 %v5474, 32
      %v5515 = vpop.permute.xlu0 %5514
      %5516 = vrot.lane.b32.xlu0 %v5475, 32
      %v5517 = vpop.permute.xlu0 %5516
      %5518 = vrot.lane.b32.xlu0 %v5476, 32
      %v5519 = vpop.permute.xlu0 %5518
      %5520 = vrot.lane.b32.xlu0 %v5477, 32
      %v5521 = vpop.permute.xlu0 %5520
      %5522 = vrot.lane.b32.xlu0 %v5478, 32
      %v5523 = vpop.permute.xlu0 %5522
      %5524 = vrot.lane.b32.xlu0 %v5479, 32
      %v5525 = vpop.permute.xlu0 %5524
      %5526 = vrot.lane.b32.xlu0 %v5480, 32
      %v5527 = vpop.permute.xlu0 %5526
      %5528 = vrot.lane.b32.xlu0 %v5481, 32
      %v5529 = vpop.permute.xlu0 %5528
      %v5546 = vadd.f32 %v5386, %v5499
      %v5547 = vadd.f32 %v5387, %v5501
      %v5548 = vadd.f32 %v5388, %v5503
      %v5549 = vadd.f32 %v5389, %v5505
      %v5550 = vadd.f32 %v5390, %v5507
      %v5551 = vadd.f32 %v5391, %v5509
      %v5552 = vadd.f32 %v5392, %v5511
      %v5553 = vadd.f32 %v5393, %v5513
      %v5554 = vadd.f32 %v5394, %v5515
      %v5555 = vadd.f32 %v5395, %v5517
      %v5556 = vadd.f32 %v5396, %v5519
      %v5557 = vadd.f32 %v5397, %v5521
      %v5558 = vadd.f32 %v5398, %v5523
      %v5559 = vadd.f32 %v5399, %v5525
      %v5560 = vadd.f32 %v5400, %v5527
      %v5561 = vadd.f32 %v5401, %v5529
      %v5562 = vtanh.pop %v5546
      %v5563 = vtanh.pop %v5547
      %v5564 = vtanh.pop %v5548
      %v5565 = vtanh.pop %v5549
      %v5566 = vtanh.pop %v5550
      %v5567 = vtanh.pop %v5551
      %v5568 = vtanh.pop %v5552
      %v5569 = vtanh.pop %v5553
      %v5570 = vtanh.pop %v5554
      %v5571 = vtanh.pop %v5555
      %v5572 = vtanh.pop %v5556
      %v5573 = vtanh.pop %v5557
      %v5574 = vtanh.pop %v5558
      %v5575 = vtanh.pop %v5559
      %v5576 = vtanh.pop %v5560
      %v5577 = vtanh.pop %v5561
      %5594 = vrot.lane.b32.xlu0 %v5562, 32
      %v5595 = vpop.permute.xlu0 %5594
      %5596 = vrot.lane.b32.xlu0 %v5563, 32
      %v5597 = vpop.permute.xlu0 %5596
      %5598 = vrot.lane.b32.xlu0 %v5564, 32
      %v5599 = vpop.permute.xlu0 %5598
      %5600 = vrot.lane.b32.xlu0 %v5565, 32
      %v5601 = vpop.permute.xlu0 %5600
      %5602 = vrot.lane.b32.xlu0 %v5566, 32
      %v5603 = vpop.permute.xlu0 %5602
      %5604 = vrot.lane.b32.xlu0 %v5567, 32
      %v5605 = vpop.permute.xlu0 %5604
      %5606 = vrot.lane.b32.xlu0 %v5568, 32
      %v5607 = vpop.permute.xlu0 %5606
      %5608 = vrot.lane.b32.xlu0 %v5569, 32
      %v5609 = vpop.permute.xlu0 %5608
      %5610 = vrot.lane.b32.xlu0 %v5570, 32
      %v5611 = vpop.permute.xlu0 %5610
      %5612 = vrot.lane.b32.xlu0 %v5571, 32
      %v5613 = vpop.permute.xlu0 %5612
      %5614 = vrot.lane.b32.xlu0 %v5572, 32
      %v5615 = vpop.permute.xlu0 %5614
      %5616 = vrot.lane.b32.xlu0 %v5573, 32
      %v5617 = vpop.permute.xlu0 %5616
      %5618 = vrot.lane.b32.xlu0 %v5574, 32
      %v5619 = vpop.permute.xlu0 %5618
      %5620 = vrot.lane.b32.xlu0 %v5575, 32
      %v5621 = vpop.permute.xlu0 %5620
      %5622 = vrot.lane.b32.xlu0 %v5576, 32
      %v5623 = vpop.permute.xlu0 %5622
      %5624 = vrot.lane.b32.xlu0 %v5577, 32
      %v5625 = vpop.permute.xlu0 %5624
      %v5642 = vmul.f32 %v5259, %v5595
      %v5643 = vmul.f32 %v5261, %v5597
      %v5644 = vmul.f32 %v5263, %v5599
      %v5645 = vmul.f32 %v5265, %v5601
      %v5646 = vmul.f32 %v5267, %v5603
      %v5647 = vmul.f32 %v5269, %v5605
      %v5648 = vmul.f32 %v5271, %v5607
      %v5649 = vmul.f32 %v5273, %v5609
      %v5650 = vmul.f32 %v5275, %v5611
      %v5651 = vmul.f32 %v5277, %v5613
      %v5652 = vmul.f32 %v5279, %v5615
      %v5653 = vmul.f32 %v5281, %v5617
      %v5654 = vmul.f32 %v5283, %v5619
      %v5655 = vmul.f32 %v5285, %v5621
      %v5656 = vmul.f32 %v5287, %v5623
      %v5657 = vmul.f32 %v5289, %v5625
      %v5658 = vld [vmem:[#allocation3 + $0x80] sm:$0xff]
      %v5659 = vld [vmem:[#allocation3 + $0x88] sm:$0xff]
      %v5660 = vld [vmem:[#allocation3 + $0x90] sm:$0xff]
      %v5661 = vld [vmem:[#allocation3 + $0x98] sm:$0xff]
      %v5662 = vld [vmem:[#allocation3 + $0xa0] sm:$0xff]
      %v5663 = vld [vmem:[#allocation3 + $0xa8] sm:$0xff]
      %v5664 = vld [vmem:[#allocation3 + $0xb0] sm:$0xff]
      %v5665 = vld [vmem:[#allocation3 + $0xb8] sm:$0xff]
      %v5666 = vld [vmem:[#allocation3 + $0xc0] sm:$0xff]
      %v5667 = vld [vmem:[#allocation3 + $0xc8] sm:$0xff]
      %v5668 = vld [vmem:[#allocation3 + $0xd0] sm:$0xff]
      %v5669 = vld [vmem:[#allocation3 + $0xd8] sm:$0xff]
      %v5670 = vld [vmem:[#allocation3 + $0xe0] sm:$0xff]
      %v5671 = vld [vmem:[#allocation3 + $0xe8] sm:$0xff]
      %v5672 = vld [vmem:[#allocation3 + $0xf0] sm:$0xff]
      %v5673 = vld [vmem:[#allocation3 + $0xf8] sm:$0xff]
      %v5674 = vld [vmem:[#allocation3 + $0x100] sm:$0xff]
      %v5675 = vld [vmem:[#allocation3 + $0x108] sm:$0xff]
      %v5692 = vunpack.c.l.b16 %v5660
      %v5693 = vunpack.c.h.b16 %v5660
      %v5694 = vunpack.c.l.b16 %v5661
      %v5695 = vunpack.c.h.b16 %v5661
      %v5696 = vunpack.c.l.b16 %v5662
      %v5697 = vunpack.c.h.b16 %v5662
      %v5698 = vunpack.c.l.b16 %v5663
      %v5699 = vunpack.c.h.b16 %v5663
      %v5700 = vunpack.c.l.b16 %v5664
      %v5701 = vunpack.c.h.b16 %v5664
      %v5702 = vunpack.c.l.b16 %v5665
      %v5703 = vunpack.c.h.b16 %v5665
      %v5704 = vunpack.c.l.b16 %v5666
      %v5705 = vunpack.c.h.b16 %v5666
      %v5706 = vunpack.c.l.b16 %v5667
      %v5707 = vunpack.c.h.b16 %v5667
      %v5708 = vunpack.c.l.b16 %v5668
      %v5709 = vunpack.c.h.b16 %v5668
      %v5710 = vunpack.c.l.b16 %v5669
      %v5711 = vunpack.c.h.b16 %v5669
      %v5712 = vunpack.c.l.b16 %v5670
      %v5713 = vunpack.c.h.b16 %v5670
      %v5714 = vunpack.c.l.b16 %v5671
      %v5715 = vunpack.c.h.b16 %v5671
      %v5716 = vunpack.c.l.b16 %v5672
      %v5717 = vunpack.c.h.b16 %v5672
      %v5718 = vunpack.c.l.b16 %v5673
      %v5719 = vunpack.c.h.b16 %v5673
      %v5720 = vunpack.c.l.b16 %v5674
      %v5721 = vunpack.c.h.b16 %v5674
      %v5722 = vunpack.c.l.b16 %v5675
      %v5723 = vunpack.c.h.b16 %v5675
      %v5724 = vpack.c.b16 %v5694, %v5692
      %v5725 = vpack.c.b16 %v5695, %v5693
      %v5726 = vpack.c.b16 %v5698, %v5696
      %v5727 = vpack.c.b16 %v5699, %v5697
      %v5728 = vpack.c.b16 %v5702, %v5700
      %v5729 = vpack.c.b16 %v5703, %v5701
      %v5730 = vpack.c.b16 %v5706, %v5704
      %v5731 = vpack.c.b16 %v5707, %v5705
      %v5732 = vpack.c.b16 %v5710, %v5708
      %v5733 = vpack.c.b16 %v5711, %v5709
      %v5734 = vpack.c.b16 %v5714, %v5712
      %v5735 = vpack.c.b16 %v5715, %v5713
      %v5736 = vpack.c.b16 %v5718, %v5716
      %v5737 = vpack.c.b16 %v5719, %v5717
      %v5738 = vpack.c.b16 %v5722, %v5720
      %v5739 = vpack.c.b16 %v5723, %v5721
      %v5749 = vsel %vm4059, %v5725, 0
      %v5752 = vsel %vm4059, %v5727, 0
      %v5755 = vsel %vm4059, %v5729, 0
      %v5758 = vsel %vm4059, %v5731, 0
      %v5761 = vsel %vm4059, %v5733, 0
      %v5764 = vsel %vm4059, %v5735, 0
      %v5767 = vsel %vm4059, %v5737, 0
      %v5770 = vsel %vm4059, %v5739, 0
      %5772 = vmatprep.subr.bf16.mxu0 0
      %5773 = vmatpush1.bf16.msra.mxu0 %v4530
      %5774 = vmatprep.subr.bf16.mxu0 0
      %5775 = vmatpush1.bf16.msra.mxu0 %v4529
      %5776 = vmatprep.subr.bf16.mxu0 0
      %5777 = vmatpush1.bf16.msra.mxu0 %v4528
      %5778 = vmatprep.subr.bf16.mxu0 0
      %5779 = vmatpush1.bf16.msra.mxu0 %v4527
      %5780 = vmatprep.subr.bf16.mxu0 0
      %5781 = vmatpush1.bf16.msra.mxu0 %v4526
      %5782 = vmatprep.subr.bf16.mxu0 0
      %5783 = vmatpush1.bf16.msra.mxu0 %v4525
      %5784 = vmatprep.subr.bf16.mxu0 0
      %5785 = vmatpush1.bf16.msra.mxu0 %v4524
      %5786 = vmatprep.subr.bf16.mxu0 0
      %5787 = vmatpush1.bf16.msra.mxu0 %v4523
      %5788 = vmatprep.subr.bf16.mxu0 0
      %5789 = vmatpush2.bf16.msra.mxu0 0
      %5790 = vmatprep.subr.bf16.mxu0 0
      %5791 = vmatpush2.bf16.msra.mxu0 0
      %5792 = vmatprep.subr.bf16.mxu0 0
      %5793 = vmatpush2.bf16.msra.mxu0 0
      %5794 = vmatprep.subr.bf16.mxu0 0
      %5795 = vmatpush2.bf16.msra.mxu0 0
      %5796 = vmatprep.subr.bf16.mxu0 0
      %5797 = vmatpush2.bf16.msra.mxu0 %v4534
      %5798 = vmatprep.subr.bf16.mxu0 0
      %5799 = vmatpush2.bf16.msra.mxu0 %v4533
      %5800 = vmatprep.subr.bf16.mxu0 0
      %5801 = vmatpush2.bf16.msra.mxu0 %v4532
      %5802 = vmatprep.subr.bf16.mxu0 0
      %5803 = vmatpush2.bf16.msra.mxu0 %v4531
      %5804 = vmatprep.mubr.bf16.mxu0 %v5749
      %5805 = vmatmul.mubr.bf16.gmra.mxu0 %v5724
      %v5806 = vpop.f32.mrf.mxu0
      %v5807 = vadd.f32 0.0, %v5806
      %v5808 = vpop.f32.mrf.mxu0
      %v5809 = vpop.f32.mrf.mxu0
      %v5810 = vadd.f32 0.0, %v5809
      %v5811 = vpop.f32.mrf.mxu0
      %5812 = vmatprep.mubr.bf16.mxu0 %v5752
      %5813 = vmatmul.mubr.bf16.gmra.mxu0 %v5726
      %v5814 = vpop.f32.mrf.mxu0
      %v5815 = vadd.f32 0.0, %v5814
      %v5816 = vpop.f32.mrf.mxu0
      %v5817 = vpop.f32.mrf.mxu0
      %v5818 = vadd.f32 0.0, %v5817
      %v5819 = vpop.f32.mrf.mxu0
      %5820 = vmatprep.mubr.bf16.mxu0 %v5755
      %5821 = vmatmul.mubr.bf16.gmra.mxu0 %v5728
      %v5822 = vpop.f32.mrf.mxu0
      %v5823 = vadd.f32 0.0, %v5822
      %v5824 = vpop.f32.mrf.mxu0
      %v5825 = vpop.f32.mrf.mxu0
      %v5826 = vadd.f32 0.0, %v5825
      %v5827 = vpop.f32.mrf.mxu0
      %5828 = vmatprep.mubr.bf16.mxu0 %v5758
      %5829 = vmatmul.mubr.bf16.gmra.mxu0 %v5730
      %v5830 = vpop.f32.mrf.mxu0
      %v5831 = vadd.f32 0.0, %v5830
      %v5832 = vpop.f32.mrf.mxu0
      %v5833 = vpop.f32.mrf.mxu0
      %v5834 = vadd.f32 0.0, %v5833
      %v5835 = vpop.f32.mrf.mxu0
      %5836 = vmatprep.mubr.bf16.mxu0 %v5761
      %5837 = vmatmul.mubr.bf16.gmra.mxu0 %v5732
      %v5838 = vpop.f32.mrf.mxu0
      %v5839 = vadd.f32 0.0, %v5838
      %v5840 = vpop.f32.mrf.mxu0
      %v5841 = vpop.f32.mrf.mxu0
      %v5842 = vadd.f32 0.0, %v5841
      %v5843 = vpop.f32.mrf.mxu0
      %5844 = vmatprep.mubr.bf16.mxu0 %v5764
      %5845 = vmatmul.mubr.bf16.gmra.mxu0 %v5734
      %v5846 = vpop.f32.mrf.mxu0
      %v5847 = vadd.f32 0.0, %v5846
      %v5848 = vpop.f32.mrf.mxu0
      %v5849 = vpop.f32.mrf.mxu0
      %v5850 = vadd.f32 0.0, %v5849
      %v5851 = vpop.f32.mrf.mxu0
      %5852 = vmatprep.mubr.bf16.mxu0 %v5767
      %5853 = vmatmul.mubr.bf16.gmra.mxu0 %v5736
      %v5854 = vpop.f32.mrf.mxu0
      %v5855 = vadd.f32 0.0, %v5854
      %v5856 = vpop.f32.mrf.mxu0
      %v5857 = vpop.f32.mrf.mxu0
      %v5858 = vadd.f32 0.0, %v5857
      %v5859 = vpop.f32.mrf.mxu0
      %5860 = vmatprep.mubr.bf16.mxu0 %v5770
      %5861 = vmatmul.mubr.bf16.gmra.mxu0 %v5738
      %v5862 = vpop.f32.mrf.mxu0
      %v5863 = vadd.f32 0.0, %v5862
      %v5864 = vpop.f32.mrf.mxu0
      %v5865 = vpop.f32.mrf.mxu0
      %v5866 = vadd.f32 0.0, %v5865
      %v5867 = vpop.f32.mrf.mxu0
      %5868 = vdwg.mxu0
      %v5871 = vunpack.c.l.b16 %v5658
      %v5872 = vunpack.c.h.b16 %v5658
      %v5873 = vunpack.c.l.b16 %v5659
      %v5874 = vunpack.c.h.b16 %v5659
      %v5875 = vpack.c.b16 %v5873, %v5871
      %v5876 = vpack.c.b16 %v5874, %v5872
      %v5879 = vsel %vm4059, %v5876, 0
      %5881 = vmatprep.subr.bf16.mxu0 0
      %5882 = vmatpush1.bf16.msra.mxu0 %v4732
      %5883 = vmatprep.subr.bf16.mxu0 0
      %5884 = vmatpush1.bf16.msra.mxu0 %v4731
      %5885 = vmatprep.subr.bf16.mxu0 0
      %5886 = vmatpush1.bf16.msra.mxu0 %v4730
      %5887 = vmatprep.subr.bf16.mxu0 0
      %5888 = vmatpush1.bf16.msra.mxu0 %v4729
      %5889 = vmatprep.subr.bf16.mxu0 0
      %5890 = vmatpush1.bf16.msra.mxu0 %v4728
      %5891 = vmatprep.subr.bf16.mxu0 0
      %5892 = vmatpush1.bf16.msra.mxu0 %v4727
      %5893 = vmatprep.subr.bf16.mxu0 0
      %5894 = vmatpush1.bf16.msra.mxu0 %v4726
      %5895 = vmatprep.subr.bf16.mxu0 0
      %5896 = vmatpush1.bf16.msra.mxu0 %v4725
      %5897 = vmatprep.subr.bf16.mxu0 0
      %5898 = vmatpush2.bf16.msra.mxu0 0
      %5899 = vmatprep.subr.bf16.mxu0 0
      %5900 = vmatpush2.bf16.msra.mxu0 0
      %5901 = vmatprep.subr.bf16.mxu0 0
      %5902 = vmatpush2.bf16.msra.mxu0 0
      %5903 = vmatprep.subr.bf16.mxu0 0
      %5904 = vmatpush2.bf16.msra.mxu0 0
      %5905 = vmatprep.subr.bf16.mxu0 0
      %5906 = vmatpush2.bf16.msra.mxu0 %v4736
      %5907 = vmatprep.subr.bf16.mxu0 0
      %5908 = vmatpush2.bf16.msra.mxu0 %v4735
      %5909 = vmatprep.subr.bf16.mxu0 0
      %5910 = vmatpush2.bf16.msra.mxu0 %v4734
      %5911 = vmatprep.subr.bf16.mxu0 0
      %5912 = vmatpush2.bf16.msra.mxu0 %v4733
      %5913 = vmatprep.mubr.bf16.mxu0 %v5879
      %5914 = vmatmul.mubr.bf16.gmra.mxu0 %v5875
      %v5915 = vpop.f32.mrf.mxu0
      %v5916 = vadd.f32 %v5807, %v5915
      %v5917 = vpop.f32.mrf.mxu0
      %v5918 = vpop.f32.mrf.mxu0
      %v5919 = vadd.f32 %v5810, %v5918
      %v5920 = vpop.f32.mrf.mxu0
      %5921 = vmatprep.mubr.bf16.mxu0 %v5749
      %5922 = vmatmul.mubr.bf16.gmra.mxu0 %v5724
      %v5923 = vpop.f32.mrf.mxu0
      %v5924 = vadd.f32 %v5815, %v5923
      %v5925 = vpop.f32.mrf.mxu0
      %v5926 = vpop.f32.mrf.mxu0
      %v5927 = vadd.f32 %v5818, %v5926
      %v5928 = vpop.f32.mrf.mxu0
      %5929 = vmatprep.mubr.bf16.mxu0 %v5752
      %5930 = vmatmul.mubr.bf16.gmra.mxu0 %v5726
      %v5931 = vpop.f32.mrf.mxu0
      %v5932 = vadd.f32 %v5823, %v5931
      %v5933 = vpop.f32.mrf.mxu0
      %v5934 = vpop.f32.mrf.mxu0
      %v5935 = vadd.f32 %v5826, %v5934
      %v5936 = vpop.f32.mrf.mxu0
      %5937 = vmatprep.mubr.bf16.mxu0 %v5755
      %5938 = vmatmul.mubr.bf16.gmra.mxu0 %v5728
      %v5939 = vpop.f32.mrf.mxu0
      %v5940 = vadd.f32 %v5831, %v5939
      %v5941 = vpop.f32.mrf.mxu0
      %v5942 = vpop.f32.mrf.mxu0
      %v5943 = vadd.f32 %v5834, %v5942
      %v5944 = vpop.f32.mrf.mxu0
      %5945 = vmatprep.mubr.bf16.mxu0 %v5758
      %5946 = vmatmul.mubr.bf16.gmra.mxu0 %v5730
      %v5947 = vpop.f32.mrf.mxu0
      %v5948 = vadd.f32 %v5839, %v5947
      %v5949 = vpop.f32.mrf.mxu0
      %v5950 = vpop.f32.mrf.mxu0
      %v5951 = vadd.f32 %v5842, %v5950
      %v5952 = vpop.f32.mrf.mxu0
      %5953 = vmatprep.mubr.bf16.mxu0 %v5761
      %5954 = vmatmul.mubr.bf16.gmra.mxu0 %v5732
      %v5955 = vpop.f32.mrf.mxu0
      %v5956 = vadd.f32 %v5847, %v5955
      %v5957 = vpop.f32.mrf.mxu0
      %v5958 = vpop.f32.mrf.mxu0
      %v5959 = vadd.f32 %v5850, %v5958
      %v5960 = vpop.f32.mrf.mxu0
      %5961 = vmatprep.mubr.bf16.mxu0 %v5764
      %5962 = vmatmul.mubr.bf16.gmra.mxu0 %v5734
      %v5963 = vpop.f32.mrf.mxu0
      %v5964 = vadd.f32 %v5855, %v5963
      %v5965 = vpop.f32.mrf.mxu0
      %v5966 = vpop.f32.mrf.mxu0
      %v5967 = vadd.f32 %v5858, %v5966
      %v5968 = vpop.f32.mrf.mxu0
      %5969 = vmatprep.mubr.bf16.mxu0 %v5767
      %5970 = vmatmul.mubr.bf16.gmra.mxu0 %v5736
      %v5971 = vpop.f32.mrf.mxu0
      %v5972 = vadd.f32 %v5863, %v5971
      %v5973 = vpop.f32.mrf.mxu0
      %v5974 = vpop.f32.mrf.mxu0
      %v5975 = vadd.f32 %v5866, %v5974
      %v5976 = vpop.f32.mrf.mxu0
      %5977 = vdwg.mxu0
      %v5978 = vld [vmem:[#allocation3 + $0xa0] sm:$0xff]
      %v5979 = vld [vmem:[#allocation3 + $0xa8] sm:$0xff]
      %v5980 = vld [vmem:[#allocation3 + $0xb0] sm:$0xff]
      %v5981 = vld [vmem:[#allocation3 + $0xb8] sm:$0xff]
      %v5982 = vld [vmem:[#allocation3 + $0xc0] sm:$0xff]
      %v5983 = vld [vmem:[#allocation3 + $0xc8] sm:$0xff]
      %v5984 = vld [vmem:[#allocation3 + $0xd0] sm:$0xff]
      %v5985 = vld [vmem:[#allocation3 + $0xd8] sm:$0xff]
      %v5986 = vld [vmem:[#allocation3 + $0xe0] sm:$0xff]
      %v5987 = vld [vmem:[#allocation3 + $0xe8] sm:$0xff]
      %v5988 = vld [vmem:[#allocation3 + $0xf0] sm:$0xff]
      %v5989 = vld [vmem:[#allocation3 + $0xf8] sm:$0xff]
      %v5990 = vld [vmem:[#allocation3 + $0x100] sm:$0xff]
      %v5991 = vld [vmem:[#allocation3 + $0x108] sm:$0xff]
      %v5992 = vld [vmem:[#allocation3 + $0x110] sm:$0xff]
      %v5993 = vld [vmem:[#allocation3 + $0x118] sm:$0xff]
      %v6010 = vunpack.c.l.b16 %v5978
      %v6011 = vunpack.c.h.b16 %v5978
      %v6012 = vunpack.c.l.b16 %v5979
      %v6013 = vunpack.c.h.b16 %v5979
      %v6014 = vunpack.c.l.b16 %v5980
      %v6015 = vunpack.c.h.b16 %v5980
      %v6016 = vunpack.c.l.b16 %v5981
      %v6017 = vunpack.c.h.b16 %v5981
      %v6018 = vunpack.c.l.b16 %v5982
      %v6019 = vunpack.c.h.b16 %v5982
      %v6020 = vunpack.c.l.b16 %v5983
      %v6021 = vunpack.c.h.b16 %v5983
      %v6022 = vunpack.c.l.b16 %v5984
      %v6023 = vunpack.c.h.b16 %v5984
      %v6024 = vunpack.c.l.b16 %v5985
      %v6025 = vunpack.c.h.b16 %v5985
      %v6026 = vunpack.c.l.b16 %v5986
      %v6027 = vunpack.c.h.b16 %v5986
      %v6028 = vunpack.c.l.b16 %v5987
      %v6029 = vunpack.c.h.b16 %v5987
      %v6030 = vunpack.c.l.b16 %v5988
      %v6031 = vunpack.c.h.b16 %v5988
      %v6032 = vunpack.c.l.b16 %v5989
      %v6033 = vunpack.c.h.b16 %v5989
      %v6034 = vunpack.c.l.b16 %v5990
      %v6035 = vunpack.c.h.b16 %v5990
      %v6036 = vunpack.c.l.b16 %v5991
      %v6037 = vunpack.c.h.b16 %v5991
      %v6038 = vunpack.c.l.b16 %v5992
      %v6039 = vunpack.c.h.b16 %v5992
      %v6040 = vunpack.c.l.b16 %v5993
      %v6041 = vunpack.c.h.b16 %v5993
      %v6042 = vpack.c.b16 %v6012, %v6010
      %v6043 = vpack.c.b16 %v6013, %v6011
      %v6044 = vpack.c.b16 %v6016, %v6014
      %v6045 = vpack.c.b16 %v6017, %v6015
      %v6046 = vpack.c.b16 %v6020, %v6018
      %v6047 = vpack.c.b16 %v6021, %v6019
      %v6048 = vpack.c.b16 %v6024, %v6022
      %v6049 = vpack.c.b16 %v6025, %v6023
      %v6050 = vpack.c.b16 %v6028, %v6026
      %v6051 = vpack.c.b16 %v6029, %v6027
      %v6052 = vpack.c.b16 %v6032, %v6030
      %v6053 = vpack.c.b16 %v6033, %v6031
      %v6054 = vpack.c.b16 %v6036, %v6034
      %v6055 = vpack.c.b16 %v6037, %v6035
      %v6056 = vpack.c.b16 %v6040, %v6038
      %v6057 = vpack.c.b16 %v6041, %v6039
      %v6067 = vsel %vm4059, %v6043, 0
      %v6070 = vsel %vm4059, %v6045, 0
      %v6073 = vsel %vm4059, %v6047, 0
      %v6076 = vsel %vm4059, %v6049, 0
      %v6079 = vsel %vm4059, %v6051, 0
      %v6082 = vsel %vm4059, %v6053, 0
      %v6085 = vsel %vm4059, %v6055, 0
      %v6088 = vsel %vm4059, %v6057, 0
      %6090 = vmatprep.subr.bf16.mxu0 0
      %6091 = vmatpush1.bf16.msra.mxu0 %v5017
      %6092 = vmatprep.subr.bf16.mxu0 0
      %6093 = vmatpush1.bf16.msra.mxu0 %v5016
      %6094 = vmatprep.subr.bf16.mxu0 0
      %6095 = vmatpush1.bf16.msra.mxu0 %v5015
      %6096 = vmatprep.subr.bf16.mxu0 0
      %6097 = vmatpush1.bf16.msra.mxu0 %v5014
      %6098 = vmatprep.subr.bf16.mxu0 0
      %6099 = vmatpush1.bf16.msra.mxu0 %v5013
      %6100 = vmatprep.subr.bf16.mxu0 0
      %6101 = vmatpush1.bf16.msra.mxu0 %v5012
      %6102 = vmatprep.subr.bf16.mxu0 0
      %6103 = vmatpush1.bf16.msra.mxu0 %v5011
      %6104 = vmatprep.subr.bf16.mxu0 0
      %6105 = vmatpush1.bf16.msra.mxu0 %v5010
      %6106 = vmatprep.subr.bf16.mxu0 0
      %6107 = vmatpush2.bf16.msra.mxu0 0
      %6108 = vmatprep.subr.bf16.mxu0 0
      %6109 = vmatpush2.bf16.msra.mxu0 0
      %6110 = vmatprep.subr.bf16.mxu0 0
      %6111 = vmatpush2.bf16.msra.mxu0 0
      %6112 = vmatprep.subr.bf16.mxu0 0
      %6113 = vmatpush2.bf16.msra.mxu0 0
      %6114 = vmatprep.subr.bf16.mxu0 0
      %6115 = vmatpush2.bf16.msra.mxu0 %v5021
      %6116 = vmatprep.subr.bf16.mxu0 0
      %6117 = vmatpush2.bf16.msra.mxu0 %v5020
      %6118 = vmatprep.subr.bf16.mxu0 0
      %6119 = vmatpush2.bf16.msra.mxu0 %v5019
      %6120 = vmatprep.subr.bf16.mxu0 0
      %6121 = vmatpush2.bf16.msra.mxu0 %v5018
      %6122 = vmatprep.mubr.bf16.mxu0 %v6067
      %6123 = vmatmul.mubr.bf16.gmra.mxu0 %v6042
      %v6124 = vpop.f32.mrf.mxu0
      %v6125 = vadd.f32 0.0, %v6124
      %v6126 = vpop.f32.mrf.mxu0
      %v6127 = vpop.f32.mrf.mxu0
      %v6128 = vadd.f32 0.0, %v6127
      %v6129 = vpop.f32.mrf.mxu0
      %6130 = vmatprep.mubr.bf16.mxu0 %v6070
      %6131 = vmatmul.mubr.bf16.gmra.mxu0 %v6044
      %v6132 = vpop.f32.mrf.mxu0
      %v6133 = vadd.f32 0.0, %v6132
      %v6134 = vpop.f32.mrf.mxu0
      %v6135 = vpop.f32.mrf.mxu0
      %v6136 = vadd.f32 0.0, %v6135
      %v6137 = vpop.f32.mrf.mxu0
      %6138 = vmatprep.mubr.bf16.mxu0 %v6073
      %6139 = vmatmul.mubr.bf16.gmra.mxu0 %v6046
      %v6140 = vpop.f32.mrf.mxu0
      %v6141 = vadd.f32 0.0, %v6140
      %v6142 = vpop.f32.mrf.mxu0
      %v6143 = vpop.f32.mrf.mxu0
      %v6144 = vadd.f32 0.0, %v6143
      %v6145 = vpop.f32.mrf.mxu0
      %6146 = vmatprep.mubr.bf16.mxu0 %v6076
      %6147 = vmatmul.mubr.bf16.gmra.mxu0 %v6048
      %v6148 = vpop.f32.mrf.mxu0
      %v6149 = vadd.f32 0.0, %v6148
      %v6150 = vpop.f32.mrf.mxu0
      %v6151 = vpop.f32.mrf.mxu0
      %v6152 = vadd.f32 0.0, %v6151
      %v6153 = vpop.f32.mrf.mxu0
      %6154 = vmatprep.mubr.bf16.mxu0 %v6079
      %6155 = vmatmul.mubr.bf16.gmra.mxu0 %v6050
      %v6156 = vpop.f32.mrf.mxu0
      %v6157 = vadd.f32 0.0, %v6156
      %v6158 = vpop.f32.mrf.mxu0
      %v6159 = vpop.f32.mrf.mxu0
      %v6160 = vadd.f32 0.0, %v6159
      %v6161 = vpop.f32.mrf.mxu0
      %6162 = vmatprep.mubr.bf16.mxu0 %v6082
      %6163 = vmatmul.mubr.bf16.gmra.mxu0 %v6052
      %v6164 = vpop.f32.mrf.mxu0
      %v6165 = vadd.f32 0.0, %v6164
      %v6166 = vpop.f32.mrf.mxu0
      %v6167 = vpop.f32.mrf.mxu0
      %v6168 = vadd.f32 0.0, %v6167
      %v6169 = vpop.f32.mrf.mxu0
      %6170 = vmatprep.mubr.bf16.mxu0 %v6085
      %6171 = vmatmul.mubr.bf16.gmra.mxu0 %v6054
      %v6172 = vpop.f32.mrf.mxu0
      %v6173 = vadd.f32 0.0, %v6172
      %v6174 = vpop.f32.mrf.mxu0
      %v6175 = vpop.f32.mrf.mxu0
      %v6176 = vadd.f32 0.0, %v6175
      %v6177 = vpop.f32.mrf.mxu0
      %6178 = vmatprep.mubr.bf16.mxu0 %v6088
      %6179 = vmatmul.mubr.bf16.gmra.mxu0 %v6056
      %v6180 = vpop.f32.mrf.mxu0
      %v6181 = vadd.f32 0.0, %v6180
      %v6182 = vpop.f32.mrf.mxu0
      %v6183 = vpop.f32.mrf.mxu0
      %v6184 = vadd.f32 0.0, %v6183
      %v6185 = vpop.f32.mrf.mxu0
      %6186 = vdwg.mxu0
      %v6187 = vadd.f32 %v5916, %v6125
      %v6188 = vadd.f32 %v5919, %v6128
      %v6189 = vadd.f32 %v5924, %v6133
      %v6190 = vadd.f32 %v5927, %v6136
      %v6191 = vadd.f32 %v5932, %v6141
      %v6192 = vadd.f32 %v5935, %v6144
      %v6193 = vadd.f32 %v5940, %v6149
      %v6194 = vadd.f32 %v5943, %v6152
      %v6195 = vadd.f32 %v5948, %v6157
      %v6196 = vadd.f32 %v5951, %v6160
      %v6197 = vadd.f32 %v5956, %v6165
      %v6198 = vadd.f32 %v5959, %v6168
      %v6199 = vadd.f32 %v5964, %v6173
      %v6200 = vadd.f32 %v5967, %v6176
      %v6201 = vadd.f32 %v5972, %v6181
      %v6202 = vadd.f32 %v5975, %v6184
      %v6203 = vadd.f32 %v6187, %v5176
      %v6204 = vadd.f32 %v6188, %v5176
      %v6205 = vadd.f32 %v6189, %v5176
      %v6206 = vadd.f32 %v6190, %v5176
      %v6207 = vadd.f32 %v6191, %v5176
      %v6208 = vadd.f32 %v6192, %v5176
      %v6209 = vadd.f32 %v6193, %v5176
      %v6210 = vadd.f32 %v6194, %v5176
      %v6211 = vadd.f32 %v6195, %v5176
      %v6212 = vadd.f32 %v6196, %v5176
      %v6213 = vadd.f32 %v6197, %v5176
      %v6214 = vadd.f32 %v6198, %v5176
      %v6215 = vadd.f32 %v6199, %v5176
      %v6216 = vadd.f32 %v6200, %v5176
      %v6217 = vadd.f32 %v6201, %v5176
      %v6218 = vadd.f32 %v6202, %v5176
      %v6219 = vxor.u32 %v6203, 2147483648
      %v6220 = vxor.u32 %v6204, 2147483648
      %v6221 = vxor.u32 %v6205, 2147483648
      %v6222 = vxor.u32 %v6206, 2147483648
      %v6223 = vxor.u32 %v6207, 2147483648
      %v6224 = vxor.u32 %v6208, 2147483648
      %v6225 = vxor.u32 %v6209, 2147483648
      %v6226 = vxor.u32 %v6210, 2147483648
      %v6227 = vxor.u32 %v6211, 2147483648
      %v6228 = vxor.u32 %v6212, 2147483648
      %v6229 = vxor.u32 %v6213, 2147483648
      %v6230 = vxor.u32 %v6214, 2147483648
      %v6231 = vxor.u32 %v6215, 2147483648
      %v6232 = vxor.u32 %v6216, 2147483648
      %v6233 = vxor.u32 %v6217, 2147483648
      %v6234 = vxor.u32 %v6218, 2147483648
      %v6235 = vmul.f32 %v6219, 1.442695
      %v6236 = vpow.pop %v6235
      %v6237 = vmul.f32 %v6220, 1.442695
      %v6238 = vpow.pop %v6237
      %v6239 = vmul.f32 %v6221, 1.442695
      %v6240 = vpow.pop %v6239
      %v6241 = vmul.f32 %v6222, 1.442695
      %v6242 = vpow.pop %v6241
      %v6243 = vmul.f32 %v6223, 1.442695
      %v6244 = vpow.pop %v6243
      %v6245 = vmul.f32 %v6224, 1.442695
      %v6246 = vpow.pop %v6245
      %v6247 = vmul.f32 %v6225, 1.442695
      %v6248 = vpow.pop %v6247
      %v6249 = vmul.f32 %v6226, 1.442695
      %v6250 = vpow.pop %v6249
      %v6251 = vmul.f32 %v6227, 1.442695
      %v6252 = vpow.pop %v6251
      %v6253 = vmul.f32 %v6228, 1.442695
      %v6254 = vpow.pop %v6253
      %v6255 = vmul.f32 %v6229, 1.442695
      %v6256 = vpow.pop %v6255
      %v6257 = vmul.f32 %v6230, 1.442695
      %v6258 = vpow.pop %v6257
      %v6259 = vmul.f32 %v6231, 1.442695
      %v6260 = vpow.pop %v6259
      %v6261 = vmul.f32 %v6232, 1.442695
      %v6262 = vpow.pop %v6261
      %v6263 = vmul.f32 %v6233, 1.442695
      %v6264 = vpow.pop %v6263
      %v6265 = vmul.f32 %v6234, 1.442695
      %v6266 = vpow.pop %v6265
      %v6267 = vadd.f32 %v6236, 1.0
      %v6268 = vadd.f32 %v6238, 1.0
      %v6269 = vadd.f32 %v6240, 1.0
      %v6270 = vadd.f32 %v6242, 1.0
      %v6271 = vadd.f32 %v6244, 1.0
      %v6272 = vadd.f32 %v6246, 1.0
      %v6273 = vadd.f32 %v6248, 1.0
      %v6274 = vadd.f32 %v6250, 1.0
      %v6275 = vadd.f32 %v6252, 1.0
      %v6276 = vadd.f32 %v6254, 1.0
      %v6277 = vadd.f32 %v6256, 1.0
      %v6278 = vadd.f32 %v6258, 1.0
      %v6279 = vadd.f32 %v6260, 1.0
      %v6280 = vadd.f32 %v6262, 1.0
      %v6281 = vadd.f32 %v6264, 1.0
      %v6282 = vadd.f32 %v6266, 1.0
      %v6283 = vrcp.pop %v6267
      %v6284 = vmul.f32 1.0, %v6283
      %v6285 = vrcp.pop %v6268
      %v6286 = vmul.f32 1.0, %v6285
      %v6287 = vrcp.pop %v6269
      %v6288 = vmul.f32 1.0, %v6287
      %v6289 = vrcp.pop %v6270
      %v6290 = vmul.f32 1.0, %v6289
      %v6291 = vrcp.pop %v6271
      %v6292 = vmul.f32 1.0, %v6291
      %v6293 = vrcp.pop %v6272
      %v6294 = vmul.f32 1.0, %v6293
      %v6295 = vrcp.pop %v6273
      %v6296 = vmul.f32 1.0, %v6295
      %v6297 = vrcp.pop %v6274
      %v6298 = vmul.f32 1.0, %v6297
      %v6299 = vrcp.pop %v6275
      %v6300 = vmul.f32 1.0, %v6299
      %v6301 = vrcp.pop %v6276
      %v6302 = vmul.f32 1.0, %v6301
      %v6303 = vrcp.pop %v6277
      %v6304 = vmul.f32 1.0, %v6303
      %v6305 = vrcp.pop %v6278
      %v6306 = vmul.f32 1.0, %v6305
      %v6307 = vrcp.pop %v6279
      %v6308 = vmul.f32 1.0, %v6307
      %v6309 = vrcp.pop %v6280
      %v6310 = vmul.f32 1.0, %v6309
      %v6311 = vrcp.pop %v6281
      %v6312 = vmul.f32 1.0, %v6311
      %v6313 = vrcp.pop %v6282
      %v6314 = vmul.f32 1.0, %v6313
      %v6315 = vtanh.pop %v6203
      %v6316 = vtanh.pop %v6204
      %v6317 = vtanh.pop %v6205
      %v6318 = vtanh.pop %v6206
      %v6319 = vtanh.pop %v6207
      %v6320 = vtanh.pop %v6208
      %v6321 = vtanh.pop %v6209
      %v6322 = vtanh.pop %v6210
      %v6323 = vtanh.pop %v6211
      %v6324 = vtanh.pop %v6212
      %v6325 = vtanh.pop %v6213
      %v6326 = vtanh.pop %v6214
      %v6327 = vtanh.pop %v6215
      %v6328 = vtanh.pop %v6216
      %v6329 = vtanh.pop %v6217
      %v6330 = vtanh.pop %v6218
      %v6331 = vld [vmem:[%s266 + $0x80] sm:$0xff]
      %v6332 = vld [vmem:[%s266 + $0x88] sm:$0xff]
      %v6333 = vld [vmem:[%s266 + $0x90] sm:$0xff]
      %v6334 = vld [vmem:[%s266 + $0x98] sm:$0xff]
      %v6335 = vld [vmem:[%s266 + $0xa0] sm:$0xff]
      %v6336 = vld [vmem:[%s266 + $0xa8] sm:$0xff]
      %v6337 = vld [vmem:[%s266 + $0xb0] sm:$0xff]
      %v6338 = vld [vmem:[%s266 + $0xb8] sm:$0xff]
      %v6339 = vld [vmem:[%s266 + $0xc0] sm:$0xff]
      %v6340 = vld [vmem:[%s266 + $0xc8] sm:$0xff]
      %v6341 = vld [vmem:[%s266 + $0xd0] sm:$0xff]
      %v6342 = vld [vmem:[%s266 + $0xd8] sm:$0xff]
      %v6343 = vld [vmem:[%s266 + $0xe0] sm:$0xff]
      %v6344 = vld [vmem:[%s266 + $0xe8] sm:$0xff]
      %v6345 = vld [vmem:[%s266 + $0xf0] sm:$0xff]
      %v6346 = vld [vmem:[%s266 + $0xf8] sm:$0xff]
      %6363 = vrot.lane.b32.xlu0 %v6331, 64
      %v6364 = vpop.permute.xlu0 %6363
      %6365 = vrot.lane.b32.xlu0 %v6332, 64
      %v6366 = vpop.permute.xlu0 %6365
      %6367 = vrot.lane.b32.xlu0 %v6333, 64
      %v6368 = vpop.permute.xlu0 %6367
      %6369 = vrot.lane.b32.xlu0 %v6334, 64
      %v6370 = vpop.permute.xlu0 %6369
      %6371 = vrot.lane.b32.xlu0 %v6335, 64
      %v6372 = vpop.permute.xlu0 %6371
      %6373 = vrot.lane.b32.xlu0 %v6336, 64
      %v6374 = vpop.permute.xlu0 %6373
      %6375 = vrot.lane.b32.xlu0 %v6337, 64
      %v6376 = vpop.permute.xlu0 %6375
      %6377 = vrot.lane.b32.xlu0 %v6338, 64
      %v6378 = vpop.permute.xlu0 %6377
      %6379 = vrot.lane.b32.xlu0 %v6339, 64
      %v6380 = vpop.permute.xlu0 %6379
      %6381 = vrot.lane.b32.xlu0 %v6340, 64
      %v6382 = vpop.permute.xlu0 %6381
      %6383 = vrot.lane.b32.xlu0 %v6341, 64
      %v6384 = vpop.permute.xlu0 %6383
      %6385 = vrot.lane.b32.xlu0 %v6342, 64
      %v6386 = vpop.permute.xlu0 %6385
      %6387 = vrot.lane.b32.xlu0 %v6343, 64
      %v6388 = vpop.permute.xlu0 %6387
      %6389 = vrot.lane.b32.xlu0 %v6344, 64
      %v6390 = vpop.permute.xlu0 %6389
      %6391 = vrot.lane.b32.xlu0 %v6345, 64
      %v6392 = vpop.permute.xlu0 %6391
      %6393 = vrot.lane.b32.xlu0 %v6346, 64
      %v6394 = vpop.permute.xlu0 %6393
      %v6411 = vmul.f32 %v6284, %v6364
      %v6412 = vmul.f32 %v6286, %v6366
      %v6413 = vmul.f32 %v6288, %v6368
      %v6414 = vmul.f32 %v6290, %v6370
      %v6415 = vmul.f32 %v6292, %v6372
      %v6416 = vmul.f32 %v6294, %v6374
      %v6417 = vmul.f32 %v6296, %v6376
      %v6418 = vmul.f32 %v6298, %v6378
      %v6419 = vmul.f32 %v6300, %v6380
      %v6420 = vmul.f32 %v6302, %v6382
      %v6421 = vmul.f32 %v6304, %v6384
      %v6422 = vmul.f32 %v6306, %v6386
      %v6423 = vmul.f32 %v6308, %v6388
      %v6424 = vmul.f32 %v6310, %v6390
      %v6425 = vmul.f32 %v6312, %v6392
      %v6426 = vmul.f32 %v6314, %v6394
      %6443 = vrot.lane.b32.xlu0 %v6315, 32
      %v6444 = vpop.permute.xlu0 %6443
      %6445 = vrot.lane.b32.xlu0 %v6316, 32
      %v6446 = vpop.permute.xlu0 %6445
      %6447 = vrot.lane.b32.xlu0 %v6317, 32
      %v6448 = vpop.permute.xlu0 %6447
      %6449 = vrot.lane.b32.xlu0 %v6318, 32
      %v6450 = vpop.permute.xlu0 %6449
      %6451 = vrot.lane.b32.xlu0 %v6319, 32
      %v6452 = vpop.permute.xlu0 %6451
      %6453 = vrot.lane.b32.xlu0 %v6320, 32
      %v6454 = vpop.permute.xlu0 %6453
      %6455 = vrot.lane.b32.xlu0 %v6321, 32
      %v6456 = vpop.permute.xlu0 %6455
      %6457 = vrot.lane.b32.xlu0 %v6322, 32
      %v6458 = vpop.permute.xlu0 %6457
      %6459 = vrot.lane.b32.xlu0 %v6323, 32
      %v6460 = vpop.permute.xlu0 %6459
      %6461 = vrot.lane.b32.xlu0 %v6324, 32
      %v6462 = vpop.permute.xlu0 %6461
      %6463 = vrot.lane.b32.xlu0 %v6325, 32
      %v6464 = vpop.permute.xlu0 %6463
      %6465 = vrot.lane.b32.xlu0 %v6326, 32
      %v6466 = vpop.permute.xlu0 %6465
      %6467 = vrot.lane.b32.xlu0 %v6327, 32
      %v6468 = vpop.permute.xlu0 %6467
      %6469 = vrot.lane.b32.xlu0 %v6328, 32
      %v6470 = vpop.permute.xlu0 %6469
      %6471 = vrot.lane.b32.xlu0 %v6329, 32
      %v6472 = vpop.permute.xlu0 %6471
      %6473 = vrot.lane.b32.xlu0 %v6330, 32
      %v6474 = vpop.permute.xlu0 %6473
      %v6491 = vmul.f32 %v6284, %v6444
      %v6492 = vmul.f32 %v6286, %v6446
      %v6493 = vmul.f32 %v6288, %v6448
      %v6494 = vmul.f32 %v6290, %v6450
      %v6495 = vmul.f32 %v6292, %v6452
      %v6496 = vmul.f32 %v6294, %v6454
      %v6497 = vmul.f32 %v6296, %v6456
      %v6498 = vmul.f32 %v6298, %v6458
      %v6499 = vmul.f32 %v6300, %v6460
      %v6500 = vmul.f32 %v6302, %v6462
      %v6501 = vmul.f32 %v6304, %v6464
      %v6502 = vmul.f32 %v6306, %v6466
      %v6503 = vmul.f32 %v6308, %v6468
      %v6504 = vmul.f32 %v6310, %v6470
      %v6505 = vmul.f32 %v6312, %v6472
      %v6506 = vmul.f32 %v6314, %v6474
      %6523 = vrot.lane.b32.xlu0 %v6491, 32
      %v6524 = vpop.permute.xlu0 %6523
      %6525 = vrot.lane.b32.xlu0 %v6492, 32
      %v6526 = vpop.permute.xlu0 %6525
      %6527 = vrot.lane.b32.xlu0 %v6493, 32
      %v6528 = vpop.permute.xlu0 %6527
      %6529 = vrot.lane.b32.xlu0 %v6494, 32
      %v6530 = vpop.permute.xlu0 %6529
      %6531 = vrot.lane.b32.xlu0 %v6495, 32
      %v6532 = vpop.permute.xlu0 %6531
      %6533 = vrot.lane.b32.xlu0 %v6496, 32
      %v6534 = vpop.permute.xlu0 %6533
      %6535 = vrot.lane.b32.xlu0 %v6497, 32
      %v6536 = vpop.permute.xlu0 %6535
      %6537 = vrot.lane.b32.xlu0 %v6498, 32
      %v6538 = vpop.permute.xlu0 %6537
      %6539 = vrot.lane.b32.xlu0 %v6499, 32
      %v6540 = vpop.permute.xlu0 %6539
      %6541 = vrot.lane.b32.xlu0 %v6500, 32
      %v6542 = vpop.permute.xlu0 %6541
      %6543 = vrot.lane.b32.xlu0 %v6501, 32
      %v6544 = vpop.permute.xlu0 %6543
      %6545 = vrot.lane.b32.xlu0 %v6502, 32
      %v6546 = vpop.permute.xlu0 %6545
      %6547 = vrot.lane.b32.xlu0 %v6503, 32
      %v6548 = vpop.permute.xlu0 %6547
      %6549 = vrot.lane.b32.xlu0 %v6504, 32
      %v6550 = vpop.permute.xlu0 %6549
      %6551 = vrot.lane.b32.xlu0 %v6505, 32
      %v6552 = vpop.permute.xlu0 %6551
      %6553 = vrot.lane.b32.xlu0 %v6506, 32
      %v6554 = vpop.permute.xlu0 %6553
      %v6571 = vadd.f32 %v6411, %v6524
      %v6572 = vadd.f32 %v6412, %v6526
      %v6573 = vadd.f32 %v6413, %v6528
      %v6574 = vadd.f32 %v6414, %v6530
      %v6575 = vadd.f32 %v6415, %v6532
      %v6576 = vadd.f32 %v6416, %v6534
      %v6577 = vadd.f32 %v6417, %v6536
      %v6578 = vadd.f32 %v6418, %v6538
      %v6579 = vadd.f32 %v6419, %v6540
      %v6580 = vadd.f32 %v6420, %v6542
      %v6581 = vadd.f32 %v6421, %v6544
      %v6582 = vadd.f32 %v6422, %v6546
      %v6583 = vadd.f32 %v6423, %v6548
      %v6584 = vadd.f32 %v6424, %v6550
      %v6585 = vadd.f32 %v6425, %v6552
      %v6586 = vadd.f32 %v6426, %v6554
      %v6587 = vtanh.pop %v6571
      %v6588 = vtanh.pop %v6572
      %v6589 = vtanh.pop %v6573
      %v6590 = vtanh.pop %v6574
      %v6591 = vtanh.pop %v6575
      %v6592 = vtanh.pop %v6576
      %v6593 = vtanh.pop %v6577
      %v6594 = vtanh.pop %v6578
      %v6595 = vtanh.pop %v6579
      %v6596 = vtanh.pop %v6580
      %v6597 = vtanh.pop %v6581
      %v6598 = vtanh.pop %v6582
      %v6599 = vtanh.pop %v6583
      %v6600 = vtanh.pop %v6584
      %v6601 = vtanh.pop %v6585
      %v6602 = vtanh.pop %v6586
      %6619 = vrot.lane.b32.xlu0 %v6587, 32
      %v6620 = vpop.permute.xlu0 %6619
      %6621 = vrot.lane.b32.xlu0 %v6588, 32
      %v6622 = vpop.permute.xlu0 %6621
      %6623 = vrot.lane.b32.xlu0 %v6589, 32
      %v6624 = vpop.permute.xlu0 %6623
      %6625 = vrot.lane.b32.xlu0 %v6590, 32
      %v6626 = vpop.permute.xlu0 %6625
      %6627 = vrot.lane.b32.xlu0 %v6591, 32
      %v6628 = vpop.permute.xlu0 %6627
      %6629 = vrot.lane.b32.xlu0 %v6592, 32
      %v6630 = vpop.permute.xlu0 %6629
      %6631 = vrot.lane.b32.xlu0 %v6593, 32
      %v6632 = vpop.permute.xlu0 %6631
      %6633 = vrot.lane.b32.xlu0 %v6594, 32
      %v6634 = vpop.permute.xlu0 %6633
      %6635 = vrot.lane.b32.xlu0 %v6595, 32
      %v6636 = vpop.permute.xlu0 %6635
      %6637 = vrot.lane.b32.xlu0 %v6596, 32
      %v6638 = vpop.permute.xlu0 %6637
      %6639 = vrot.lane.b32.xlu0 %v6597, 32
      %v6640 = vpop.permute.xlu0 %6639
      %6641 = vrot.lane.b32.xlu0 %v6598, 32
      %v6642 = vpop.permute.xlu0 %6641
      %6643 = vrot.lane.b32.xlu0 %v6599, 32
      %v6644 = vpop.permute.xlu0 %6643
      %6645 = vrot.lane.b32.xlu0 %v6600, 32
      %v6646 = vpop.permute.xlu0 %6645
      %6647 = vrot.lane.b32.xlu0 %v6601, 32
      %v6648 = vpop.permute.xlu0 %6647
      %6649 = vrot.lane.b32.xlu0 %v6602, 32
      %v6650 = vpop.permute.xlu0 %6649
      %v6667 = vmul.f32 %v6284, %v6620
      %v6668 = vmul.f32 %v6286, %v6622
      %v6669 = vmul.f32 %v6288, %v6624
      %v6670 = vmul.f32 %v6290, %v6626
      %v6671 = vmul.f32 %v6292, %v6628
      %v6672 = vmul.f32 %v6294, %v6630
      %v6673 = vmul.f32 %v6296, %v6632
      %v6674 = vmul.f32 %v6298, %v6634
      %v6675 = vmul.f32 %v6300, %v6636
      %v6676 = vmul.f32 %v6302, %v6638
      %v6677 = vmul.f32 %v6304, %v6640
      %v6678 = vmul.f32 %v6306, %v6642
      %v6679 = vmul.f32 %v6308, %v6644
      %v6680 = vmul.f32 %v6310, %v6646
      %v6681 = vmul.f32 %v6312, %v6648
      %v6682 = vmul.f32 %v6314, %v6650
      %6715 = vrot.lane.b32.xlu0 %v5546, 64
      %v6716 = vpop.permute.xlu0 %6715
      %6717 = vrot.lane.b32.xlu0 %v5547, 64
      %v6718 = vpop.permute.xlu0 %6717
      %6719 = vrot.lane.b32.xlu0 %v5548, 64
      %v6720 = vpop.permute.xlu0 %6719
      %6721 = vrot.lane.b32.xlu0 %v5549, 64
      %v6722 = vpop.permute.xlu0 %6721
      %6723 = vrot.lane.b32.xlu0 %v5550, 64
      %v6724 = vpop.permute.xlu0 %6723
      %6725 = vrot.lane.b32.xlu0 %v5551, 64
      %v6726 = vpop.permute.xlu0 %6725
      %6727 = vrot.lane.b32.xlu0 %v5552, 64
      %v6728 = vpop.permute.xlu0 %6727
      %6729 = vrot.lane.b32.xlu0 %v5553, 64
      %v6730 = vpop.permute.xlu0 %6729
      %6731 = vrot.lane.b32.xlu0 %v5554, 64
      %v6732 = vpop.permute.xlu0 %6731
      %6733 = vrot.lane.b32.xlu0 %v5555, 64
      %v6734 = vpop.permute.xlu0 %6733
      %6735 = vrot.lane.b32.xlu0 %v5556, 64
      %v6736 = vpop.permute.xlu0 %6735
      %6737 = vrot.lane.b32.xlu0 %v5557, 64
      %v6738 = vpop.permute.xlu0 %6737
      %6739 = vrot.lane.b32.xlu0 %v5558, 64
      %v6740 = vpop.permute.xlu0 %6739
      %6741 = vrot.lane.b32.xlu0 %v5559, 64
      %v6742 = vpop.permute.xlu0 %6741
      %6743 = vrot.lane.b32.xlu0 %v5560, 64
      %v6744 = vpop.permute.xlu0 %6743
      %6745 = vrot.lane.b32.xlu0 %v5561, 64
      %v6746 = vpop.permute.xlu0 %6745
      %6747 = vrot.lane.b32.xlu0 %v6571, 64
      %v6748 = vpop.permute.xlu0 %6747
      %6749 = vrot.lane.b32.xlu0 %v6572, 64
      %v6750 = vpop.permute.xlu0 %6749
      %6751 = vrot.lane.b32.xlu0 %v6573, 64
      %v6752 = vpop.permute.xlu0 %6751
      %6753 = vrot.lane.b32.xlu0 %v6574, 64
      %v6754 = vpop.permute.xlu0 %6753
      %6755 = vrot.lane.b32.xlu0 %v6575, 64
      %v6756 = vpop.permute.xlu0 %6755
      %6757 = vrot.lane.b32.xlu0 %v6576, 64
      %v6758 = vpop.permute.xlu0 %6757
      %6759 = vrot.lane.b32.xlu0 %v6577, 64
      %v6760 = vpop.permute.xlu0 %6759
      %6761 = vrot.lane.b32.xlu0 %v6578, 64
      %v6762 = vpop.permute.xlu0 %6761
      %6763 = vrot.lane.b32.xlu0 %v6579, 64
      %v6764 = vpop.permute.xlu0 %6763
      %6765 = vrot.lane.b32.xlu0 %v6580, 64
      %v6766 = vpop.permute.xlu0 %6765
      %6767 = vrot.lane.b32.xlu0 %v6581, 64
      %v6768 = vpop.permute.xlu0 %6767
      %6769 = vrot.lane.b32.xlu0 %v6582, 64
      %v6770 = vpop.permute.xlu0 %6769
      %6771 = vrot.lane.b32.xlu0 %v6583, 64
      %v6772 = vpop.permute.xlu0 %6771
      %6773 = vrot.lane.b32.xlu0 %v6584, 64
      %v6774 = vpop.permute.xlu0 %6773
      %6775 = vrot.lane.b32.xlu0 %v6585, 64
      %v6776 = vpop.permute.xlu0 %6775
      %6777 = vrot.lane.b32.xlu0 %v6586, 64
      %v6778 = vpop.permute.xlu0 %6777
      %v6811 = vsel %vm3702, %v3479, %v2357
      %v6812 = vsel %vm3702, %v3481, %v2358
      %v6813 = vsel %vm3702, %v3483, %v2359
      %v6814 = vsel %vm3702, %v3485, %v2360
      %v6815 = vsel %vm3702, %v3487, %v2361
      %v6816 = vsel %vm3702, %v3489, %v2362
      %v6817 = vsel %vm3702, %v3491, %v2363
      %v6818 = vsel %vm3702, %v3493, %v2364
      %v6819 = vsel %vm3702, %v3495, %v2365
      %v6820 = vsel %vm3702, %v3497, %v2366
      %v6821 = vsel %vm3702, %v3499, %v2367
      %v6822 = vsel %vm3702, %v3501, %v2368
      %v6823 = vsel %vm3702, %v3503, %v2369
      %v6824 = vsel %vm3702, %v3505, %v2370
      %v6825 = vsel %vm3702, %v3507, %v2371
      %v6826 = vsel %vm3702, %v3509, %v2372
      %v6827 = vsel %vm3702, %v3511, %v3318
      %v6828 = vsel %vm3702, %v3513, %v3319
      %v6829 = vsel %vm3702, %v3515, %v3320
      %v6830 = vsel %vm3702, %v3517, %v3321
      %v6831 = vsel %vm3702, %v3519, %v3322
      %v6832 = vsel %vm3702, %v3521, %v3323
      %v6833 = vsel %vm3702, %v3523, %v3324
      %v6834 = vsel %vm3702, %v3525, %v3325
      %v6835 = vsel %vm3702, %v3527, %v3326
      %v6836 = vsel %vm3702, %v3529, %v3327
      %v6837 = vsel %vm3702, %v3531, %v3328
      %v6838 = vsel %vm3702, %v3533, %v3329
      %v6839 = vsel %vm3702, %v3535, %v3330
      %v6840 = vsel %vm3702, %v3537, %v3331
      %v6841 = vsel %vm3702, %v3539, %v3332
      %v6842 = vsel %vm3702, %v3541, %v3333
      %v6843 = vsel %vm4059, %v6811, %v5642
      %v6844 = vsel %vm4059, %v6812, %v5643
      %v6845 = vsel %vm4059, %v6813, %v5644
      %v6846 = vsel %vm4059, %v6814, %v5645
      %v6847 = vsel %vm4059, %v6815, %v5646
      %v6848 = vsel %vm4059, %v6816, %v5647
      %v6849 = vsel %vm4059, %v6817, %v5648
      %v6850 = vsel %vm4059, %v6818, %v5649
      %v6851 = vsel %vm4059, %v6819, %v5650
      %v6852 = vsel %vm4059, %v6820, %v5651
      %v6853 = vsel %vm4059, %v6821, %v5652
      %v6854 = vsel %vm4059, %v6822, %v5653
      %v6855 = vsel %vm4059, %v6823, %v5654
      %v6856 = vsel %vm4059, %v6824, %v5655
      %v6857 = vsel %vm4059, %v6825, %v5656
      %v6858 = vsel %vm4059, %v6826, %v5657
      %v6859 = vsel %vm4059, %v6827, %v6667
      %v6860 = vsel %vm4059, %v6828, %v6668
      %v6861 = vsel %vm4059, %v6829, %v6669
      %v6862 = vsel %vm4059, %v6830, %v6670
      %v6863 = vsel %vm4059, %v6831, %v6671
      %v6864 = vsel %vm4059, %v6832, %v6672
      %v6865 = vsel %vm4059, %v6833, %v6673
      %v6866 = vsel %vm4059, %v6834, %v6674
      %v6867 = vsel %vm4059, %v6835, %v6675
      %v6868 = vsel %vm4059, %v6836, %v6676
      %v6869 = vsel %vm4059, %v6837, %v6677
      %v6870 = vsel %vm4059, %v6838, %v6678
      %v6871 = vsel %vm4059, %v6839, %v6679
      %v6872 = vsel %vm4059, %v6840, %v6680
      %v6873 = vsel %vm4059, %v6841, %v6681
      %v6874 = vsel %vm4059, %v6842, %v6682
      %v6875 = vsel %vm1004, %v6843, %v6716
      %v6876 = vsel %vm1004, %v6844, %v6718
      %v6877 = vsel %vm1004, %v6845, %v6720
      %v6878 = vsel %vm1004, %v6846, %v6722
      %v6879 = vsel %vm1004, %v6847, %v6724
      %v6880 = vsel %vm1004, %v6848, %v6726
      %v6881 = vsel %vm1004, %v6849, %v6728
      %v6882 = vsel %vm1004, %v6850, %v6730
      %v6883 = vsel %vm1004, %v6851, %v6732
      %v6884 = vsel %vm1004, %v6852, %v6734
      %v6885 = vsel %vm1004, %v6853, %v6736
      %v6886 = vsel %vm1004, %v6854, %v6738
      %v6887 = vsel %vm1004, %v6855, %v6740
      %v6888 = vsel %vm1004, %v6856, %v6742
      %v6889 = vsel %vm1004, %v6857, %v6744
      %v6890 = vsel %vm1004, %v6858, %v6746
      %v6891 = vsel %vm1004, %v6859, %v6748
      %v6892 = vsel %vm1004, %v6860, %v6750
      %v6893 = vsel %vm1004, %v6861, %v6752
      %v6894 = vsel %vm1004, %v6862, %v6754
      %v6895 = vsel %vm1004, %v6863, %v6756
      %v6896 = vsel %vm1004, %v6864, %v6758
      %v6897 = vsel %vm1004, %v6865, %v6760
      %v6898 = vsel %vm1004, %v6866, %v6762
      %v6899 = vsel %vm1004, %v6867, %v6764
      %v6900 = vsel %vm1004, %v6868, %v6766
      %v6901 = vsel %vm1004, %v6869, %v6768
      %v6902 = vsel %vm1004, %v6870, %v6770
      %v6903 = vsel %vm1004, %v6871, %v6772
      %v6904 = vsel %vm1004, %v6872, %v6774
      %v6905 = vsel %vm1004, %v6873, %v6776
      %v6906 = vsel %vm1004, %v6874, %v6778
      %6907 = vst [vmem:[%s271] sm:$0xff] %v6875
      %6908 = vst [vmem:[%s271 + $0x8] sm:$0xff] %v6876
      %6909 = vst [vmem:[%s271 + $0x10] sm:$0xff] %v6877
      %6910 = vst [vmem:[%s271 + $0x18] sm:$0xff] %v6878
      %6911 = vst [vmem:[%s271 + $0x20] sm:$0xff] %v6879
      %6912 = vst [vmem:[%s271 + $0x28] sm:$0xff] %v6880
      %6913 = vst [vmem:[%s271 + $0x30] sm:$0xff] %v6881
      %6914 = vst [vmem:[%s271 + $0x38] sm:$0xff] %v6882
      %6915 = vst [vmem:[%s271 + $0x40] sm:$0xff] %v6883
      %6916 = vst [vmem:[%s271 + $0x48] sm:$0xff] %v6884
      %6917 = vst [vmem:[%s271 + $0x50] sm:$0xff] %v6885
      %6918 = vst [vmem:[%s271 + $0x58] sm:$0xff] %v6886
      %6919 = vst [vmem:[%s271 + $0x60] sm:$0xff] %v6887
      %6920 = vst [vmem:[%s271 + $0x68] sm:$0xff] %v6888
      %6921 = vst [vmem:[%s271 + $0x70] sm:$0xff] %v6889
      %6922 = vst [vmem:[%s271 + $0x78] sm:$0xff] %v6890
      %6923 = vst [vmem:[%s271 + $0x80] sm:$0xff] %v6891
      %6924 = vst [vmem:[%s271 + $0x88] sm:$0xff] %v6892
      %6925 = vst [vmem:[%s271 + $0x90] sm:$0xff] %v6893
      %6926 = vst [vmem:[%s271 + $0x98] sm:$0xff] %v6894
      %6927 = vst [vmem:[%s271 + $0xa0] sm:$0xff] %v6895
      %6928 = vst [vmem:[%s271 + $0xa8] sm:$0xff] %v6896
      %6929 = vst [vmem:[%s271 + $0xb0] sm:$0xff] %v6897
      %6930 = vst [vmem:[%s271 + $0xb8] sm:$0xff] %v6898
      %6931 = vst [vmem:[%s271 + $0xc0] sm:$0xff] %v6899
      %6932 = vst [vmem:[%s271 + $0xc8] sm:$0xff] %v6900
      %6933 = vst [vmem:[%s271 + $0xd0] sm:$0xff] %v6901
      %6934 = vst [vmem:[%s271 + $0xd8] sm:$0xff] %v6902
      %6935 = vst [vmem:[%s271 + $0xe0] sm:$0xff] %v6903
      %6936 = vst [vmem:[%s271 + $0xe8] sm:$0xff] %v6904
      %6937 = vst [vmem:[%s271 + $0xf0] sm:$0xff] %v6905
      %6938 = vst [vmem:[%s271 + $0xf8] sm:$0xff] %v6906
      %p6939 = scmp.lt.s32.totalorder %s17, 1
      %s6940 = scalar_select %p6939, %s17, 1
      %s6941 = smul.addr %s6940, 32
      %s6942 = smul.addr %s6941, 8
      %s6943 = scalar_lea.vmem %s6, %s6942
      // Predicated region
      $region45: #{convlstm_forward.1} parent=43 // pred_check
        %p6944 = pneg %p171
      $region46: #{convlstm_forward.1} parent=43 // pred_check_branch
        %6946 = sbr.rel (%p6944) target = $region48
      $region47: #{convlstm_forward.1} parent=43 // pred_region
        _
      $region48: #{convlstm_forward.1} parent=43 // pred_fallthru
        _
    $region44: #{convlstm_forward.1} parent=5 // pred_fallthru
      _
    %p6947 = scmp.le.s32.totalorder 2, %s12
    // Predicated region
    $region49: #{convlstm_forward.1} parent=5 // pred_check
      %p6948 = pneg %p6947
    $region50: #{convlstm_forward.1} parent=5 // pred_check_branch
      %6950 = sbr.rel (%p6948) target = $region52
    $region51: #{convlstm_forward.1} parent=5 // pred_region
      %s6951 = ssub.s32 %s12, 2
      // Predicated region
      $region53: #{convlstm_forward.1} parent=51 // pred_check
        %p6952 = pneg %p177
      $region54: #{convlstm_forward.1} parent=51 // pred_check_branch
        %6954 = sbr.rel (%p6952) target = $region56
      $region55: #{convlstm_forward.1} parent=51 // pred_region
        %p6955 = scmp.lt.s32.totalorder %s18, 1
        %s6956 = scalar_select %p6955, %s18, 1
        %s6957 = smul.addr %s6956, 32
        %s6958 = smul.addr %s6957, 8
        %s6959 = scalar_lea.vmem %s6, %s6958
      $region56: #{convlstm_forward.1} parent=51 // pred_fallthru
        _
    $region52: #{convlstm_forward.1} parent=5 // pred_fallthru
      _
  $region6: #{convlstm_forward.1} parent=0 // loop_footer
    %s16 = sadd.s32 1, %s12
  $region7: #{convlstm_forward.1} parent=0 // loop_footer_branch
    %11 = sbr.rel target = $region3
  $region8: #{convlstm_forward.1} parent=0 // loop_exit
    _

</llo_original>
